<compile_context>
chip_gen: v6e
topology: v6e:2x2x1
jax: 0.10.0
libtpu: 0.0.40
codegen_flags: <defaults>
</compile_context>

<pallas_src>
import functools

import jax
import jax.numpy as jnp
from jax.experimental import pallas as pl
from jax.experimental.pallas import tpu as pltpu


def _round_up(x, m):
    return (x + m - 1) // m * m


# ------------------------------ Pallas kernel -------------------------------

def _decoder2_kernel(x_ref, w1_ref, b1_ref, w2_ref, b2_ref, mask_ref,
                     uwt_ref, uhb_ref, wsc_ref, bsc_ref,
                     w1f_ref, b1f_ref, w2f_ref, b2f_ref,
                     o_ref, act1e_ref, *,
                     starts, pad, l1a, wp, h, w, apply_scse):
    # x_ref   : (Cin, LX)       bf16  flat zero-padded input (PAD leading zeros)
    # w1_ref  : (Cmid, 9*Cin)   bf16  tap-stacked conv1 weights (BN folded)
    # w2_ref  : (Cout, 9*Cmid)  bf16  tap-stacked conv2 weights (BN folded)
    # mask_ref: (1, L1A)        f32   interior mask of the padded flat grid
    # uwt_ref : (W, 2W)         bf16  bilinear W-upsample matrix (transposed)
    # uhb_ref : (Cout, 2H, H)   bf16  bilinear H-upsample matrix, per channel
    # o_ref   : (Cout, 2H, 2W)  bf16  NCHW output block
    # act1e_ref: (Cmid, LX)     bf16  persistent scratch with zero halo
    cmid = w1_ref.shape[0]
    cout = w2_ref.shape[0]
    h2, w2 = 2 * h, 2 * w
    lx = act1e_ref.shape[1]

    xv = x_ref[...]                                              # (Cin, LX)

    # ---- conv1 (3x3, pad=1) + folded BN + ReLU: one MXU matmul, K = 9*Cin ----
    slab1 = jnp.concatenate([xv[:, s:s + l1a] for s in starts], axis=0)
    acc1 = jnp.dot(w1_ref[...], slab1, preferred_element_type=jnp.float32)
    act1 = jnp.maximum(acc1 + b1_ref[...], 0.0) * mask_ref[...]  # (Cmid, L1A)

    # write act1 into the scratch interior; re-zero only the halo columns
    act1e_ref[:, :pad] = jnp.zeros((cmid, pad), jnp.bfloat16)
    act1e_ref[:, pad + l1a:] = jnp.zeros((cmid, lx - pad - l1a), jnp.bfloat16)
    act1e_ref[:, pad:pad + l1a] = act1.astype(jnp.bfloat16)

    # ---- conv2 (3x3, pad=1) + folded BN + ReLU: one MXU matmul, K = 9*Cmid ----
    slab2 = jnp.concatenate([act1e_ref[:, s:s + l1a] for s in starts], axis=0)
    acc2 = jnp.dot(w2_ref[...], slab2, preferred_element_type=jnp.float32)
    act2 = jnp.maximum(acc2 + b2_ref[...], 0.0)                  # (Cout, L1A)

    # ---- de-flatten the interior: flat padded grid -> (Cout, H, W) ----
    rows = [act2[:, (y + 1) * wp + 1:(y + 1) * wp + 1 + w] for y in range(h)]
    s_ym = jnp.concatenate(rows, axis=0)                         # (H*Cout, W)
    s_cm = jnp.transpose(s_ym.reshape(h, cout, w), (1, 0, 2))    # (Cout, H, W)

    # ---- separable bilinear 2x upsample (align_corners=True) ----
    up1 = jnp.dot(s_cm.reshape(cout * h, w).astype(jnp.bfloat16), uwt_ref[...],
                  preferred_element_type=jnp.float32)            # (Cout*H, W2)
    up1 = up1.reshape(cout, h, w2).astype(jnp.bfloat16)          # (Cout, H, W2)
    up2 = jnp.einsum("cab,cbd->cad", uhb_ref[...], up1,
                     preferred_element_type=jnp.float32)         # (Cout, H2, W2)

    if apply_scse:
        # SE branch: global average pool + 2-layer MLP + sigmoid -> (Cout, 1)
        gap = jnp.mean(jnp.mean(up2, axis=2), axis=1, keepdims=True)
        hid = jnp.maximum(
            jnp.dot(w1f_ref[...], gap, preferred_element_type=jnp.float32)
            + b1f_ref[...], 0.0)                                 # (Ch, 1)
        g_se = jax.nn.sigmoid(
            jnp.dot(w2f_ref[...], hid, preferred_element_type=jnp.float32)
            + b2f_ref[...])                                      # (Cout, 1)
        # SC branch: 1x1 conv over channels as VPU mul + channel-dim reduce
        g_sc = jax.nn.sigmoid(
            jnp.sum(up2 * wsc_ref[...], axis=0, keepdims=True)
            + bsc_ref[...])                                      # (1, H2, W2)
        # x = g_sc * x + g_se * x
        up2 = up2 * (g_sc + g_se.reshape(cout, 1, 1))

    o_ref[...] = up2.astype(o_ref.dtype)


# ------------------------------ host wrapper --------------------------------

def _bilinear_matrix(n_in, n_out):
    # align_corners=True: src = o * (n_in - 1) / (n_out - 1); linear interp weights.
    if n_in <= 1 or n_out <= 1:                      # degenerate-size guard
        return jnp.zeros((n_out, n_in), jnp.float32).at[:, 0].set(1.0)
    o = jnp.arange(n_out, dtype=jnp.float32)
    src = o * (n_in - 1) / (n_out - 1)
    i0 = jnp.clip(jnp.floor(src).astype(jnp.int32), 0, n_in - 2)
    frac = src - i0.astype(jnp.float32)
    lo = jax.nn.one_hot(i0, n_in, dtype=jnp.float32)
    hi = jax.nn.one_hot(jnp.clip(i0 + 1, 0, n_in - 1), n_in, dtype=jnp.float32)
    return (1.0 - frac)[:, None] * lo + frac[:, None] * hi       # (n_out, n_in)


def decoder2_forward(x_nchw, params, *, scse=True, out_dtype=jnp.bfloat16):
    # e=None in the reference forward -> `if e:` is False, no concat.
    N, Cin, H, W = x_nchw.shape
    Hp, Wp = H + 2, W + 2
    L1 = Hp * Wp
    PAD = Wp + 1                                  # max |flat 3x3 tap offset|
    L1A = _round_up(L1, 128)                      # lane-aligned flat grid
    LX = _round_up(L1A + 2 * PAD, 128)            # lane-aligned extended axis
    H2, W2 = 2 * H, 2 * W
    Cmid = params["w1"].shape[0]
    Cout = params["w2"].shape[0]
    Ch = params["w1fc"].shape[0]

    # Flat zero-padded input (tiny vs. the output; kept host-side for simplicity).
    xp = jnp.pad(x_nchw, ((0, 0), (0, 0), (1, 1), (1, 1))).reshape(N, Cin, L1)
    xext = jnp.pad(xp, ((0, 0), (0, 0), (PAD, LX - PAD - L1))).astype(jnp.bfloat16)

    # Interior mask (zeros on the 1-px pad ring and the lane-alignment filler).
    yy, xx = jnp.meshgrid(jnp.arange(Hp), jnp.arange(Wp), indexing="ij")
    inner = ((yy >= 1) & (yy <= H) & (xx >= 1) & (xx <= W)).astype(jnp.float32)
    mask = jnp.zeros((1, L1A), jnp.float32).at[0, :L1].set(inner.reshape(L1))

    # Separable bilinear matrices (O(H^2 + W^2) bytes).
    uwT = _bilinear_matrix(W, W2).T.astype(jnp.bfloat16)                 # (W, W2)
    uh_b = jnp.broadcast_to(_bilinear_matrix(H, H2).astype(jnp.bfloat16),
                            (Cout, H2, H))                               # (Cout, H2, H)

    # Flat tap offsets of the 3x3 stencil on the padded grid.
    starts = tuple(PAD + (ky - 1) * Wp + (kx - 1)
                   for ky in range(3) for kx in range(3))

    kernel = functools.partial(_decoder2_kernel, starts=starts, pad=PAD,
                               l1a=L1A, wp=Wp, h=H, w=W, apply_scse=scse)

    inv = dict(pipeline_mode=pl.Buffered(1))   # single-buffer grid-invariant operands

    grid_spec = pltpu.PrefetchScalarGridSpec(
        num_scalar_prefetch=0,
        grid=(N,),
        in_specs=[
            pl.BlockSpec((None, Cin, LX), lambda n: (n, 0, 0)),
            pl.BlockSpec((Cmid, 9 * Cin), lambda n: (0, 0), **inv),
            pl.BlockSpec((Cmid, 1), lambda n: (0, 0), **inv),
            pl.BlockSpec((Cout, 9 * Cmid), lambda n: (0, 0), **inv),
            pl.BlockSpec((Cout, 1), lambda n: (0, 0), **inv),
            pl.BlockSpec((1, L1A), lambda n: (0, 0), **inv),
            pl.BlockSpec((W, W2), lambda n: (0, 0), **inv),
            pl.BlockSpec((Cout, H2, H), lambda n: (0, 0, 0), **inv),
            pl.BlockSpec((Cout, 1, 1), lambda n: (0, 0, 0), **inv),
            pl.BlockSpec((1, 1, 1), lambda n: (0, 0, 0), **inv),
            pl.BlockSpec((Ch, Cout), lambda n: (0, 0), **inv),
            pl.BlockSpec((Ch, 1), lambda n: (0, 0), **inv),
            pl.BlockSpec((Cout, Ch), lambda n: (0, 0), **inv),
            pl.BlockSpec((Cout, 1), lambda n: (0, 0), **inv),
        ],
        out_specs=pl.BlockSpec((None, Cout, H2, W2), lambda n: (n, 0, 0, 0)),
        scratch_shapes=[pltpu.VMEM((Cmid, LX), jnp.bfloat16)],
    )

    out = pl.pallas_call(
        kernel,
        out_shape=jax.ShapeDtypeStruct((N, Cout, H2, W2), out_dtype),
        grid_spec=grid_spec,
        compiler_params=pltpu.CompilerParams(
            dimension_semantics=("parallel",),
            vmem_limit_bytes=32 * 1024 * 1024),
    )(xext, params["w1"], params["b1"], params["w2"], params["b2"], mask,
      uwT, uh_b, params["wsc"], params["bsc"], params["w1fc"], params["b1fc"],
      params["w2fc"], params["b2fc"])

    return out                                    # NCHW, no post-reshape needed


# ------------------------------- parameters ---------------------------------

def init_params(key, cin, cmid, cout):
    eps = 1e-5
    keys = jax.random.split(key, 18)

    def fold_conv_bn(kw, kb, kg, kbeta, km, kv, c_in, c_out):
        w = 0.1 * jax.random.normal(kw, (c_out, c_in, 3, 3), jnp.float32)
        b = 0.1 * jax.random.normal(kb, (c_out,), jnp.float32)
        gamma = 1.0 + 0.1 * jax.random.normal(kg, (c_out,), jnp.float32)
        beta = 0.1 * jax.random.normal(kbeta, (c_out,), jnp.float32)
        rmean = 0.1 * jax.random.normal(km, (c_out,), jnp.float32)
        rvar = 1.0 + 0.1 * jnp.abs(jax.random.normal(kv, (c_out,), jnp.float32))
        s = gamma / jnp.sqrt(rvar + eps)
        w_f = w * s[:, None, None, None]
        b_f = (b - rmean) * s + beta
        # tap-stacked layout: (c_out, 9*c_in), column = (ky*3 + kx)*c_in + c_in_idx
        w_stack = jnp.transpose(w_f, (0, 2, 3, 1)).reshape(c_out, 9 * c_in)
        return w_stack.astype(jnp.bfloat16), b_f.reshape(c_out, 1)

    w1, b1 = fold_conv_bn(*keys[0:6], cin, cmid)
    w2, b2 = fold_conv_bn(*keys[6:12], cmid, cout)

    # SCModule: Conv2d(cout, 1, kernel_size=1) weights as (cout, 1, 1) + scalar bias.
    wsc = 0.1 * jax.random.normal(keys[12], (cout, 1, 1), jnp.float32)
    bsc = 0.1 * jax.random.normal(keys[13], (1, 1, 1), jnp.float32)
    # SEModule: Linear(cout, cout//2), Linear(cout//2, cout).
    ch = cout // 2
    w1fc = 0.1 * jax.random.normal(keys[14], (ch, cout), jnp.float32)
    b1fc = 0.1 * jax.random.normal(keys[15], (ch, 1), jnp.float32)
    w2fc = 0.1 * jax.random.normal(keys[16], (cout, ch), jnp.float32)
    b2fc = 0.1 * jax.random.normal(keys[17], (cout, 1), jnp.float32)

    return dict(w1=w1, b1=b1, w2=w2, b2=b2, wsc=wsc, bsc=bsc,
                w1fc=w1fc, b1fc=b1fc, w2fc=w2fc, b2fc=b2fc)


if __name__ == "__main__":
    key = jax.random.PRNGKey(0)
    N, Cin, Cmid, Cout, H, W = 2, 4, 8, 8, 16, 16
    kx_, kp = jax.random.split(key)
    x = jax.random.normal(kx_, (N, Cin, H, W), jnp.float32)
    params = init_params(kp, Cin, Cmid, Cout)

    fwd = jax.jit(functools.partial(decoder2_forward, scse=True))
    y = fwd(x, params)
    jax.block_until_ready(y)
    assert y.shape == (N, Cout, 2 * H, 2 * W), y.shape
    assert bool(jnp.all(jnp.isfinite(y.astype(jnp.float32))))
    print("KERNEL_OK")
</pallas_src>

<mosaic_0001>
module attributes {stable_mosaic.version = 11 : i64} {
  func.func @_decoder2_kernel(%arg0: i32, %arg1: memref<1x4x512xbf16, #tpu.memory_space<vmem>>, %arg2: memref<8x36xbf16, #tpu.memory_space<vmem>>, %arg3: memref<8x1xf32, #tpu.memory_space<vmem>>, %arg4: memref<8x72xbf16, #tpu.memory_space<vmem>>, %arg5: memref<8x1xf32, #tpu.memory_space<vmem>>, %arg6: memref<1x384xf32, #tpu.memory_space<vmem>>, %arg7: memref<16x32xbf16, #tpu.memory_space<vmem>>, %arg8: memref<8x32x16xbf16, #tpu.memory_space<vmem>>, %arg9: memref<8x1x1xf32, #tpu.memory_space<vmem>>, %arg10: memref<1x1x1xf32, #tpu.memory_space<vmem>>, %arg11: memref<4x8xf32, #tpu.memory_space<vmem>>, %arg12: memref<4x1xf32, #tpu.memory_space<vmem>>, %arg13: memref<8x4xf32, #tpu.memory_space<vmem>>, %arg14: memref<8x1xf32, #tpu.memory_space<vmem>>, %arg15: memref<1x8x32x32xbf16, #tpu.memory_space<vmem>>, %arg16: memref<8x512xbf16, #tpu.memory_space<vmem>>) attributes {dimension_semantics = [#tpu.dimension_semantics<parallel>], iteration_bounds = array<i64: 2>, scalar_prefetch = 0 : i64, scratch_operands = 1 : i64, tpu.core_type = #tpu.core_type<tc>, window_params = [{transform_indices = @transform_0, window_bounds = array<i64: 1, 4, 512>}, {pipeline_mode = #tpu.pipeline_mode<synchronous>, transform_indices = @transform_1, window_bounds = array<i64: 8, 36>}, {pipeline_mode = #tpu.pipeline_mode<synchronous>, transform_indices = @transform_2, window_bounds = array<i64: 8, 1>}, {pipeline_mode = #tpu.pipeline_mode<synchronous>, transform_indices = @transform_3, window_bounds = array<i64: 8, 72>}, {pipeline_mode = #tpu.pipeline_mode<synchronous>, transform_indices = @transform_4, window_bounds = array<i64: 8, 1>}, {pipeline_mode = #tpu.pipeline_mode<synchronous>, transform_indices = @transform_5, window_bounds = array<i64: 1, 384>}, {pipeline_mode = #tpu.pipeline_mode<synchronous>, transform_indices = @transform_6, window_bounds = array<i64: 16, 32>}, {pipeline_mode = #tpu.pipeline_mode<synchronous>, transform_indices = @transform_7, window_bounds = array<i64: 8, 32, 16>}, {pipeline_mode = #tpu.pipeline_mode<synchronous>, transform_indices = @transform_8, window_bounds = array<i64: 8, 1, 1>}, {pipeline_mode = #tpu.pipeline_mode<synchronous>, transform_indices = @transform_9, window_bounds = array<i64: 1, 1, 1>}, {pipeline_mode = #tpu.pipeline_mode<synchronous>, transform_indices = @transform_10, window_bounds = array<i64: 4, 8>}, {pipeline_mode = #tpu.pipeline_mode<synchronous>, transform_indices = @transform_11, window_bounds = array<i64: 4, 1>}, {pipeline_mode = #tpu.pipeline_mode<synchronous>, transform_indices = @transform_12, window_bounds = array<i64: 8, 4>}, {pipeline_mode = #tpu.pipeline_mode<synchronous>, transform_indices = @transform_13, window_bounds = array<i64: 8, 1>}, {transform_indices = @transform_14, window_bounds = array<i64: 1, 8, 32, 32>}]} {
    %c0 = arith.constant 0 : index
    %c0_0 = arith.constant 0 : index
    %c0_1 = arith.constant 0 : index
    %0 = vector.load %arg1[%c0, %c0_0, %c0_1] : memref<1x4x512xbf16, #tpu.memory_space<vmem>>, vector<1x4x512xbf16>
    %1 = vector.shape_cast %0 : vector<1x4x512xbf16> to vector<4x512xbf16>
    %2 = vector.extract_strided_slice %1 {offsets = [0, 0], sizes = [4, 384], strides = [1, 1]} : vector<4x512xbf16> to vector<4x384xbf16>
    %3 = vector.extract_strided_slice %1 {offsets = [0, 1], sizes = [4, 384], strides = [1, 1]} : vector<4x512xbf16> to vector<4x384xbf16>
    %4 = vector.extract_strided_slice %1 {offsets = [0, 2], sizes = [4, 384], strides = [1, 1]} : vector<4x512xbf16> to vector<4x384xbf16>
    %5 = vector.extract_strided_slice %1 {offsets = [0, 18], sizes = [4, 384], strides = [1, 1]} : vector<4x512xbf16> to vector<4x384xbf16>
    %6 = vector.extract_strided_slice %1 {offsets = [0, 19], sizes = [4, 384], strides = [1, 1]} : vector<4x512xbf16> to vector<4x384xbf16>
    %7 = vector.extract_strided_slice %1 {offsets = [0, 20], sizes = [4, 384], strides = [1, 1]} : vector<4x512xbf16> to vector<4x384xbf16>
    %8 = vector.extract_strided_slice %1 {offsets = [0, 36], sizes = [4, 384], strides = [1, 1]} : vector<4x512xbf16> to vector<4x384xbf16>
    %9 = vector.extract_strided_slice %1 {offsets = [0, 37], sizes = [4, 384], strides = [1, 1]} : vector<4x512xbf16> to vector<4x384xbf16>
    %10 = vector.extract_strided_slice %1 {offsets = [0, 38], sizes = [4, 384], strides = [1, 1]} : vector<4x512xbf16> to vector<4x384xbf16>
    %11 = tpu.concatenate %2, %3, %4, %5, %6, %7, %8, %9, %10 in 0 : vector<4x384xbf16>, vector<4x384xbf16>, vector<4x384xbf16>, vector<4x384xbf16>, vector<4x384xbf16>, vector<4x384xbf16>, vector<4x384xbf16>, vector<4x384xbf16>, vector<4x384xbf16> -> vector<36x384xbf16>
    %c0_2 = arith.constant 0 : index
    %c0_3 = arith.constant 0 : index
    %12 = vector.load %arg2[%c0_2, %c0_3] : memref<8x36xbf16, #tpu.memory_space<vmem>>, vector<8x36xbf16>
    %cst = arith.constant dense<0.000000e+00> : vector<8x384xf32>
    %13 = tpu.matmul %12, %11, %cst {dimension_numbers = #tpu.dot_dimension_numbers<[1], [0], [0], [1], [0, 0, 1, 1], [], []>} : vector<8x36xbf16>, vector<36x384xbf16>, vector<8x384xf32> -> vector<8x384xf32>
    %c0_4 = arith.constant 0 : index
    %c0_5 = arith.constant 0 : index
    %14 = vector.load %arg3[%c0_4, %c0_5] : memref<8x1xf32, #tpu.memory_space<vmem>>, vector<8x1xf32>
    %15 = vector.broadcast %14 : vector<8x1xf32> to vector<8x384xf32>
    %16 = arith.addf %13, %15 : vector<8x384xf32>
    %cst_6 = arith.constant 0.000000e+00 : f32
    %17 = vector.broadcast %cst_6 : f32 to vector<8x384xf32>
    %18 = arith.maximumf %16, %17 : vector<8x384xf32>
    %c0_7 = arith.constant 0 : index
    %c0_8 = arith.constant 0 : index
    %19 = vector.load %arg6[%c0_7, %c0_8] : memref<1x384xf32, #tpu.memory_space<vmem>>, vector<1x384xf32>
    %20 = vector.broadcast %19 : vector<1x384xf32> to vector<8x384xf32>
    %21 = arith.mulf %18, %20 : vector<8x384xf32>
    %cst_9 = arith.constant 0.000000e+00 : bf16
    %22 = vector.broadcast %cst_9 : bf16 to vector<8x19xbf16>
    %c0_10 = arith.constant 0 : index
    %c0_11 = arith.constant 0 : index
    %23 = vector.load %arg16[%c0_10, %c0_11] : memref<8x512xbf16, #tpu.memory_space<vmem>>, vector<8x19xbf16>
    tpu.vector_store %arg16[%c0_10, %c0_11], %22 {strides = array<i32>} : memref<8x512xbf16, #tpu.memory_space<vmem>>, vector<8x19xbf16>,
    %cst_12 = arith.constant 0.000000e+00 : bf16
    %24 = vector.broadcast %cst_12 : bf16 to vector<8x109xbf16>
    %c0_13 = arith.constant 0 : index
    %c403 = arith.constant 403 : index
    %25 = vector.load %arg16[%c0_13, %c403] : memref<8x512xbf16, #tpu.memory_space<vmem>>, vector<8x109xbf16>
    tpu.vector_store %arg16[%c0_13, %c403], %24 {strides = array<i32>} : memref<8x512xbf16, #tpu.memory_space<vmem>>, vector<8x109xbf16>,
    %26 = arith.truncf %21 : vector<8x384xf32> to vector<8x384xbf16>
    %c0_14 = arith.constant 0 : index
    %c19 = arith.constant 19 : index
    %27 = vector.load %arg16[%c0_14, %c19] : memref<8x512xbf16, #tpu.memory_space<vmem>>, vector<8x384xbf16>
    tpu.vector_store %arg16[%c0_14, %c19], %26 {strides = array<i32>} : memref<8x512xbf16, #tpu.memory_space<vmem>>, vector<8x384xbf16>,
    %c0_15 = arith.constant 0 : index
    %c0_16 = arith.constant 0 : index
    %28 = vector.load %arg16[%c0_15, %c0_16] : memref<8x512xbf16, #tpu.memory_space<vmem>>, vector<8x384xbf16>
    %c0_17 = arith.constant 0 : index
    %c1 = arith.constant 1 : index
    %29 = vector.load %arg16[%c0_17, %c1] : memref<8x512xbf16, #tpu.memory_space<vmem>>, vector<8x384xbf16>
    %c0_18 = arith.constant 0 : index
    %c2 = arith.constant 2 : index
    %30 = vector.load %arg16[%c0_18, %c2] : memref<8x512xbf16, #tpu.memory_space<vmem>>, vector<8x384xbf16>
    %c0_19 = arith.constant 0 : index
    %c18 = arith.constant 18 : index
    %31 = vector.load %arg16[%c0_19, %c18] : memref<8x512xbf16, #tpu.memory_space<vmem>>, vector<8x384xbf16>
    %c0_20 = arith.constant 0 : index
    %c19_21 = arith.constant 19 : index
    %32 = vector.load %arg16[%c0_20, %c19_21] : memref<8x512xbf16, #tpu.memory_space<vmem>>, vector<8x384xbf16>
    %c0_22 = arith.constant 0 : index
    %c20 = arith.constant 20 : index
    %33 = vector.load %arg16[%c0_22, %c20] : memref<8x512xbf16, #tpu.memory_space<vmem>>, vector<8x384xbf16>
    %c0_23 = arith.constant 0 : index
    %c36 = arith.constant 36 : index
    %34 = vector.load %arg16[%c0_23, %c36] : memref<8x512xbf16, #tpu.memory_space<vmem>>, vector<8x384xbf16>
    %c0_24 = arith.constant 0 : index
    %c37 = arith.constant 37 : index
    %35 = vector.load %arg16[%c0_24, %c37] : memref<8x512xbf16, #tpu.memory_space<vmem>>, vector<8x384xbf16>
    %c0_25 = arith.constant 0 : index
    %c38 = arith.constant 38 : index
    %36 = vector.load %arg16[%c0_25, %c38] : memref<8x512xbf16, #tpu.memory_space<vmem>>, vector<8x384xbf16>
    %37 = tpu.concatenate %28, %29, %30, %31, %32, %33, %34, %35, %36 in 0 : vector<8x384xbf16>, vector<8x384xbf16>, vector<8x384xbf16>, vector<8x384xbf16>, vector<8x384xbf16>, vector<8x384xbf16>, vector<8x384xbf16>, vector<8x384xbf16>, vector<8x384xbf16> -> vector<72x384xbf16>
    %c0_26 = arith.constant 0 : index
    %c0_27 = arith.constant 0 : index
    %38 = vector.load %arg4[%c0_26, %c0_27] : memref<8x72xbf16, #tpu.memory_space<vmem>>, vector<8x72xbf16>
    %cst_28 = arith.constant dense<0.000000e+00> : vector<8x384xf32>
    %39 = tpu.matmul %38, %37, %cst_28 {dimension_numbers = #tpu.dot_dimension_numbers<[1], [0], [0], [1], [0, 0, 1, 1], [], []>} : vector<8x72xbf16>, vector<72x384xbf16>, vector<8x384xf32> -> vector<8x384xf32>
    %c0_29 = arith.constant 0 : index
    %c0_30 = arith.constant 0 : index
    %40 = vector.load %arg5[%c0_29, %c0_30] : memref<8x1xf32, #tpu.memory_space<vmem>>, vector<8x1xf32>
    %41 = vector.broadcast %40 : vector<8x1xf32> to vector<8x384xf32>
    %42 = arith.addf %39, %41 : vector<8x384xf32>
    %cst_31 = arith.constant 0.000000e+00 : f32
    %43 = vector.broadcast %cst_31 : f32 to vector<8x384xf32>
    %44 = arith.maximumf %42, %43 : vector<8x384xf32>
    %45 = vector.extract_strided_slice %44 {offsets = [0, 19], sizes = [8, 16], strides = [1, 1]} : vector<8x384xf32> to vector<8x16xf32>
    %46 = vector.extract_strided_slice %44 {offsets = [0, 37], sizes = [8, 16], strides = [1, 1]} : vector<8x384xf32> to vector<8x16xf32>
    %47 = vector.extract_strided_slice %44 {offsets = [0, 55], sizes = [8, 16], strides = [1, 1]} : vector<8x384xf32> to vector<8x16xf32>
    %48 = vector.extract_strided_slice %44 {offsets = [0, 73], sizes = [8, 16], strides = [1, 1]} : vector<8x384xf32> to vector<8x16xf32>
    %49 = vector.extract_strided_slice %44 {offsets = [0, 91], sizes = [8, 16], strides = [1, 1]} : vector<8x384xf32> to vector<8x16xf32>
    %50 = vector.extract_strided_slice %44 {offsets = [0, 109], sizes = [8, 16], strides = [1, 1]} : vector<8x384xf32> to vector<8x16xf32>
    %51 = vector.extract_strided_slice %44 {offsets = [0, 127], sizes = [8, 16], strides = [1, 1]} : vector<8x384xf32> to vector<8x16xf32>
    %52 = vector.extract_strided_slice %44 {offsets = [0, 145], sizes = [8, 16], strides = [1, 1]} : vector<8x384xf32> to vector<8x16xf32>
    %53 = vector.extract_strided_slice %44 {offsets = [0, 163], sizes = [8, 16], strides = [1, 1]} : vector<8x384xf32> to vector<8x16xf32>
    %54 = vector.extract_strided_slice %44 {offsets = [0, 181], sizes = [8, 16], strides = [1, 1]} : vector<8x384xf32> to vector<8x16xf32>
    %55 = vector.extract_strided_slice %44 {offsets = [0, 199], sizes = [8, 16], strides = [1, 1]} : vector<8x384xf32> to vector<8x16xf32>
    %56 = vector.extract_strided_slice %44 {offsets = [0, 217], sizes = [8, 16], strides = [1, 1]} : vector<8x384xf32> to vector<8x16xf32>
    %57 = vector.extract_strided_slice %44 {offsets = [0, 235], sizes = [8, 16], strides = [1, 1]} : vector<8x384xf32> to vector<8x16xf32>
    %58 = vector.extract_strided_slice %44 {offsets = [0, 253], sizes = [8, 16], strides = [1, 1]} : vector<8x384xf32> to vector<8x16xf32>
    %59 = vector.extract_strided_slice %44 {offsets = [0, 271], sizes = [8, 16], strides = [1, 1]} : vector<8x384xf32> to vector<8x16xf32>
    %60 = vector.extract_strided_slice %44 {offsets = [0, 289], sizes = [8, 16], strides = [1, 1]} : vector<8x384xf32> to vector<8x16xf32>
    %61 = tpu.concatenate %45, %46, %47, %48, %49, %50, %51, %52, %53, %54, %55, %56, %57, %58, %59, %60 in 0 : vector<8x16xf32>, vector<8x16xf32>, vector<8x16xf32>, vector<8x16xf32>, vector<8x16xf32>, vector<8x16xf32>, vector<8x16xf32>, vector<8x16xf32>, vector<8x16xf32>, vector<8x16xf32>, vector<8x16xf32>, vector<8x16xf32>, vector<8x16xf32>, vector<8x16xf32>, vector<8x16xf32>, vector<8x16xf32> -> vector<128x16xf32>
    %62 = vector.shape_cast %61 : vector<128x16xf32> to vector<16x8x16xf32>
    %63 = tpu.transpose %62, [1, 0, 2] : vector<16x8x16xf32> -> vector<8x16x16xf32>
    %64 = vector.shape_cast %63 : vector<8x16x16xf32> to vector<128x16xf32>
    %65 = arith.truncf %64 : vector<128x16xf32> to vector<128x16xbf16>
    %c0_32 = arith.constant 0 : index
    %c0_33 = arith.constant 0 : index
    %66 = vector.load %arg7[%c0_32, %c0_33] : memref<16x32xbf16, #tpu.memory_space<vmem>>, vector<16x32xbf16>
    %cst_34 = arith.constant dense<0.000000e+00> : vector<128x32xf32>
    %67 = tpu.matmul %65, %66, %cst_34 {dimension_numbers = #tpu.dot_dimension_numbers<[1], [0], [0], [1], [0, 0, 1, 1], [], []>} : vector<128x16xbf16>, vector<16x32xbf16>, vector<128x32xf32> -> vector<128x32xf32>
    %68 = vector.shape_cast %67 : vector<128x32xf32> to vector<8x16x32xf32>
    %69 = arith.truncf %68 : vector<8x16x32xf32> to vector<8x16x32xbf16>
    %c0_35 = arith.constant 0 : index
    %c0_36 = arith.constant 0 : index
    %c0_37 = arith.constant 0 : index
    %70 = vector.load %arg8[%c0_35, %c0_36, %c0_37] : memref<8x32x16xbf16, #tpu.memory_space<vmem>>, vector<8x32x16xbf16>
    "tpu.trace_start"() <{level = 10 : i32, message = "cab,cbd->cad"}> : () -> ()
    %cst_38 = arith.constant dense<0.000000e+00> : vector<8x32x32xf32>
    %71 = tpu.matmul %70, %69, %cst_38 {dimension_numbers = #tpu.dot_dimension_numbers<[2], [1], [1], [2], [0, 0, 0, 1, 1, 2], [0], [0]>} : vector<8x32x16xbf16>, vector<8x16x32xbf16>, vector<8x32x32xf32> -> vector<8x32x32xf32>
    "tpu.trace_stop"() : () -> ()
    %cst_39 = arith.constant dense<0.000000e+00> : vector<8x32xf32>
    %72 = vector.multi_reduction <add>, %71, %cst_39 [2] : vector<8x32x32xf32> to vector<8x32xf32>
    %cst_40 = arith.constant 3.200000e+01 : f32
    %73 = vector.broadcast %cst_40 : f32 to vector<8x32xf32>
    %74 = arith.divf %72, %73 : vector<8x32xf32>
    %cst_41 = arith.constant dense<0.000000e+00> : vector<8xf32>
    %75 = vector.multi_reduction <add>, %74, %cst_41 [1] : vector<8x32xf32> to vector<8xf32>
    %76 = vector.shape_cast %75 : vector<8xf32> to vector<8x1xf32>
    %cst_42 = arith.constant 3.200000e+01 : f32
    %77 = vector.broadcast %cst_42 : f32 to vector<8x1xf32>
    %78 = arith.divf %76, %77 : vector<8x1xf32>
    %c0_43 = arith.constant 0 : index
    %c0_44 = arith.constant 0 : index
    %79 = vector.load %arg11[%c0_43, %c0_44] : memref<4x8xf32, #tpu.memory_space<vmem>>, vector<4x8xf32>
    %cst_45 = arith.constant dense<0.000000e+00> : vector<4x1xf32>
    %80 = tpu.matmul %79, %78, %cst_45 {dimension_numbers = #tpu.dot_dimension_numbers<[1], [0], [0], [1], [0, 0, 1, 1], [], []>} : vector<4x8xf32>, vector<8x1xf32>, vector<4x1xf32> -> vector<4x1xf32>
    %c0_46 = arith.constant 0 : index
    %c0_47 = arith.constant 0 : index
    %81 = vector.load %arg12[%c0_46, %c0_47] : memref<4x1xf32, #tpu.memory_space<vmem>>, vector<4x1xf32>
    %82 = arith.addf %80, %81 : vector<4x1xf32>
    %cst_48 = arith.constant 0.000000e+00 : f32
    %83 = vector.broadcast %cst_48 : f32 to vector<4x1xf32>
    %84 = arith.maximumf %82, %83 : vector<4x1xf32>
    %c0_49 = arith.constant 0 : index
    %c0_50 = arith.constant 0 : index
    %85 = vector.load %arg13[%c0_49, %c0_50] : memref<8x4xf32, #tpu.memory_space<vmem>>, vector<8x4xf32>
    %cst_51 = arith.constant dense<0.000000e+00> : vector<8x1xf32>
    %86 = tpu.matmul %85, %84, %cst_51 {dimension_numbers = #tpu.dot_dimension_numbers<[1], [0], [0], [1], [0, 0, 1, 1], [], []>} : vector<8x4xf32>, vector<4x1xf32>, vector<8x1xf32> -> vector<8x1xf32>
    %c0_52 = arith.constant 0 : index
    %c0_53 = arith.constant 0 : index
    %87 = vector.load %arg14[%c0_52, %c0_53] : memref<8x1xf32, #tpu.memory_space<vmem>>, vector<8x1xf32>
    %88 = arith.addf %86, %87 : vector<8x1xf32>
    %89 = arith.negf %88 : vector<8x1xf32>
    %90 = math.exp %89 : vector<8x1xf32>
    %cst_54 = arith.constant 1.000000e+00 : f32
    %91 = vector.broadcast %cst_54 : f32 to vector<8x1xf32>
    %92 = arith.addf %91, %90 : vector<8x1xf32>
    %93 = arith.divf %91, %92 : vector<8x1xf32>
    %c0_55 = arith.constant 0 : index
    %c0_56 = arith.constant 0 : index
    %c0_57 = arith.constant 0 : index
    %94 = vector.load %arg9[%c0_55, %c0_56, %c0_57] : memref<8x1x1xf32, #tpu.memory_space<vmem>>, vector<8x1x1xf32>
    %95 = vector.broadcast %94 : vector<8x1x1xf32> to vector<8x32x32xf32>
    %96 = arith.mulf %71, %95 : vector<8x32x32xf32>
    %cst_58 = arith.constant dense<0.000000e+00> : vector<32x32xf32>
    %97 = vector.multi_reduction <add>, %96, %cst_58 [0] : vector<8x32x32xf32> to vector<32x32xf32>
    %98 = vector.shape_cast %97 : vector<32x32xf32> to vector<1x32x32xf32>
    %c0_59 = arith.constant 0 : index
    %c0_60 = arith.constant 0 : index
    %c0_61 = arith.constant 0 : index
    %99 = vector.load %arg10[%c0_59, %c0_60, %c0_61] : memref<1x1x1xf32, #tpu.memory_space<vmem>>, vector<1x1x1xf32>
    %100 = vector.broadcast %99 : vector<1x1x1xf32> to vector<1x32x32xf32>
    %101 = arith.addf %98, %100 : vector<1x32x32xf32>
    %102 = arith.negf %101 : vector<1x32x32xf32>
    %103 = math.exp %102 : vector<1x32x32xf32>
    %cst_62 = arith.constant 1.000000e+00 : f32
    %104 = vector.broadcast %cst_62 : f32 to vector<1x32x32xf32>
    %105 = arith.addf %104, %103 : vector<1x32x32xf32>
    %106 = arith.divf %104, %105 : vector<1x32x32xf32>
    %107 = vector.shape_cast %93 : vector<8x1xf32> to vector<8x1x1xf32>
    %108 = vector.broadcast %106 : vector<1x32x32xf32> to vector<8x32x32xf32>
    %109 = vector.broadcast %107 : vector<8x1x1xf32> to vector<8x32x32xf32>
    %110 = arith.addf %108, %109 : vector<8x32x32xf32>
    %111 = arith.mulf %71, %110 : vector<8x32x32xf32>
    %112 = arith.truncf %111 : vector<8x32x32xf32> to vector<8x32x32xbf16>
    %c0_63 = arith.constant 0 : index
    %c0_64 = arith.constant 0 : index
    %c0_65 = arith.constant 0 : index
    %c0_66 = arith.constant 0 : index
    %113 = vector.load %arg15[%c0_63, %c0_64, %c0_65, %c0_66] : memref<1x8x32x32xbf16, #tpu.memory_space<vmem>>, vector<1x8x32x32xbf16>
    %114 = vector.shape_cast %113 : vector<1x8x32x32xbf16> to vector<8x32x32xbf16>
    %115 = vector.shape_cast %112 : vector<8x32x32xbf16> to vector<1x8x32x32xbf16>
    tpu.vector_store %arg15[%c0_63, %c0_64, %c0_65, %c0_66], %115 {strides = array<i32>} : memref<1x8x32x32xbf16, #tpu.memory_space<vmem>>, vector<1x8x32x32xbf16>,
    return
  }
  func.func @transform_0(%arg0: i32) -> (i32, i32, i32) {
    %c0_i32 = arith.constant 0 : i32
    %c0_i32_0 = arith.constant 0 : i32
    %c0_i32_1 = arith.constant 0 : i32
    return %arg0, %c0_i32, %c0_i32_0 : i32, i32, i32
  }
  func.func @transform_1(%arg0: i32) -> (i32, i32) {
    %c0_i32 = arith.constant 0 : i32
    %c0_i32_0 = arith.constant 0 : i32
    %c0_i32_1 = arith.constant 0 : i32
    return %c0_i32, %c0_i32_0 : i32, i32
  }
  func.func @transform_2(%arg0: i32) -> (i32, i32) {
    %c0_i32 = arith.constant 0 : i32
    %c0_i32_0 = arith.constant 0 : i32
    %c0_i32_1 = arith.constant 0 : i32
    return %c0_i32, %c0_i32_0 : i32, i32
  }
  func.func @transform_3(%arg0: i32) -> (i32, i32) {
    %c0_i32 = arith.constant 0 : i32
    %c0_i32_0 = arith.constant 0 : i32
    %c0_i32_1 = arith.constant 0 : i32
    return %c0_i32, %c0_i32_0 : i32, i32
  }
  func.func @transform_4(%arg0: i32) -> (i32, i32) {
    %c0_i32 = arith.constant 0 : i32
    %c0_i32_0 = arith.constant 0 : i32
    %c0_i32_1 = arith.constant 0 : i32
    return %c0_i32, %c0_i32_0 : i32, i32
  }
  func.func @transform_5(%arg0: i32) -> (i32, i32) {
    %c0_i32 = arith.constant 0 : i32
    %c0_i32_0 = arith.constant 0 : i32
    %c0_i32_1 = arith.constant 0 : i32
    return %c0_i32, %c0_i32_0 : i32, i32
  }
  func.func @transform_6(%arg0: i32) -> (i32, i32) {
    %c0_i32 = arith.constant 0 : i32
    %c0_i32_0 = arith.constant 0 : i32
    %c0_i32_1 = arith.constant 0 : i32
    return %c0_i32, %c0_i32_0 : i32, i32
  }
  func.func @transform_7(%arg0: i32) -> (i32, i32, i32) {
    %c0_i32 = arith.constant 0 : i32
    %c0_i32_0 = arith.constant 0 : i32
    %c0_i32_1 = arith.constant 0 : i32
    %c0_i32_2 = arith.constant 0 : i32
    return %c0_i32, %c0_i32_0, %c0_i32_1 : i32, i32, i32
  }
  func.func @transform_8(%arg0: i32) -> (i32, i32, i32) {
    %c0_i32 = arith.constant 0 : i32
    %c0_i32_0 = arith.constant 0 : i32
    %c0_i32_1 = arith.constant 0 : i32
    %c0_i32_2 = arith.constant 0 : i32
    return %c0_i32, %c0_i32_0, %c0_i32_1 : i32, i32, i32
  }
  func.func @transform_9(%arg0: i32) -> (i32, i32, i32) {
    %c0_i32 = arith.constant 0 : i32
    %c0_i32_0 = arith.constant 0 : i32
    %c0_i32_1 = arith.constant 0 : i32
    %c0_i32_2 = arith.constant 0 : i32
    return %c0_i32, %c0_i32_0, %c0_i32_1 : i32, i32, i32
  }
  func.func @transform_10(%arg0: i32) -> (i32, i32) {
    %c0_i32 = arith.constant 0 : i32
    %c0_i32_0 = arith.constant 0 : i32
    %c0_i32_1 = arith.constant 0 : i32
    return %c0_i32, %c0_i32_0 : i32, i32
  }
  func.func @transform_11(%arg0: i32) -> (i32, i32) {
    %c0_i32 = arith.constant 0 : i32
    %c0_i32_0 = arith.constant 0 : i32
    %c0_i32_1 = arith.constant 0 : i32
    return %c0_i32, %c0_i32_0 : i32, i32
  }
  func.func @transform_12(%arg0: i32) -> (i32, i32) {
    %c0_i32 = arith.constant 0 : i32
    %c0_i32_0 = arith.constant 0 : i32
    %c0_i32_1 = arith.constant 0 : i32
    return %c0_i32, %c0_i32_0 : i32, i32
  }
  func.func @transform_13(%arg0: i32) -> (i32, i32) {
    %c0_i32 = arith.constant 0 : i32
    %c0_i32_0 = arith.constant 0 : i32
    %c0_i32_1 = arith.constant 0 : i32
    return %c0_i32, %c0_i32_0 : i32, i32
  }
  func.func @transform_14(%arg0: i32) -> (i32, i32, i32, i32) {
    %c0_i32 = arith.constant 0 : i32
    %c0_i32_0 = arith.constant 0 : i32
    %c0_i32_1 = arith.constant 0 : i32
    %c0_i32_2 = arith.constant 0 : i32
    return %arg0, %c0_i32, %c0_i32_0, %c0_i32_1 : i32, i32, i32, i32
  }
}

</mosaic_0001>

<llo_original>
// kernel: decoder2_forward.1
$region0: #{decoder2_forward.1}
  #allocation0 [shape = 'u32[]', space=smem, size = 0x4, offset = 0x4, fixed_abs, tag = 'smem constant byte address 0x4 - core index']
  #allocation1 [shape = 'u32[144,128]{1,0:T(1,128)}', space=vmem, size = 0x12000, scoped, tag = 'internal scratch']
  #allocation2 [shape = 'bf16[8,512]{1,0:T(8,128)(2,1)}', space=vmem, size = 0x2000, scoped, tag = 'scratch operand']
  #allocation3 [shape = 'f32[1,1,1]{2,1,0:T(1,128)S(1)}', space=vmem, size = 0x200, scoped, tag = 'scoped memory for decoder2_forward.1']
  %s0 = inlined_call_operand.vmem [shape: bf16[2,4,512], index: 0, kind: input, shape index: {}]
  %s1 = inlined_call_operand.vmem [shape: bf16[8,36], index: 1, kind: input, shape index: {}]
  %s2 = inlined_call_operand.vmem [shape: f32[8,1], index: 2, kind: input, shape index: {}]
  %s3 = inlined_call_operand.vmem [shape: bf16[8,72], index: 3, kind: input, shape index: {}]
  %s4 = inlined_call_operand.vmem [shape: f32[8,1], index: 4, kind: input, shape index: {}]
  %s5 = inlined_call_operand.vmem [shape: f32[1,384], index: 5, kind: input, shape index: {}]
  %s6 = inlined_call_operand.vmem [shape: bf16[16,32], index: 6, kind: input, shape index: {}]
  %s7 = inlined_call_operand.vmem [shape: bf16[8,32,16], index: 7, kind: input, shape index: {}]
  %s8 = inlined_call_operand.vmem [shape: f32[8,1,1], index: 8, kind: input, shape index: {}]
  %s9 = inlined_call_operand.<no memory space> [shape: f32[1,1,1], index: 9, kind: input, shape index: {}]
  %s10 = inlined_call_operand.vmem [shape: f32[4,8], index: 10, kind: input, shape index: {}]
  %s11 = inlined_call_operand.vmem [shape: f32[4,1], index: 11, kind: input, shape index: {}]
  %s12 = inlined_call_operand.vmem [shape: f32[8,4], index: 12, kind: input, shape index: {}]
  %s13 = inlined_call_operand.vmem [shape: f32[8,1], index: 13, kind: input, shape index: {}]
  %s14 = inlined_call_operand.hbm [shape: bf16[2,8,32,32], index: 14, kind: output, shape index: {}]
  %s15 = sld [smem:[#allocation0]]
  $region89: #{decoder2_forward.1} parent=0
    _
  %s17 = ssub.s32 1, %s15
  %s18 = scalar_select 0, %s17, %s15
  %v19 = vstv %s9
  %20 = vst [vmem:[#allocation3] sm:$0x1] %v19
  $region1: #{decoder2_forward.1} parent=0
    #allocation4 [shape = 'u8[131072]{0}', space=vmem, size = 0x20000, scoped, tag = 'output window, operand 0']
    #allocation5 [shape = 's32[2]{0}', space=sflag, size = 0x8, scoped, tag = 'scoped memory for decoder2_forward.1']
    %21 = vsyncpa [#allocation5], 0
    %s22 = scalar_lea.sflag [#allocation5], 1
    %23 = vsyncpa %s22, 0
    loop: start=0, step=1, limit=4
    $region2: #{decoder2_forward.1} parent=1 // loop_pre_header
      _
    $region3: #{decoder2_forward.1} parent=1 // loop_header
      %s25 = sphi 0, %s29
      %p26 = scmp.ge.s32.totalorder %s25, 4
      %s35 = sphi 0, %s37
      %s38 = sphi 0, %s35
      %s39 = sphi 0, %s38
      %s55 = sphi 0, %s39
      %s59 = sphi 0, %s59
      %s61 = sphi 0, %s59
      %s62 = sphi 0, %s61
      %s76 = sphi 0, %s62
      %s80 = sphi 0, %s80
      %s82 = sphi 0, %s80
      %s83 = sphi 0, %s82
      %s97 = sphi 0, %s83
      %s101 = sphi 0, %s101
      %s103 = sphi 0, %s101
      %s104 = sphi 0, %s103
      %s118 = sphi 0, %s104
      %s122 = sphi 0, %s122
      %s124 = sphi 0, %s122
      %s125 = sphi 0, %s124
      %s139 = sphi 0, %s125
      %s143 = sphi 0, %s143
      %s145 = sphi 0, %s143
      %s146 = sphi 0, %s145
      %s160 = sphi 0, %s146
      %s164 = sphi 0, %s164
      %s166 = sphi 0, %s164
      %s167 = sphi 0, %s166
      %s181 = sphi 0, %s167
      %s185 = sphi 0, %s185
      %s187 = sphi 0, %s185
      %s188 = sphi 0, %s187
      %s202 = sphi 0, %s188
      %s206 = sphi 0, %s206
      %s208 = sphi 0, %s206
      %s209 = sphi 0, %s208
      %s223 = sphi 0, %s209
      %s227 = sphi 0, %s227
      %s229 = sphi 0, %s227
      %s230 = sphi 0, %s229
      %s244 = sphi 0, %s230
      %s248 = sphi 0, %s248
      %s250 = sphi 0, %s248
      %s251 = sphi 0, %s250
      %s265 = sphi 0, %s251
      %s269 = sphi 0, %s269
      %s271 = sphi 0, %s269
      %s272 = sphi 0, %s271
      %s286 = sphi 0, %s272
      %s290 = sphi 0, %s290
      %s292 = sphi 0, %s290
      %s293 = sphi 0, %s292
      %s307 = sphi 0, %s293
      %s311 = sphi 0, %s311
      %s313 = sphi 0, %s311
      %s314 = sphi 0, %s313
      %s328 = sphi 0, %s314
      %s334 = sphi 0, %s336
      %s337 = sphi 0, %s334
      %s338 = sphi 0, %s337
      %s354 = sphi 0, %s338
    $region4: #{decoder2_forward.1} parent=1 // loop_header_branch
      %28 = sbr.rel (%p26) target = $region8
    $region5: #{decoder2_forward.1} parent=1 // loop_body
      %s30 = ssub.s32 %s25, 1
      %s31 = ssub.s32 %s25, 2
      %s32 = sadd.s32 %s25, 1
      %s33 = ssub.s32 %s25, %s32
      %p34 = scmp.eq.s32.totalorder %s33, 0
      %s36 = sadd.s32 %s35, 1
      %s37 = scalar_select %p34, %s35, %s36
      %p40 = pneg %p34
      %p41 = scmp.eq.s32.totalorder %s25, 1
      %p42 = por %p40, %p41
      %p43 = scmp.ne.s32.totalorder %s35, %s38
      %p44 = scmp.eq.s32.totalorder %s25, 0
      %p45 = por %p43, %p44
      %p46 = scmp.ne.s32.totalorder %s35, %s38
      %p47 = scmp.eq.s32.totalorder %s30, 1
      %p48 = por %p46, %p47
      %p49 = scmp.ne.s32.totalorder %s38, %s39
      %p50 = scmp.eq.s32.totalorder %s30, 0
      %p51 = por %p49, %p50
      %p52 = scmp.ne.s32.totalorder %s38, %s39
      %p53 = scmp.eq.s32.totalorder %s31, 1
      %p54 = por %p52, %p53
      %p56 = scmp.ne.s32.totalorder %s39, %s55
      %p57 = scmp.eq.s32.totalorder %s31, 0
      %p58 = por %p56, %p57
      %s60 = sadd.s32 %s59, 1
      %p63 = scmp.eq.s32.totalorder %s25, 1
      %p64 = scmp.ne.s32.totalorder %s59, %s61
      %p65 = scmp.eq.s32.totalorder %s25, 0
      %p66 = por %p64, %p65
      %p67 = scmp.ne.s32.totalorder %s59, %s61
      %p68 = scmp.eq.s32.totalorder %s30, 1
      %p69 = por %p67, %p68
      %p70 = scmp.ne.s32.totalorder %s61, %s62
      %p71 = scmp.eq.s32.totalorder %s30, 0
      %p72 = por %p70, %p71
      %p73 = scmp.ne.s32.totalorder %s61, %s62
      %p74 = scmp.eq.s32.totalorder %s31, 1
      %p75 = por %p73, %p74
      %p77 = scmp.ne.s32.totalorder %s62, %s76
      %p78 = scmp.eq.s32.totalorder %s31, 0
      %p79 = por %p77, %p78
      %s81 = sadd.s32 %s80, 1
      %p84 = scmp.eq.s32.totalorder %s25, 1
      %p85 = scmp.ne.s32.totalorder %s80, %s82
      %p86 = scmp.eq.s32.totalorder %s25, 0
      %p87 = por %p85, %p86
      %p88 = scmp.ne.s32.totalorder %s80, %s82
      %p89 = scmp.eq.s32.totalorder %s30, 1
      %p90 = por %p88, %p89
      %p91 = scmp.ne.s32.totalorder %s82, %s83
      %p92 = scmp.eq.s32.totalorder %s30, 0
      %p93 = por %p91, %p92
      %p94 = scmp.ne.s32.totalorder %s82, %s83
      %p95 = scmp.eq.s32.totalorder %s31, 1
      %p96 = por %p94, %p95
      %p98 = scmp.ne.s32.totalorder %s83, %s97
      %p99 = scmp.eq.s32.totalorder %s31, 0
      %p100 = por %p98, %p99
      %s102 = sadd.s32 %s101, 1
      %p105 = scmp.eq.s32.totalorder %s25, 1
      %p106 = scmp.ne.s32.totalorder %s101, %s103
      %p107 = scmp.eq.s32.totalorder %s25, 0
      %p108 = por %p106, %p107
      %p109 = scmp.ne.s32.totalorder %s101, %s103
      %p110 = scmp.eq.s32.totalorder %s30, 1
      %p111 = por %p109, %p110
      %p112 = scmp.ne.s32.totalorder %s103, %s104
      %p113 = scmp.eq.s32.totalorder %s30, 0
      %p114 = por %p112, %p113
      %p115 = scmp.ne.s32.totalorder %s103, %s104
      %p116 = scmp.eq.s32.totalorder %s31, 1
      %p117 = por %p115, %p116
      %p119 = scmp.ne.s32.totalorder %s104, %s118
      %p120 = scmp.eq.s32.totalorder %s31, 0
      %p121 = por %p119, %p120
      %s123 = sadd.s32 %s122, 1
      %p126 = scmp.eq.s32.totalorder %s25, 1
      %p127 = scmp.ne.s32.totalorder %s122, %s124
      %p128 = scmp.eq.s32.totalorder %s25, 0
      %p129 = por %p127, %p128
      %p130 = scmp.ne.s32.totalorder %s122, %s124
      %p131 = scmp.eq.s32.totalorder %s30, 1
      %p132 = por %p130, %p131
      %p133 = scmp.ne.s32.totalorder %s124, %s125
      %p134 = scmp.eq.s32.totalorder %s30, 0
      %p135 = por %p133, %p134
      %p136 = scmp.ne.s32.totalorder %s124, %s125
      %p137 = scmp.eq.s32.totalorder %s31, 1
      %p138 = por %p136, %p137
      %p140 = scmp.ne.s32.totalorder %s125, %s139
      %p141 = scmp.eq.s32.totalorder %s31, 0
      %p142 = por %p140, %p141
      %s144 = sadd.s32 %s143, 1
      %p147 = scmp.eq.s32.totalorder %s25, 1
      %p148 = scmp.ne.s32.totalorder %s143, %s145
      %p149 = scmp.eq.s32.totalorder %s25, 0
      %p150 = por %p148, %p149
      %p151 = scmp.ne.s32.totalorder %s143, %s145
      %p152 = scmp.eq.s32.totalorder %s30, 1
      %p153 = por %p151, %p152
      %p154 = scmp.ne.s32.totalorder %s145, %s146
      %p155 = scmp.eq.s32.totalorder %s30, 0
      %p156 = por %p154, %p155
      %p157 = scmp.ne.s32.totalorder %s145, %s146
      %p158 = scmp.eq.s32.totalorder %s31, 1
      %p159 = por %p157, %p158
      %p161 = scmp.ne.s32.totalorder %s146, %s160
      %p162 = scmp.eq.s32.totalorder %s31, 0
      %p163 = por %p161, %p162
      %s165 = sadd.s32 %s164, 1
      %p168 = scmp.eq.s32.totalorder %s25, 1
      %p169 = scmp.ne.s32.totalorder %s164, %s166
      %p170 = scmp.eq.s32.totalorder %s25, 0
      %p171 = por %p169, %p170
      %p172 = scmp.ne.s32.totalorder %s164, %s166
      %p173 = scmp.eq.s32.totalorder %s30, 1
      %p174 = por %p172, %p173
      %p175 = scmp.ne.s32.totalorder %s166, %s167
      %p176 = scmp.eq.s32.totalorder %s30, 0
      %p177 = por %p175, %p176
      %p178 = scmp.ne.s32.totalorder %s166, %s167
      %p179 = scmp.eq.s32.totalorder %s31, 1
      %p180 = por %p178, %p179
      %p182 = scmp.ne.s32.totalorder %s167, %s181
      %p183 = scmp.eq.s32.totalorder %s31, 0
      %p184 = por %p182, %p183
      %s186 = sadd.s32 %s185, 1
      %p189 = scmp.eq.s32.totalorder %s25, 1
      %p190 = scmp.ne.s32.totalorder %s185, %s187
      %p191 = scmp.eq.s32.totalorder %s25, 0
      %p192 = por %p190, %p191
      %p193 = scmp.ne.s32.totalorder %s185, %s187
      %p194 = scmp.eq.s32.totalorder %s30, 1
      %p195 = por %p193, %p194
      %p196 = scmp.ne.s32.totalorder %s187, %s188
      %p197 = scmp.eq.s32.totalorder %s30, 0
      %p198 = por %p196, %p197
      %p199 = scmp.ne.s32.totalorder %s187, %s188
      %p200 = scmp.eq.s32.totalorder %s31, 1
      %p201 = por %p199, %p200
      %p203 = scmp.ne.s32.totalorder %s188, %s202
      %p204 = scmp.eq.s32.totalorder %s31, 0
      %p205 = por %p203, %p204
      %s207 = sadd.s32 %s206, 1
      %p210 = scmp.eq.s32.totalorder %s25, 1
      %p211 = scmp.ne.s32.totalorder %s206, %s208
      %p212 = scmp.eq.s32.totalorder %s25, 0
      %p213 = por %p211, %p212
      %p214 = scmp.ne.s32.totalorder %s206, %s208
      %p215 = scmp.eq.s32.totalorder %s30, 1
      %p216 = por %p214, %p215
      %p217 = scmp.ne.s32.totalorder %s208, %s209
      %p218 = scmp.eq.s32.totalorder %s30, 0
      %p219 = por %p217, %p218
      %p220 = scmp.ne.s32.totalorder %s208, %s209
      %p221 = scmp.eq.s32.totalorder %s31, 1
      %p222 = por %p220, %p221
      %p224 = scmp.ne.s32.totalorder %s209, %s223
      %p225 = scmp.eq.s32.totalorder %s31, 0
      %p226 = por %p224, %p225
      %s228 = sadd.s32 %s227, 1
      %p231 = scmp.eq.s32.totalorder %s25, 1
      %p232 = scmp.ne.s32.totalorder %s227, %s229
      %p233 = scmp.eq.s32.totalorder %s25, 0
      %p234 = por %p232, %p233
      %p235 = scmp.ne.s32.totalorder %s227, %s229
      %p236 = scmp.eq.s32.totalorder %s30, 1
      %p237 = por %p235, %p236
      %p238 = scmp.ne.s32.totalorder %s229, %s230
      %p239 = scmp.eq.s32.totalorder %s30, 0
      %p240 = por %p238, %p239
      %p241 = scmp.ne.s32.totalorder %s229, %s230
      %p242 = scmp.eq.s32.totalorder %s31, 1
      %p243 = por %p241, %p242
      %p245 = scmp.ne.s32.totalorder %s230, %s244
      %p246 = scmp.eq.s32.totalorder %s31, 0
      %p247 = por %p245, %p246
      %s249 = sadd.s32 %s248, 1
      %p252 = scmp.eq.s32.totalorder %s25, 1
      %p253 = scmp.ne.s32.totalorder %s248, %s250
      %p254 = scmp.eq.s32.totalorder %s25, 0
      %p255 = por %p253, %p254
      %p256 = scmp.ne.s32.totalorder %s248, %s250
      %p257 = scmp.eq.s32.totalorder %s30, 1
      %p258 = por %p256, %p257
      %p259 = scmp.ne.s32.totalorder %s250, %s251
      %p260 = scmp.eq.s32.totalorder %s30, 0
      %p261 = por %p259, %p260
      %p262 = scmp.ne.s32.totalorder %s250, %s251
      %p263 = scmp.eq.s32.totalorder %s31, 1
      %p264 = por %p262, %p263
      %p266 = scmp.ne.s32.totalorder %s251, %s265
      %p267 = scmp.eq.s32.totalorder %s31, 0
      %p268 = por %p266, %p267
      %s270 = sadd.s32 %s269, 1
      %p273 = scmp.eq.s32.totalorder %s25, 1
      %p274 = scmp.ne.s32.totalorder %s269, %s271
      %p275 = scmp.eq.s32.totalorder %s25, 0
      %p276 = por %p274, %p275
      %p277 = scmp.ne.s32.totalorder %s269, %s271
      %p278 = scmp.eq.s32.totalorder %s30, 1
      %p279 = por %p277, %p278
      %p280 = scmp.ne.s32.totalorder %s271, %s272
      %p281 = scmp.eq.s32.totalorder %s30, 0
      %p282 = por %p280, %p281
      %p283 = scmp.ne.s32.totalorder %s271, %s272
      %p284 = scmp.eq.s32.totalorder %s31, 1
      %p285 = por %p283, %p284
      %p287 = scmp.ne.s32.totalorder %s272, %s286
      %p288 = scmp.eq.s32.totalorder %s31, 0
      %p289 = por %p287, %p288
      %s291 = sadd.s32 %s290, 1
      %p294 = scmp.eq.s32.totalorder %s25, 1
      %p295 = scmp.ne.s32.totalorder %s290, %s292
      %p296 = scmp.eq.s32.totalorder %s25, 0
      %p297 = por %p295, %p296
      %p298 = scmp.ne.s32.totalorder %s290, %s292
      %p299 = scmp.eq.s32.totalorder %s30, 1
      %p300 = por %p298, %p299
      %p301 = scmp.ne.s32.totalorder %s292, %s293
      %p302 = scmp.eq.s32.totalorder %s30, 0
      %p303 = por %p301, %p302
      %p304 = scmp.ne.s32.totalorder %s292, %s293
      %p305 = scmp.eq.s32.totalorder %s31, 1
      %p306 = por %p304, %p305
      %p308 = scmp.ne.s32.totalorder %s293, %s307
      %p309 = scmp.eq.s32.totalorder %s31, 0
      %p310 = por %p308, %p309
      %s312 = sadd.s32 %s311, 1
      %p315 = scmp.eq.s32.totalorder %s25, 1
      %p316 = scmp.ne.s32.totalorder %s311, %s313
      %p317 = scmp.eq.s32.totalorder %s25, 0
      %p318 = por %p316, %p317
      %p319 = scmp.ne.s32.totalorder %s311, %s313
      %p320 = scmp.eq.s32.totalorder %s30, 1
      %p321 = por %p319, %p320
      %p322 = scmp.ne.s32.totalorder %s313, %s314
      %p323 = scmp.eq.s32.totalorder %s30, 0
      %p324 = por %p322, %p323
      %p325 = scmp.ne.s32.totalorder %s313, %s314
      %p326 = scmp.eq.s32.totalorder %s31, 1
      %p327 = por %p325, %p326
      %p329 = scmp.ne.s32.totalorder %s314, %s328
      %p330 = scmp.eq.s32.totalorder %s31, 0
      %p331 = por %p329, %p330
      %s332 = ssub.s32 %s25, %s32
      %p333 = scmp.eq.s32.totalorder %s332, 0
      %s335 = sadd.s32 %s334, 1
      %s336 = scalar_select %p333, %s334, %s335
      %p339 = pneg %p333
      %p340 = scmp.eq.s32.totalorder %s25, 1
      %p341 = por %p339, %p340
      %p342 = scmp.ne.s32.totalorder %s334, %s337
      %p343 = scmp.eq.s32.totalorder %s25, 0
      %p344 = por %p342, %p343
      %p345 = scmp.ne.s32.totalorder %s334, %s337
      %p346 = scmp.eq.s32.totalorder %s30, 1
      %p347 = por %p345, %p346
      %p348 = scmp.ne.s32.totalorder %s337, %s338
      %p349 = scmp.eq.s32.totalorder %s30, 0
      %p350 = por %p348, %p349
      %p351 = scmp.ne.s32.totalorder %s337, %s338
      %p352 = scmp.eq.s32.totalorder %s31, 1
      %p353 = por %p351, %p352
      %p355 = scmp.ne.s32.totalorder %s338, %s354
      %p356 = scmp.eq.s32.totalorder %s31, 0
      %p357 = por %p355, %p356
      %p358 = scmp.le.s32.totalorder 1, %s25
      %p359 = scmp.lt.s32.totalorder %s25, 3
      %p360 = pnand %p358, %p359
      %p361 = pneg %p360
      // Predicated region
      $region9: #{decoder2_forward.1} parent=5 // pred_check
        _
      $region10: #{decoder2_forward.1} parent=5 // pred_check_branch
        %363 = sbr.rel (%p360) target = $region12
      $region11: #{decoder2_forward.1} parent=5 // pred_region
        %s364 = ssub.s32 %s25, 1
        // Predicated region
        $region13: #{decoder2_forward.1} parent=11 // pred_check
          %p365 = pneg %p72
        $region14: #{decoder2_forward.1} parent=11 // pred_check_branch
          %367 = sbr.rel (%p365) target = $region16
        $region15: #{decoder2_forward.1} parent=11 // pred_region
          _
        $region16: #{decoder2_forward.1} parent=11 // pred_fallthru
          _
        // Predicated region
        $region17: #{decoder2_forward.1} parent=11 // pred_check
          %p368 = pneg %p93
        $region18: #{decoder2_forward.1} parent=11 // pred_check_branch
          %370 = sbr.rel (%p368) target = $region20
        $region19: #{decoder2_forward.1} parent=11 // pred_region
          _
        $region20: #{decoder2_forward.1} parent=11 // pred_fallthru
          _
        // Predicated region
        $region21: #{decoder2_forward.1} parent=11 // pred_check
          %p371 = pneg %p114
        $region22: #{decoder2_forward.1} parent=11 // pred_check_branch
          %373 = sbr.rel (%p371) target = $region24
        $region23: #{decoder2_forward.1} parent=11 // pred_region
          _
        $region24: #{decoder2_forward.1} parent=11 // pred_fallthru
          _
        // Predicated region
        $region25: #{decoder2_forward.1} parent=11 // pred_check
          %p374 = pneg %p135
        $region26: #{decoder2_forward.1} parent=11 // pred_check_branch
          %376 = sbr.rel (%p374) target = $region28
        $region27: #{decoder2_forward.1} parent=11 // pred_region
          _
        $region28: #{decoder2_forward.1} parent=11 // pred_fallthru
          _
        // Predicated region
        $region29: #{decoder2_forward.1} parent=11 // pred_check
          %p377 = pneg %p156
        $region30: #{decoder2_forward.1} parent=11 // pred_check_branch
          %379 = sbr.rel (%p377) target = $region32
        $region31: #{decoder2_forward.1} parent=11 // pred_region
          _
        $region32: #{decoder2_forward.1} parent=11 // pred_fallthru
          _
        // Predicated region
        $region33: #{decoder2_forward.1} parent=11 // pred_check
          %p380 = pneg %p177
        $region34: #{decoder2_forward.1} parent=11 // pred_check_branch
          %382 = sbr.rel (%p380) target = $region36
        $region35: #{decoder2_forward.1} parent=11 // pred_region
          _
        $region36: #{decoder2_forward.1} parent=11 // pred_fallthru
          _
        // Predicated region
        $region37: #{decoder2_forward.1} parent=11 // pred_check
          %p383 = pneg %p198
        $region38: #{decoder2_forward.1} parent=11 // pred_check_branch
          %385 = sbr.rel (%p383) target = $region40
        $region39: #{decoder2_forward.1} parent=11 // pred_region
          _
        $region40: #{decoder2_forward.1} parent=11 // pred_fallthru
          _
        // Predicated region
        $region41: #{decoder2_forward.1} parent=11 // pred_check
          %p386 = pneg %p219
        $region42: #{decoder2_forward.1} parent=11 // pred_check_branch
          %388 = sbr.rel (%p386) target = $region44
        $region43: #{decoder2_forward.1} parent=11 // pred_region
          _
        $region44: #{decoder2_forward.1} parent=11 // pred_fallthru
          _
        // Predicated region
        $region45: #{decoder2_forward.1} parent=11 // pred_check
          %p389 = pneg %p240
        $region46: #{decoder2_forward.1} parent=11 // pred_check_branch
          %391 = sbr.rel (%p389) target = $region48
        $region47: #{decoder2_forward.1} parent=11 // pred_region
          _
        $region48: #{decoder2_forward.1} parent=11 // pred_fallthru
          _
        // Predicated region
        $region49: #{decoder2_forward.1} parent=11 // pred_check
          %p392 = pneg %p261
        $region50: #{decoder2_forward.1} parent=11 // pred_check_branch
          %394 = sbr.rel (%p392) target = $region52
        $region51: #{decoder2_forward.1} parent=11 // pred_region
          _
        $region52: #{decoder2_forward.1} parent=11 // pred_fallthru
          _
        // Predicated region
        $region53: #{decoder2_forward.1} parent=11 // pred_check
          %p395 = pneg %p282
        $region54: #{decoder2_forward.1} parent=11 // pred_check_branch
          %397 = sbr.rel (%p395) target = $region56
        $region55: #{decoder2_forward.1} parent=11 // pred_region
          _
        $region56: #{decoder2_forward.1} parent=11 // pred_fallthru
          _
        // Predicated region
        $region57: #{decoder2_forward.1} parent=11 // pred_check
          %p398 = pneg %p303
        $region58: #{decoder2_forward.1} parent=11 // pred_check_branch
          %400 = sbr.rel (%p398) target = $region60
        $region59: #{decoder2_forward.1} parent=11 // pred_region
          _
        $region60: #{decoder2_forward.1} parent=11 // pred_fallthru
          _
        // Predicated region
        $region61: #{decoder2_forward.1} parent=11 // pred_check
          %p401 = pneg %p324
        $region62: #{decoder2_forward.1} parent=11 // pred_check_branch
          %403 = sbr.rel (%p401) target = $region64
        $region63: #{decoder2_forward.1} parent=11 // pred_region
          _
        $region64: #{decoder2_forward.1} parent=11 // pred_fallthru
          _
      $region12: #{decoder2_forward.1} parent=5 // pred_fallthru
        _
      %p404 = scmp.lt.s32.totalorder %s25, 2
      // Predicated region
      $region65: #{decoder2_forward.1} parent=5 // pred_check
        %p405 = pneg %p404
      $region66: #{decoder2_forward.1} parent=5 // pred_check_branch
        %407 = sbr.rel (%p405) target = $region68
      $region67: #{decoder2_forward.1} parent=5 // pred_region
        // Predicated region
        $region69: #{decoder2_forward.1} parent=67 // pred_check
          %p408 = pneg %p45
        $region70: #{decoder2_forward.1} parent=67 // pred_check_branch
          %410 = sbr.rel (%p408) target = $region72
        $region71: #{decoder2_forward.1} parent=67 // pred_region
          %p411 = scmp.lt.s32.totalorder %s25, 1
          %s412 = scalar_select %p411, %s25, 1
          %s413 = smul.addr %s412, 4
          %s414 = smul.addr %s413, 2
          %s415 = scalar_lea.vmem %s0, %s414
        $region72: #{decoder2_forward.1} parent=67 // pred_fallthru
          _
      $region68: #{decoder2_forward.1} parent=5 // pred_fallthru
        _
      %p416 = scmp.le.s32.totalorder 1, %s25
      %p417 = scmp.lt.s32.totalorder %s25, 3
      %p418 = pnand %p416, %p417
      %p419 = pneg %p418
      // Predicated region
      $region73: #{decoder2_forward.1} parent=5 // pred_check
        _
      $region74: #{decoder2_forward.1} parent=5 // pred_check_branch
        %421 = sbr.rel (%p418) target = $region76
      $region75: #{decoder2_forward.1} parent=5 // pred_region
        %s422 = ssub.s32 %s25, 1
        %p423 = scmp.lt.s32.totalorder %s30, 1
        %s424 = scalar_select %p423, %s30, 1
        %s425 = smul.addr %s424, 4
        %s426 = smul.addr %s425, 2
        %s427 = scalar_lea.vmem %s0, %s426
        %p428 = pneg %p51
        %p429 = pneg %p48
        %p430 = pneg %p72
        %p431 = pneg %p69
        %p432 = pneg %p93
        %p433 = pneg %p90
        %p434 = pneg %p114
        %p435 = pneg %p111
        %p436 = pneg %p135
        %p437 = pneg %p132
        %p438 = pneg %p156
        %p439 = pneg %p153
        %p440 = pneg %p177
        %p441 = pneg %p174
        %p442 = pneg %p198
        %p443 = pneg %p195
        %p444 = pneg %p219
        %p445 = pneg %p216
        %p446 = pneg %p240
        %p447 = pneg %p237
        %p448 = pneg %p261
        %p449 = pneg %p258
        %p450 = pneg %p282
        %p451 = pneg %p279
        %p452 = pneg %p303
        %p453 = pneg %p300
        %p454 = pneg %p324
        %p455 = pneg %p321
        %p456 = pneg %p350
        %p457 = pneg %p347
        %s458 = sand.u32 %s337, 1
        %s459 = scalar_lea.sflag [#allocation5], %s458
        %s460 = sand.u32 %s337, 1
        %s461 = smul.addr %s460, 128
        %s462 = scalar_lea.vmem [#allocation4], %s461
        %p463 = scmp.lt.s32.totalorder %s30, 1
        %s464 = scalar_select %p463, %s30, 1
        %s465 = smul.addr %s464, 4
        %s466 = smul.addr %s465, 2
        %s467 = scalar_lea.vmem %s0, %s466
        %v469 = vld [vmem:[%s467] sm:$0xff]
        %v471 = vcombine.high %v469, %v469
        %v473 = vunpack.c.l.s4 1983009808
        %v474 = vunpack.c.0.s8 %v473
        %v475 = vlaneseq
        %v476 = vshrl.u32 %v475, 7
        %v477 = vsub.s32 %v474, %v476
        %v478 = vrot.slane %v469, %v477
        %v480 = vunpack.c.l.s4 1983009808
        %v481 = vunpack.c.0.s8 %v480
        %v482 = vlaneseq
        %v483 = vshrl.u32 %v482, 7
        %v484 = vsub.s32 %v481, %v483
        %v485 = vrot.slane %v471, %v484
        %v486 = vcombine.high %v478, %v478
        %v487 = vcombine.low %v469, %v469
        %v489 = vunpack.c.l.s4 1983009808
        %v490 = vunpack.c.0.s8 %v489
        %v491 = vlaneseq
        %v492 = vshrl.u32 %v491, 7
        %v493 = vsub.s32 %v490, %v492
        %v494 = vrot.slane %v487, %v493
        %v495 = vcombine.high %v494, %v494
        %496 = vrot.lane.b32.xlu0 %v494, 127
        %v497 = vpop.permute.xlu0 %496
        %498 = vrot.lane.b32.xlu0 %v495, 127
        %v499 = vpop.permute.xlu0 %498
        %500 = vrot.lane.b32.xlu0 %v478, 127
        %v501 = vpop.permute.xlu0 %500
        %502 = vrot.lane.b32.xlu0 %v486, 127
        %v503 = vpop.permute.xlu0 %502
        %vm504 = vcmask 1039360
        %v505 = vsel %vm504, %v497, %v499
        %v506 = vsel %vm504, %v499, %v501
        %v507 = vsel %vm504, %v501, %v503
        %v508 = vcombine.low %v478, %v478
        %v509 = vcombine.low %v485, %v485
        %510 = vrot.lane.b32.xlu0 %v508, 126
        %v511 = vpop.permute.xlu0 %510
        %512 = vrot.lane.b32.xlu0 %v478, 126
        %v513 = vpop.permute.xlu0 %512
        %514 = vrot.lane.b32.xlu0 %v509, 126
        %v515 = vpop.permute.xlu0 %514
        %516 = vrot.lane.b32.xlu0 %v485, 126
        %v517 = vpop.permute.xlu0 %516
        %vm518 = vcmask 1031168
        %v519 = vsel %vm518, %v511, %v513
        %v520 = vsel %vm518, %v513, %v515
        %v521 = vsel %vm518, %v515, %v517
        %v522 = vcombine.low %v494, %v494
        %523 = vrot.lane.b32.xlu0 %v522, 110
        %v524 = vpop.permute.xlu0 %523
        %525 = vrot.lane.b32.xlu0 %v494, 110
        %v526 = vpop.permute.xlu0 %525
        %527 = vrot.lane.b32.xlu0 %v508, 110
        %v528 = vpop.permute.xlu0 %527
        %529 = vrot.lane.b32.xlu0 %v478, 110
        %v530 = vpop.permute.xlu0 %529
        %vm531 = vcmask 900096
        %v532 = vsel %vm531, %v524, %v526
        %v533 = vsel %vm531, %v526, %v528
        %v534 = vsel %vm531, %v528, %v530
        %v535 = vcombine.high %v485, %v485
        %536 = vrot.lane.b32.xlu0 %v478, 109
        %v537 = vpop.permute.xlu0 %536
        %538 = vrot.lane.b32.xlu0 %v486, 109
        %v539 = vpop.permute.xlu0 %538
        %540 = vrot.lane.b32.xlu0 %v485, 109
        %v541 = vpop.permute.xlu0 %540
        %542 = vrot.lane.b32.xlu0 %v535, 109
        %v543 = vpop.permute.xlu0 %542
        %vm544 = vcmask 891904
        %v545 = vsel %vm544, %v537, %v539
        %v546 = vsel %vm544, %v539, %v541
        %v547 = vsel %vm544, %v541, %v543
        %548 = vrot.lane.b32.xlu0 %v494, 108
        %v549 = vpop.permute.xlu0 %548
        %550 = vrot.lane.b32.xlu0 %v495, 108
        %v551 = vpop.permute.xlu0 %550
        %552 = vrot.lane.b32.xlu0 %v478, 108
        %v553 = vpop.permute.xlu0 %552
        %554 = vrot.lane.b32.xlu0 %v486, 108
        %v555 = vpop.permute.xlu0 %554
        %vm556 = vcmask 883712
        %v557 = vsel %vm556, %v549, %v551
        %v558 = vsel %vm556, %v551, %v553
        %v559 = vsel %vm556, %v553, %v555
        %560 = vrot.lane.b32.xlu0 %v508, 92
        %v561 = vpop.permute.xlu0 %560
        %562 = vrot.lane.b32.xlu0 %v478, 92
        %v563 = vpop.permute.xlu0 %562
        %564 = vrot.lane.b32.xlu0 %v509, 92
        %v565 = vpop.permute.xlu0 %564
        %566 = vrot.lane.b32.xlu0 %v485, 92
        %v567 = vpop.permute.xlu0 %566
        %vm568 = vcmask 752640
        %v569 = vsel %vm568, %v561, %v563
        %v570 = vsel %vm568, %v563, %v565
        %v571 = vsel %vm568, %v565, %v567
        %572 = vrot.lane.b32.xlu0 %v522, 91
        %v573 = vpop.permute.xlu0 %572
        %574 = vrot.lane.b32.xlu0 %v494, 91
        %v575 = vpop.permute.xlu0 %574
        %576 = vrot.lane.b32.xlu0 %v508, 91
        %v577 = vpop.permute.xlu0 %576
        %578 = vrot.lane.b32.xlu0 %v478, 91
        %v579 = vpop.permute.xlu0 %578
        %vm580 = vcmask 744448
        %v581 = vsel %vm580, %v573, %v575
        %v582 = vsel %vm580, %v575, %v577
        %v583 = vsel %vm580, %v577, %v579
        %584 = vrot.lane.b32.xlu0 %v478, 90
        %v585 = vpop.permute.xlu0 %584
        %586 = vrot.lane.b32.xlu0 %v486, 90
        %v587 = vpop.permute.xlu0 %586
        %588 = vrot.lane.b32.xlu0 %v485, 90
        %v589 = vpop.permute.xlu0 %588
        %590 = vrot.lane.b32.xlu0 %v535, 90
        %v591 = vpop.permute.xlu0 %590
        %vm592 = vcmask 736256
        %v593 = vsel %vm592, %v585, %v587
        %v594 = vsel %vm592, %v587, %v589
        %v595 = vsel %vm592, %v589, %v591
        %vm596 = vcmask 1041408
        %v599 = vsel %vm596, %v478, %v505
        %v602 = vsel %vm596, %v486, %v506
        %v605 = vsel %vm596, %v485, %v507
        %vm606 = vcmask 1043456
        %v608 = vsel %vm606, %v599, %v519
        %v610 = vsel %vm606, %v602, %v520
        %v612 = vsel %vm606, %v605, %v521
        %vm613 = vcmask 1045504
        %v615 = vsel %vm613, %v608, %v532
        %v618 = vsel %vm613, %v610, %v533
        %v621 = vsel %vm613, %v612, %v534
        %v625 = vsel %vm596, %v545, %v557
        %v628 = vsel %vm596, %v546, %v558
        %v631 = vsel %vm596, %v547, %v559
        %v633 = vsel %vm606, %v625, %v569
        %v635 = vsel %vm606, %v628, %v570
        %v637 = vsel %vm606, %v631, %v571
        %v639 = vsel %vm613, %v633, %v581
        %v642 = vsel %vm613, %v635, %v582
        %v645 = vsel %vm613, %v637, %v583
        %v647 = vld [vmem:[%s1] sm:$0xf]
        %v648 = vld [vmem:[%s2] sm:$0xff]
        %650 = vset.pattern.permute.xlu0 0
        %651 = vperm.xlu0 %650, %v648
        %v652 = vpop.permute.xlu0 %651
        %vm654 = vcmask 293888
        %v656 = vsel %vm654, %v647, 0
        %v659 = vsel %vm596, %v593, 0
        %v662 = vsel %vm596, %v594, 0
        %v665 = vsel %vm596, %v595, 0
        %667 = vmatprep.subr.bf16.mxu0 0
        %668 = vmatpush1.bf16.msra.mxu0 0
        %669 = vmatprep.subr.bf16.mxu0 0
        %670 = vmatpush1.bf16.msra.mxu0 0
        %671 = vmatprep.subr.bf16.mxu0 0
        %672 = vmatpush1.bf16.msra.mxu0 0
        %673 = vmatprep.subr.bf16.mxu0 0
        %674 = vmatpush1.bf16.msra.mxu0 0
        %675 = vmatprep.subr.bf16.mxu0 0
        %676 = vmatpush1.bf16.msra.mxu0 0
        %677 = vmatprep.subr.bf16.mxu0 %v662
        %678 = vmatpush1.bf16.msra.mxu0 %v659
        %679 = vmatprep.subr.bf16.mxu0 %v642
        %680 = vmatpush1.bf16.msra.mxu0 %v639
        %681 = vmatprep.subr.bf16.mxu0 %v618
        %682 = vmatpush1.bf16.msra.mxu0 %v615
        %683 = vmatprep.subr.bf16.mxu0 0
        %684 = vmatpush2.bf16.msra.mxu0 0
        %685 = vmatprep.subr.bf16.mxu0 0
        %686 = vmatpush2.bf16.msra.mxu0 0
        %687 = vmatprep.subr.bf16.mxu0 0
        %688 = vmatpush2.bf16.msra.mxu0 0
        %689 = vmatprep.subr.bf16.mxu0 0
        %690 = vmatpush2.bf16.msra.mxu0 0
        %691 = vmatprep.subr.bf16.mxu0 0
        %692 = vmatpush2.bf16.msra.mxu0 0
        %693 = vmatprep.subr.bf16.mxu0 0
        %694 = vmatpush2.bf16.msra.mxu0 0
        %695 = vmatprep.subr.bf16.mxu0 0
        %696 = vmatpush2.bf16.msra.mxu0 0
        %697 = vmatprep.subr.bf16.mxu0 0
        %698 = vmatpush2.bf16.msra.mxu0 0
        %699 = vmatprep.mubr.bf16.mxu0 0
        %700 = vmatmul.mubr.bf16.gmra.mxu0 %v656
        %v701 = vpop.f32.mrf.mxu0
        %v702 = vadd.f32 %v652, %v701
        %v703 = vpop.f32.mrf.mxu0
        %v704 = vadd.f32 %v652, %v703
        %v705 = vpop.f32.mrf.mxu0
        %v706 = vpop.f32.mrf.mxu0
        %707 = vdwg.mxu0
        %708 = vmatprep.subr.bf16.mxu0 0
        %709 = vmatpush1.bf16.msra.mxu0 0
        %710 = vmatprep.subr.bf16.mxu0 0
        %711 = vmatpush1.bf16.msra.mxu0 0
        %712 = vmatprep.subr.bf16.mxu0 0
        %713 = vmatpush1.bf16.msra.mxu0 0
        %714 = vmatprep.subr.bf16.mxu0 0
        %715 = vmatpush1.bf16.msra.mxu0 0
        %716 = vmatprep.subr.bf16.mxu0 0
        %717 = vmatpush1.bf16.msra.mxu0 0
        %718 = vmatprep.subr.bf16.mxu0 0
        %719 = vmatpush1.bf16.msra.mxu0 %v665
        %720 = vmatprep.subr.bf16.mxu0 0
        %721 = vmatpush1.bf16.msra.mxu0 %v645
        %722 = vmatprep.subr.bf16.mxu0 0
        %723 = vmatpush1.bf16.msra.mxu0 %v621
        %724 = vmatprep.subr.bf16.mxu0 0
        %725 = vmatpush2.bf16.msra.mxu0 0
        %726 = vmatprep.subr.bf16.mxu0 0
        %727 = vmatpush2.bf16.msra.mxu0 0
        %728 = vmatprep.subr.bf16.mxu0 0
        %729 = vmatpush2.bf16.msra.mxu0 0
        %730 = vmatprep.subr.bf16.mxu0 0
        %731 = vmatpush2.bf16.msra.mxu0 0
        %732 = vmatprep.subr.bf16.mxu0 0
        %733 = vmatpush2.bf16.msra.mxu0 0
        %734 = vmatprep.subr.bf16.mxu0 0
        %735 = vmatpush2.bf16.msra.mxu0 0
        %736 = vmatprep.subr.bf16.mxu0 0
        %737 = vmatpush2.bf16.msra.mxu0 0
        %738 = vmatprep.subr.bf16.mxu0 0
        %739 = vmatpush2.bf16.msra.mxu0 0
        %740 = vmatprep.mubr.bf16.mxu0 0
        %741 = vmatmul.mubr.bf16.gmra.mxu0 %v656
        %v742 = vpop.f32.mrf.mxu0
        %v743 = vadd.f32 %v652, %v742
        %v744 = vpop.f32.mrf.mxu0
        %v745 = vpop.f32.mrf.mxu0
        %v746 = vpop.f32.mrf.mxu0
        %747 = vdwg.mxu0
        %v748 = vmax.f32 %v702, 0.0
        %v749 = vmax.f32 %v704, 0.0
        %v750 = vmax.f32 %v743, 0.0
        %v751 = vld [vmem:[%s5] sm:$0x7]
        %v753 = vlaneseq
        %v754 = vshrl.u32 %v753, 7
        %v755 = vsub.s32 0, %v754
        %v756 = vrot.slane %v751, %v755
        %v757 = vlaneseq
        %v758 = vshrl.u32 %v757, 7
        %v759 = vsub.s32 1, %v758
        %v760 = vrot.slane %v751, %v759
        %v761 = vlaneseq
        %v762 = vshrl.u32 %v761, 7
        %v763 = vsub.s32 2, %v762
        %v764 = vrot.slane %v751, %v763
        %v768 = vmul.f32 %v748, %v756
        %v769 = vmul.f32 %v749, %v760
        %v770 = vmul.f32 %v750, %v764
        %vm771 = vcmask 150528
        %772 = vst.msk [vmem:[#allocation2] sm:$0xf] %vm771, 0
        %vm773 = vcmask 1043608
        %774 = vst.msk [vmem:[#allocation2 + $0xc] sm:$0xf] %vm773, 0
        %v775 = vpack.c.bf16 %v768, %v768
        %v776 = vpack.c.bf16 %v769, %v769
        %v777 = vpack.c.bf16 %v770, %v770
        %v781 = vunpack.c.l.b16 %v775
        %v782 = vunpack.c.l.b16 %v776
        %v783 = vunpack.c.l.b16 %v777
        %v784 = vpack.c.b16 %v782, %v781
        %v785 = vpack.c.b16 %v783, %v783
        %786 = vrot.lane.b32.xlu0 %v784, 19
        %v787 = vpop.permute.xlu0 %786
        %788 = vrot.lane.b32.xlu0 %v785, 19
        %v789 = vpop.permute.xlu0 %788
        %v790 = vrot.slane %v787, 4
        %v791 = vrot.slane %v789, 4
        %vm792 = vcmask 154624
        %v793 = vsel %vm792, %v790, %v787
        %vm794 = vcmask 1043456
        %v795 = vsel %vm794, %v790, %v791
        %v796 = vsel %vm792, %v795, %v789
        %vm799 = vcmask 1047556
        %vm800 = vmor %vm799, %vm773
        %801 = vst.msk [vmem:[#allocation2] sm:$0xff] %vm800, %v793
        %vm802 = vcmask 154628
        %vm803 = vmor %vm802, %vm606
        %804 = vst.msk [vmem:[#allocation2 + $0x8] sm:$0xff] %vm803, %v796
        %v805 = vld [vmem:[#allocation2] sm:$0xff]
        %v806 = vld [vmem:[#allocation2 + $0x8] sm:$0xf]
        %v807 = vld [vmem:[#allocation2] sm:$0xff]
        %v808 = vld [vmem:[#allocation2 + $0x8] sm:$0xff]
        %v811 = vunpack.c.l.b16 %v805
        %v812 = vunpack.c.h.b16 %v805
        %v813 = vunpack.c.l.b16 %v806
        %v814 = vpack.c.b16 %v811, %v811
        %v815 = vpack.c.b16 %v812, %v812
        %v816 = vpack.c.b16 %v813, %v813
        %v819 = vunpack.c.l.b16 %v807
        %v820 = vunpack.c.h.b16 %v807
        %v821 = vunpack.c.l.b16 %v808
        %v822 = vunpack.c.h.b16 %v808
        %v823 = vpack.c.b16 %v819, %v819
        %v824 = vpack.c.b16 %v820, %v820
        %v825 = vpack.c.b16 %v821, %v821
        %v826 = vpack.c.b16 %v822, %v822
        %827 = vrot.lane.b32.xlu0 %v823, 127
        %v828 = vpop.permute.xlu0 %827
        %829 = vrot.lane.b32.xlu0 %v824, 127
        %v830 = vpop.permute.xlu0 %829
        %831 = vrot.lane.b32.xlu0 %v825, 127
        %v832 = vpop.permute.xlu0 %831
        %833 = vrot.lane.b32.xlu0 %v826, 127
        %v834 = vpop.permute.xlu0 %833
        %v835 = vsel %vm504, %v828, %v830
        %v836 = vsel %vm504, %v830, %v832
        %v837 = vsel %vm504, %v832, %v834
        %838 = vrot.lane.b32.xlu0 %v823, 126
        %v839 = vpop.permute.xlu0 %838
        %840 = vrot.lane.b32.xlu0 %v824, 126
        %v841 = vpop.permute.xlu0 %840
        %842 = vrot.lane.b32.xlu0 %v825, 126
        %v843 = vpop.permute.xlu0 %842
        %844 = vrot.lane.b32.xlu0 %v826, 126
        %v845 = vpop.permute.xlu0 %844
        %v846 = vsel %vm518, %v839, %v841
        %v847 = vsel %vm518, %v841, %v843
        %v848 = vsel %vm518, %v843, %v845
        %849 = vrot.lane.b32.xlu0 %v823, 110
        %v850 = vpop.permute.xlu0 %849
        %851 = vrot.lane.b32.xlu0 %v824, 110
        %v852 = vpop.permute.xlu0 %851
        %853 = vrot.lane.b32.xlu0 %v825, 110
        %v854 = vpop.permute.xlu0 %853
        %855 = vrot.lane.b32.xlu0 %v826, 110
        %v856 = vpop.permute.xlu0 %855
        %v857 = vsel %vm531, %v850, %v852
        %v858 = vsel %vm531, %v852, %v854
        %v859 = vsel %vm531, %v854, %v856
        %860 = vrot.lane.b32.xlu0 %v823, 109
        %v861 = vpop.permute.xlu0 %860
        %862 = vrot.lane.b32.xlu0 %v824, 109
        %v863 = vpop.permute.xlu0 %862
        %864 = vrot.lane.b32.xlu0 %v825, 109
        %v865 = vpop.permute.xlu0 %864
        %866 = vrot.lane.b32.xlu0 %v826, 109
        %v867 = vpop.permute.xlu0 %866
        %v868 = vsel %vm544, %v861, %v863
        %v869 = vsel %vm544, %v863, %v865
        %v870 = vsel %vm544, %v865, %v867
        %871 = vrot.lane.b32.xlu0 %v823, 108
        %v872 = vpop.permute.xlu0 %871
        %873 = vrot.lane.b32.xlu0 %v824, 108
        %v874 = vpop.permute.xlu0 %873
        %875 = vrot.lane.b32.xlu0 %v825, 108
        %v876 = vpop.permute.xlu0 %875
        %877 = vrot.lane.b32.xlu0 %v826, 108
        %v878 = vpop.permute.xlu0 %877
        %v879 = vsel %vm556, %v872, %v874
        %v880 = vsel %vm556, %v874, %v876
        %v881 = vsel %vm556, %v876, %v878
        %882 = vrot.lane.b32.xlu0 %v823, 92
        %v883 = vpop.permute.xlu0 %882
        %884 = vrot.lane.b32.xlu0 %v824, 92
        %v885 = vpop.permute.xlu0 %884
        %886 = vrot.lane.b32.xlu0 %v825, 92
        %v887 = vpop.permute.xlu0 %886
        %888 = vrot.lane.b32.xlu0 %v826, 92
        %v889 = vpop.permute.xlu0 %888
        %v890 = vsel %vm568, %v883, %v885
        %v891 = vsel %vm568, %v885, %v887
        %v892 = vsel %vm568, %v887, %v889
        %893 = vrot.lane.b32.xlu0 %v823, 91
        %v894 = vpop.permute.xlu0 %893
        %895 = vrot.lane.b32.xlu0 %v824, 91
        %v896 = vpop.permute.xlu0 %895
        %897 = vrot.lane.b32.xlu0 %v825, 91
        %v898 = vpop.permute.xlu0 %897
        %899 = vrot.lane.b32.xlu0 %v826, 91
        %v900 = vpop.permute.xlu0 %899
        %v901 = vsel %vm580, %v894, %v896
        %v902 = vsel %vm580, %v896, %v898
        %v903 = vsel %vm580, %v898, %v900
        %904 = vrot.lane.b32.xlu0 %v823, 90
        %v905 = vpop.permute.xlu0 %904
        %906 = vrot.lane.b32.xlu0 %v824, 90
        %v907 = vpop.permute.xlu0 %906
        %908 = vrot.lane.b32.xlu0 %v825, 90
        %v909 = vpop.permute.xlu0 %908
        %910 = vrot.lane.b32.xlu0 %v826, 90
        %v911 = vpop.permute.xlu0 %910
        %v912 = vsel %vm592, %v905, %v907
        %v913 = vsel %vm592, %v907, %v909
        %v914 = vsel %vm592, %v909, %v911
        %v917 = vsel %vm606, %v814, %v835
        %v921 = vsel %vm606, %v815, %v836
        %v925 = vsel %vm606, %v816, %v837
        %v929 = vsel %vm606, %v846, %v857
        %v933 = vsel %vm606, %v847, %v858
        %v937 = vsel %vm606, %v848, %v859
        %v941 = vsel %vm606, %v868, %v879
        %v945 = vsel %vm606, %v869, %v880
        %v949 = vsel %vm606, %v870, %v881
        %v953 = vsel %vm606, %v890, %v901
        %v957 = vsel %vm606, %v891, %v902
        %v961 = vsel %vm606, %v892, %v903
        %v963 = vld [vmem:[%s3] sm:$0xf]
        %v964 = vld [vmem:[%s4] sm:$0xff]
        %966 = vset.pattern.permute.xlu0 0
        %967 = vperm.xlu0 %966, %v964
        %v968 = vpop.permute.xlu0 %967
        %vm970 = vcmask 588800
        %v972 = vsel %vm970, %v963, 0
        %v975 = vsel %vm606, %v912, 0
        %v978 = vsel %vm606, %v913, 0
        %v981 = vsel %vm606, %v914, 0
        %983 = vmatprep.subr.bf16.mxu0 0
        %984 = vmatpush1.bf16.msra.mxu0 0
        %985 = vmatprep.subr.bf16.mxu0 0
        %986 = vmatpush1.bf16.msra.mxu0 0
        %987 = vmatprep.subr.bf16.mxu0 0
        %988 = vmatpush1.bf16.msra.mxu0 0
        %989 = vmatprep.subr.bf16.mxu0 %v978
        %990 = vmatpush1.bf16.msra.mxu0 %v975
        %991 = vmatprep.subr.bf16.mxu0 %v957
        %992 = vmatpush1.bf16.msra.mxu0 %v953
        %993 = vmatprep.subr.bf16.mxu0 %v945
        %994 = vmatpush1.bf16.msra.mxu0 %v941
        %995 = vmatprep.subr.bf16.mxu0 %v933
        %996 = vmatpush1.bf16.msra.mxu0 %v929
        %997 = vmatprep.subr.bf16.mxu0 %v921
        %998 = vmatpush1.bf16.msra.mxu0 %v917
        %999 = vmatprep.subr.bf16.mxu0 0
        %1000 = vmatpush2.bf16.msra.mxu0 0
        %1001 = vmatprep.subr.bf16.mxu0 0
        %1002 = vmatpush2.bf16.msra.mxu0 0
        %1003 = vmatprep.subr.bf16.mxu0 0
        %1004 = vmatpush2.bf16.msra.mxu0 0
        %1005 = vmatprep.subr.bf16.mxu0 0
        %1006 = vmatpush2.bf16.msra.mxu0 0
        %1007 = vmatprep.subr.bf16.mxu0 0
        %1008 = vmatpush2.bf16.msra.mxu0 0
        %1009 = vmatprep.subr.bf16.mxu0 0
        %1010 = vmatpush2.bf16.msra.mxu0 0
        %1011 = vmatprep.subr.bf16.mxu0 0
        %1012 = vmatpush2.bf16.msra.mxu0 0
        %1013 = vmatprep.subr.bf16.mxu0 0
        %1014 = vmatpush2.bf16.msra.mxu0 0
        %1015 = vmatprep.mubr.bf16.mxu0 0
        %1016 = vmatmul.mubr.bf16.gmra.mxu0 %v972
        %v1017 = vpop.f32.mrf.mxu0
        %v1018 = vadd.f32 %v968, %v1017
        %v1019 = vpop.f32.mrf.mxu0
        %v1020 = vadd.f32 %v968, %v1019
        %v1021 = vpop.f32.mrf.mxu0
        %v1022 = vpop.f32.mrf.mxu0
        %1023 = vdwg.mxu0
        %1024 = vmatprep.subr.bf16.mxu0 0
        %1025 = vmatpush1.bf16.msra.mxu0 0
        %1026 = vmatprep.subr.bf16.mxu0 0
        %1027 = vmatpush1.bf16.msra.mxu0 0
        %1028 = vmatprep.subr.bf16.mxu0 0
        %1029 = vmatpush1.bf16.msra.mxu0 0
        %1030 = vmatprep.subr.bf16.mxu0 0
        %1031 = vmatpush1.bf16.msra.mxu0 %v981
        %1032 = vmatprep.subr.bf16.mxu0 0
        %1033 = vmatpush1.bf16.msra.mxu0 %v961
        %1034 = vmatprep.subr.bf16.mxu0 0
        %1035 = vmatpush1.bf16.msra.mxu0 %v949
        %1036 = vmatprep.subr.bf16.mxu0 0
        %1037 = vmatpush1.bf16.msra.mxu0 %v937
        %1038 = vmatprep.subr.bf16.mxu0 0
        %1039 = vmatpush1.bf16.msra.mxu0 %v925
        %1040 = vmatprep.subr.bf16.mxu0 0
        %1041 = vmatpush2.bf16.msra.mxu0 0
        %1042 = vmatprep.subr.bf16.mxu0 0
        %1043 = vmatpush2.bf16.msra.mxu0 0
        %1044 = vmatprep.subr.bf16.mxu0 0
        %1045 = vmatpush2.bf16.msra.mxu0 0
        %1046 = vmatprep.subr.bf16.mxu0 0
        %1047 = vmatpush2.bf16.msra.mxu0 0
        %1048 = vmatprep.subr.bf16.mxu0 0
        %1049 = vmatpush2.bf16.msra.mxu0 0
        %1050 = vmatprep.subr.bf16.mxu0 0
        %1051 = vmatpush2.bf16.msra.mxu0 0
        %1052 = vmatprep.subr.bf16.mxu0 0
        %1053 = vmatpush2.bf16.msra.mxu0 0
        %1054 = vmatprep.subr.bf16.mxu0 0
        %1055 = vmatpush2.bf16.msra.mxu0 0
        %1056 = vmatprep.mubr.bf16.mxu0 0
        %1057 = vmatmul.mubr.bf16.gmra.mxu0 %v972
        %v1058 = vpop.f32.mrf.mxu0
        %v1059 = vadd.f32 %v968, %v1058
        %v1060 = vpop.f32.mrf.mxu0
        %v1061 = vpop.f32.mrf.mxu0
        %v1062 = vpop.f32.mrf.mxu0
        %1063 = vdwg.mxu0
        %v1064 = vmax.f32 %v1018, 0.0
        %v1065 = vmax.f32 %v1020, 0.0
        %v1066 = vmax.f32 %v1059, 0.0
        %1068 = vrot.lane.b32.xlu0 %v1064, 110
        %v1069 = vpop.permute.xlu0 %1068
        %1070 = vrot.lane.b32.xlu0 %v1064, 92
        %v1071 = vpop.permute.xlu0 %1070
        %1072 = vrot.lane.b32.xlu0 %v1064, 74
        %v1073 = vpop.permute.xlu0 %1072
        %1074 = vrot.lane.b32.xlu0 %v1064, 56
        %v1075 = vpop.permute.xlu0 %1074
        %1076 = vrot.lane.b32.xlu0 %v1064, 38
        %v1077 = vpop.permute.xlu0 %1076
        %1079 = vrot.lane.b32.xlu0 %v1064, 20
        %v1080 = vpop.permute.xlu0 %1079
        %1081 = vrot.lane.b32.xlu0 %v1065, 20
        %v1082 = vpop.permute.xlu0 %1081
        %vm1083 = vcmask 162816
        %v1084 = vsel %vm1083, %v1080, %v1082
        %1085 = vrot.lane.b32.xlu0 %v1065, 2
        %v1086 = vpop.permute.xlu0 %1085
        %1087 = vrot.lane.b32.xlu0 %v1065, 112
        %v1088 = vpop.permute.xlu0 %1087
        %1089 = vrot.lane.b32.xlu0 %v1065, 94
        %v1090 = vpop.permute.xlu0 %1089
        %1091 = vrot.lane.b32.xlu0 %v1065, 76
        %v1092 = vpop.permute.xlu0 %1091
        %1093 = vrot.lane.b32.xlu0 %v1065, 58
        %v1094 = vpop.permute.xlu0 %1093
        %1095 = vrot.lane.b32.xlu0 %v1065, 40
        %v1096 = vpop.permute.xlu0 %1095
        %1098 = vrot.lane.b32.xlu0 %v1065, 22
        %v1099 = vpop.permute.xlu0 %1098
        %1100 = vrot.lane.b32.xlu0 %v1066, 22
        %v1101 = vpop.permute.xlu0 %1100
        %vm1102 = vcmask 179200
        %v1103 = vsel %vm1102, %v1099, %v1101
        %1104 = vrot.lane.b32.xlu0 %v1066, 4
        %v1105 = vpop.permute.xlu0 %1104
        %1106 = vrot.lane.b32.xlu0 %v1066, 114
        %v1107 = vpop.permute.xlu0 %1106
        %1108 = vrot.lane.b32.xlu0 %v1064, 109
        %v1109 = vpop.permute.xlu0 %1108
        %1110 = vrot.lane.b32.xlu0 %v1069, 109
        %v1111 = vpop.permute.xlu0 %1110
        %1112 = vrot.lane.b32.xlu0 %v1071, 109
        %v1113 = vpop.permute.xlu0 %1112
        %1114 = vrot.lane.b32.xlu0 %v1073, 109
        %v1115 = vpop.permute.xlu0 %1114
        %1116 = vrot.lane.b32.xlu0 %v1075, 109
        %v1117 = vpop.permute.xlu0 %1116
        %1118 = vrot.lane.b32.xlu0 %v1077, 109
        %v1119 = vpop.permute.xlu0 %1118
        %1120 = vrot.lane.b32.xlu0 %v1084, 109
        %v1121 = vpop.permute.xlu0 %1120
        %1122 = vrot.lane.b32.xlu0 %v1086, 109
        %v1123 = vpop.permute.xlu0 %1122
        %1124 = vrot.lane.b32.xlu0 %v1088, 109
        %v1125 = vpop.permute.xlu0 %1124
        %1126 = vrot.lane.b32.xlu0 %v1090, 109
        %v1127 = vpop.permute.xlu0 %1126
        %1128 = vrot.lane.b32.xlu0 %v1092, 109
        %v1129 = vpop.permute.xlu0 %1128
        %1130 = vrot.lane.b32.xlu0 %v1094, 109
        %v1131 = vpop.permute.xlu0 %1130
        %1132 = vrot.lane.b32.xlu0 %v1096, 109
        %v1133 = vpop.permute.xlu0 %1132
        %1134 = vrot.lane.b32.xlu0 %v1103, 109
        %v1135 = vpop.permute.xlu0 %1134
        %1136 = vrot.lane.b32.xlu0 %v1105, 109
        %v1137 = vpop.permute.xlu0 %1136
        %1138 = vrot.lane.b32.xlu0 %v1107, 109
        %v1139 = vpop.permute.xlu0 %1138
        %v1156 = vcombine.low %v1109, %v1113
        %v1157 = vcombine.high %v1109, %v1113
        %v1159 = vunpack.c.l.s4 1983009808
        %v1160 = vunpack.c.0.s8 %v1159
        %v1161 = vlaneseq
        %v1162 = vshrl.u32 %v1161, 7
        %v1163 = vsub.s32 %v1160, %v1162
        %v1164 = vrot.slane %v1156, %v1163
        %v1166 = vunpack.c.l.s4 1983009808
        %v1167 = vunpack.c.0.s8 %v1166
        %v1168 = vlaneseq
        %v1169 = vshrl.u32 %v1168, 7
        %v1170 = vsub.s32 %v1167, %v1169
        %v1171 = vrot.slane %v1157, %v1170
        %v1172 = vcombine.low %v1111, %v1115
        %v1173 = vcombine.high %v1111, %v1115
        %v1175 = vunpack.c.l.s4 1983009808
        %v1176 = vunpack.c.0.s8 %v1175
        %v1177 = vlaneseq
        %v1178 = vshrl.u32 %v1177, 7
        %v1179 = vsub.s32 %v1176, %v1178
        %v1180 = vrot.slane %v1172, %v1179
        %v1182 = vunpack.c.l.s4 1983009808
        %v1183 = vunpack.c.0.s8 %v1182
        %v1184 = vlaneseq
        %v1185 = vshrl.u32 %v1184, 7
        %v1186 = vsub.s32 %v1183, %v1185
        %v1187 = vrot.slane %v1173, %v1186
        %v1188 = vcombine.low %v1117, %v1121
        %v1189 = vcombine.high %v1117, %v1121
        %v1191 = vunpack.c.l.s4 1983009808
        %v1192 = vunpack.c.0.s8 %v1191
        %v1193 = vlaneseq
        %v1194 = vshrl.u32 %v1193, 7
        %v1195 = vsub.s32 %v1192, %v1194
        %v1196 = vrot.slane %v1188, %v1195
        %v1198 = vunpack.c.l.s4 1983009808
        %v1199 = vunpack.c.0.s8 %v1198
        %v1200 = vlaneseq
        %v1201 = vshrl.u32 %v1200, 7
        %v1202 = vsub.s32 %v1199, %v1201
        %v1203 = vrot.slane %v1189, %v1202
        %v1204 = vcombine.low %v1119, %v1123
        %v1205 = vcombine.high %v1119, %v1123
        %v1207 = vunpack.c.l.s4 1983009808
        %v1208 = vunpack.c.0.s8 %v1207
        %v1209 = vlaneseq
        %v1210 = vshrl.u32 %v1209, 7
        %v1211 = vsub.s32 %v1208, %v1210
        %v1212 = vrot.slane %v1204, %v1211
        %v1214 = vunpack.c.l.s4 1983009808
        %v1215 = vunpack.c.0.s8 %v1214
        %v1216 = vlaneseq
        %v1217 = vshrl.u32 %v1216, 7
        %v1218 = vsub.s32 %v1215, %v1217
        %v1219 = vrot.slane %v1205, %v1218
        %v1220 = vcombine.low %v1164, %v1180
        %v1221 = vcombine.high %v1164, %v1180
        %v1223 = vunpack.c.l.s4 1934713408
        %v1224 = vunpack.c.0.s8 %v1223
        %v1225 = vlaneseq
        %v1226 = vshrl.u32 %v1225, 7
        %v1227 = vsub.s32 %v1224, %v1226
        %v1228 = vrot.slane %v1220, %v1227
        %v1230 = vunpack.c.l.s4 1934713408
        %v1231 = vunpack.c.0.s8 %v1230
        %v1232 = vlaneseq
        %v1233 = vshrl.u32 %v1232, 7
        %v1234 = vsub.s32 %v1231, %v1233
        %v1235 = vrot.slane %v1221, %v1234
        %v1236 = vcombine.low %v1171, %v1187
        %v1237 = vcombine.high %v1171, %v1187
        %v1239 = vunpack.c.l.s4 1934713408
        %v1240 = vunpack.c.0.s8 %v1239
        %v1241 = vlaneseq
        %v1242 = vshrl.u32 %v1241, 7
        %v1243 = vsub.s32 %v1240, %v1242
        %v1244 = vrot.slane %v1236, %v1243
        %v1246 = vunpack.c.l.s4 1934713408
        %v1247 = vunpack.c.0.s8 %v1246
        %v1248 = vlaneseq
        %v1249 = vshrl.u32 %v1248, 7
        %v1250 = vsub.s32 %v1247, %v1249
        %v1251 = vrot.slane %v1237, %v1250
        %v1252 = vcombine.low %v1196, %v1212
        %v1253 = vcombine.high %v1196, %v1212
        %v1255 = vunpack.c.l.s4 1934713408
        %v1256 = vunpack.c.0.s8 %v1255
        %v1257 = vlaneseq
        %v1258 = vshrl.u32 %v1257, 7
        %v1259 = vsub.s32 %v1256, %v1258
        %v1260 = vrot.slane %v1252, %v1259
        %v1262 = vunpack.c.l.s4 1934713408
        %v1263 = vunpack.c.0.s8 %v1262
        %v1264 = vlaneseq
        %v1265 = vshrl.u32 %v1264, 7
        %v1266 = vsub.s32 %v1263, %v1265
        %v1267 = vrot.slane %v1253, %v1266
        %v1268 = vcombine.low %v1203, %v1219
        %v1269 = vcombine.high %v1203, %v1219
        %v1271 = vunpack.c.l.s4 1934713408
        %v1272 = vunpack.c.0.s8 %v1271
        %v1273 = vlaneseq
        %v1274 = vshrl.u32 %v1273, 7
        %v1275 = vsub.s32 %v1272, %v1274
        %v1276 = vrot.slane %v1268, %v1275
        %v1278 = vunpack.c.l.s4 1934713408
        %v1279 = vunpack.c.0.s8 %v1278
        %v1280 = vlaneseq
        %v1281 = vshrl.u32 %v1280, 7
        %v1282 = vsub.s32 %v1279, %v1281
        %v1283 = vrot.slane %v1269, %v1282
        %v1284 = vcombine.low %v1228, %v1260
        %v1285 = vcombine.high %v1228, %v1260
        %v1286 = vcombine.low %v1235, %v1267
        %v1287 = vcombine.high %v1235, %v1267
        %v1288 = vcombine.low %v1244, %v1276
        %v1289 = vcombine.high %v1244, %v1276
        %v1290 = vcombine.low %v1251, %v1283
        %v1291 = vcombine.high %v1251, %v1283
        %v1292 = vcombine.low %v1125, %v1129
        %v1293 = vcombine.high %v1125, %v1129
        %v1295 = vunpack.c.l.s4 1983009808
        %v1296 = vunpack.c.0.s8 %v1295
        %v1297 = vlaneseq
        %v1298 = vshrl.u32 %v1297, 7
        %v1299 = vsub.s32 %v1296, %v1298
        %v1300 = vrot.slane %v1292, %v1299
        %v1302 = vunpack.c.l.s4 1983009808
        %v1303 = vunpack.c.0.s8 %v1302
        %v1304 = vlaneseq
        %v1305 = vshrl.u32 %v1304, 7
        %v1306 = vsub.s32 %v1303, %v1305
        %v1307 = vrot.slane %v1293, %v1306
        %v1308 = vcombine.low %v1127, %v1131
        %v1309 = vcombine.high %v1127, %v1131
        %v1311 = vunpack.c.l.s4 1983009808
        %v1312 = vunpack.c.0.s8 %v1311
        %v1313 = vlaneseq
        %v1314 = vshrl.u32 %v1313, 7
        %v1315 = vsub.s32 %v1312, %v1314
        %v1316 = vrot.slane %v1308, %v1315
        %v1318 = vunpack.c.l.s4 1983009808
        %v1319 = vunpack.c.0.s8 %v1318
        %v1320 = vlaneseq
        %v1321 = vshrl.u32 %v1320, 7
        %v1322 = vsub.s32 %v1319, %v1321
        %v1323 = vrot.slane %v1309, %v1322
        %v1324 = vcombine.low %v1133, %v1137
        %v1325 = vcombine.high %v1133, %v1137
        %v1327 = vunpack.c.l.s4 1983009808
        %v1328 = vunpack.c.0.s8 %v1327
        %v1329 = vlaneseq
        %v1330 = vshrl.u32 %v1329, 7
        %v1331 = vsub.s32 %v1328, %v1330
        %v1332 = vrot.slane %v1324, %v1331
        %v1334 = vunpack.c.l.s4 1983009808
        %v1335 = vunpack.c.0.s8 %v1334
        %v1336 = vlaneseq
        %v1337 = vshrl.u32 %v1336, 7
        %v1338 = vsub.s32 %v1335, %v1337
        %v1339 = vrot.slane %v1325, %v1338
        %v1340 = vcombine.low %v1135, %v1139
        %v1341 = vcombine.high %v1135, %v1139
        %v1343 = vunpack.c.l.s4 1983009808
        %v1344 = vunpack.c.0.s8 %v1343
        %v1345 = vlaneseq
        %v1346 = vshrl.u32 %v1345, 7
        %v1347 = vsub.s32 %v1344, %v1346
        %v1348 = vrot.slane %v1340, %v1347
        %v1350 = vunpack.c.l.s4 1983009808
        %v1351 = vunpack.c.0.s8 %v1350
        %v1352 = vlaneseq
        %v1353 = vshrl.u32 %v1352, 7
        %v1354 = vsub.s32 %v1351, %v1353
        %v1355 = vrot.slane %v1341, %v1354
        %v1356 = vcombine.low %v1300, %v1316
        %v1357 = vcombine.high %v1300, %v1316
        %v1359 = vunpack.c.l.s4 1934713408
        %v1360 = vunpack.c.0.s8 %v1359
        %v1361 = vlaneseq
        %v1362 = vshrl.u32 %v1361, 7
        %v1363 = vsub.s32 %v1360, %v1362
        %v1364 = vrot.slane %v1356, %v1363
        %v1366 = vunpack.c.l.s4 1934713408
        %v1367 = vunpack.c.0.s8 %v1366
        %v1368 = vlaneseq
        %v1369 = vshrl.u32 %v1368, 7
        %v1370 = vsub.s32 %v1367, %v1369
        %v1371 = vrot.slane %v1357, %v1370
        %v1372 = vcombine.low %v1307, %v1323
        %v1373 = vcombine.high %v1307, %v1323
        %v1375 = vunpack.c.l.s4 1934713408
        %v1376 = vunpack.c.0.s8 %v1375
        %v1377 = vlaneseq
        %v1378 = vshrl.u32 %v1377, 7
        %v1379 = vsub.s32 %v1376, %v1378
        %v1380 = vrot.slane %v1372, %v1379
        %v1382 = vunpack.c.l.s4 1934713408
        %v1383 = vunpack.c.0.s8 %v1382
        %v1384 = vlaneseq
        %v1385 = vshrl.u32 %v1384, 7
        %v1386 = vsub.s32 %v1383, %v1385
        %v1387 = vrot.slane %v1373, %v1386
        %v1388 = vcombine.low %v1332, %v1348
        %v1389 = vcombine.high %v1332, %v1348
        %v1391 = vunpack.c.l.s4 1934713408
        %v1392 = vunpack.c.0.s8 %v1391
        %v1393 = vlaneseq
        %v1394 = vshrl.u32 %v1393, 7
        %v1395 = vsub.s32 %v1392, %v1394
        %v1396 = vrot.slane %v1388, %v1395
        %v1398 = vunpack.c.l.s4 1934713408
        %v1399 = vunpack.c.0.s8 %v1398
        %v1400 = vlaneseq
        %v1401 = vshrl.u32 %v1400, 7
        %v1402 = vsub.s32 %v1399, %v1401
        %v1403 = vrot.slane %v1389, %v1402
        %v1404 = vcombine.low %v1339, %v1355
        %v1405 = vcombine.high %v1339, %v1355
        %v1407 = vunpack.c.l.s4 1934713408
        %v1408 = vunpack.c.0.s8 %v1407
        %v1409 = vlaneseq
        %v1410 = vshrl.u32 %v1409, 7
        %v1411 = vsub.s32 %v1408, %v1410
        %v1412 = vrot.slane %v1404, %v1411
        %v1414 = vunpack.c.l.s4 1934713408
        %v1415 = vunpack.c.0.s8 %v1414
        %v1416 = vlaneseq
        %v1417 = vshrl.u32 %v1416, 7
        %v1418 = vsub.s32 %v1415, %v1417
        %v1419 = vrot.slane %v1405, %v1418
        %v1420 = vcombine.low %v1364, %v1396
        %v1421 = vcombine.high %v1364, %v1396
        %v1422 = vcombine.low %v1371, %v1403
        %v1423 = vcombine.high %v1371, %v1403
        %v1424 = vcombine.low %v1380, %v1412
        %v1425 = vcombine.high %v1380, %v1412
        %v1426 = vcombine.low %v1387, %v1419
        %v1427 = vcombine.high %v1387, %v1419
        %v1428 = vpack.c.bf16 %v1420, %v1284
        %v1429 = vpack.c.bf16 %v1421, %v1285
        %v1430 = vpack.c.bf16 %v1422, %v1286
        %v1431 = vpack.c.bf16 %v1423, %v1287
        %v1432 = vpack.c.bf16 %v1424, %v1288
        %v1433 = vpack.c.bf16 %v1425, %v1289
        %v1434 = vpack.c.bf16 %v1426, %v1290
        %v1435 = vpack.c.bf16 %v1427, %v1291
        %v1436 = vld [vmem:[%s6] sm:$0xf]
        %v1437 = vld [vmem:[%s6 + $0x4] sm:$0xf]
        %v1440 = vunpack.c.l.b16 %v1436
        %v1441 = vunpack.c.l.b16 %v1437
        %v1442 = vpack.c.b16 %v1441, %v1440
        %vm1444 = vcmask 130048
        %v1446 = vsel %vm1444, %v1428, 0
        %v1449 = vsel %vm1444, %v1429, 0
        %v1452 = vsel %vm1444, %v1430, 0
        %v1455 = vsel %vm1444, %v1431, 0
        %v1458 = vsel %vm1444, %v1432, 0
        %v1461 = vsel %vm1444, %v1433, 0
        %v1464 = vsel %vm1444, %v1434, 0
        %v1467 = vsel %vm1444, %v1435, 0
        %1469 = vmatprep.subr.bf16.mxu0 0
        %1470 = vmatpush1.bf16.msra.mxu0 0
        %1471 = vmatprep.subr.bf16.mxu0 0
        %1472 = vmatpush1.bf16.msra.mxu0 0
        %1473 = vmatprep.subr.bf16.mxu0 0
        %1474 = vmatpush1.bf16.msra.mxu0 0
        %1475 = vmatprep.subr.bf16.mxu0 0
        %1476 = vmatpush1.bf16.msra.mxu0 0
        %1477 = vmatprep.subr.bf16.mxu0 0
        %1478 = vmatpush1.bf16.msra.mxu0 0
        %1479 = vmatprep.subr.bf16.mxu0 0
        %1480 = vmatpush1.bf16.msra.mxu0 0
        %1481 = vmatprep.subr.bf16.mxu0 0
        %1482 = vmatpush1.bf16.msra.mxu0 0
        %1483 = vmatprep.subr.bf16.mxu0 0
        %1484 = vmatpush1.bf16.msra.mxu0 %v1442
        %1485 = vmatprep.subr.bf16.mxu0 0
        %1486 = vmatpush2.bf16.msra.mxu0 0
        %1487 = vmatprep.subr.bf16.mxu0 0
        %1488 = vmatpush2.bf16.msra.mxu0 0
        %1489 = vmatprep.subr.bf16.mxu0 0
        %1490 = vmatpush2.bf16.msra.mxu0 0
        %1491 = vmatprep.subr.bf16.mxu0 0
        %1492 = vmatpush2.bf16.msra.mxu0 0
        %1493 = vmatprep.subr.bf16.mxu0 0
        %1494 = vmatpush2.bf16.msra.mxu0 0
        %1495 = vmatprep.subr.bf16.mxu0 0
        %1496 = vmatpush2.bf16.msra.mxu0 0
        %1497 = vmatprep.subr.bf16.mxu0 0
        %1498 = vmatpush2.bf16.msra.mxu0 0
        %1499 = vmatprep.subr.bf16.mxu0 0
        %1500 = vmatpush2.bf16.msra.mxu0 0
        %1501 = vmatprep.mubr.bf16.mxu0 0
        %1502 = vmatmul.mubr.bf16.gmra.mxu0 %v1446
        %v1503 = vpop.f32.mrf.mxu0
        %v1504 = vadd.f32 0.0, %v1503
        %v1505 = vpop.f32.mrf.mxu0
        %v1506 = vpop.f32.mrf.mxu0
        %v1507 = vadd.f32 0.0, %v1506
        %v1508 = vpop.f32.mrf.mxu0
        %1509 = vmatprep.mubr.bf16.mxu0 0
        %1510 = vmatmul.mubr.bf16.gmra.mxu0 %v1449
        %v1511 = vpop.f32.mrf.mxu0
        %v1512 = vadd.f32 0.0, %v1511
        %v1513 = vpop.f32.mrf.mxu0
        %v1514 = vpop.f32.mrf.mxu0
        %v1515 = vadd.f32 0.0, %v1514
        %v1516 = vpop.f32.mrf.mxu0
        %1517 = vmatprep.mubr.bf16.mxu0 0
        %1518 = vmatmul.mubr.bf16.gmra.mxu0 %v1452
        %v1519 = vpop.f32.mrf.mxu0
        %v1520 = vadd.f32 0.0, %v1519
        %v1521 = vpop.f32.mrf.mxu0
        %v1522 = vpop.f32.mrf.mxu0
        %v1523 = vadd.f32 0.0, %v1522
        %v1524 = vpop.f32.mrf.mxu0
        %1525 = vmatprep.mubr.bf16.mxu0 0
        %1526 = vmatmul.mubr.bf16.gmra.mxu0 %v1455
        %v1527 = vpop.f32.mrf.mxu0
        %v1528 = vadd.f32 0.0, %v1527
        %v1529 = vpop.f32.mrf.mxu0
        %v1530 = vpop.f32.mrf.mxu0
        %v1531 = vadd.f32 0.0, %v1530
        %v1532 = vpop.f32.mrf.mxu0
        %1533 = vmatprep.mubr.bf16.mxu0 0
        %1534 = vmatmul.mubr.bf16.gmra.mxu0 %v1458
        %v1535 = vpop.f32.mrf.mxu0
        %v1536 = vadd.f32 0.0, %v1535
        %v1537 = vpop.f32.mrf.mxu0
        %v1538 = vpop.f32.mrf.mxu0
        %v1539 = vadd.f32 0.0, %v1538
        %v1540 = vpop.f32.mrf.mxu0
        %1541 = vmatprep.mubr.bf16.mxu0 0
        %1542 = vmatmul.mubr.bf16.gmra.mxu0 %v1461
        %v1543 = vpop.f32.mrf.mxu0
        %v1544 = vadd.f32 0.0, %v1543
        %v1545 = vpop.f32.mrf.mxu0
        %v1546 = vpop.f32.mrf.mxu0
        %v1547 = vadd.f32 0.0, %v1546
        %v1548 = vpop.f32.mrf.mxu0
        %1549 = vmatprep.mubr.bf16.mxu0 0
        %1550 = vmatmul.mubr.bf16.gmra.mxu0 %v1464
        %v1551 = vpop.f32.mrf.mxu0
        %v1552 = vadd.f32 0.0, %v1551
        %v1553 = vpop.f32.mrf.mxu0
        %v1554 = vpop.f32.mrf.mxu0
        %v1555 = vadd.f32 0.0, %v1554
        %v1556 = vpop.f32.mrf.mxu0
        %1557 = vmatprep.mubr.bf16.mxu0 0
        %1558 = vmatmul.mubr.bf16.gmra.mxu0 %v1467
        %v1559 = vpop.f32.mrf.mxu0
        %v1560 = vadd.f32 0.0, %v1559
        %v1561 = vpop.f32.mrf.mxu0
        %v1562 = vpop.f32.mrf.mxu0
        %v1563 = vadd.f32 0.0, %v1562
        %v1564 = vpop.f32.mrf.mxu0
        %1565 = vdwg.mxu0
        %v1566 = vpack.c.bf16 %v1507, %v1504
        %v1567 = vpack.c.bf16 %v1515, %v1512
        %v1568 = vpack.c.bf16 %v1523, %v1520
        %v1569 = vpack.c.bf16 %v1531, %v1528
        %v1570 = vpack.c.bf16 %v1539, %v1536
        %v1571 = vpack.c.bf16 %v1547, %v1544
        %v1572 = vpack.c.bf16 %v1555, %v1552
        %v1573 = vpack.c.bf16 %v1563, %v1560
        %v1574 = vld [vmem:[%s7] sm:$0xf]
        %v1575 = vld [vmem:[%s7 + $0x4] sm:$0xf]
        %v1576 = vld [vmem:[%s7 + $0x8] sm:$0xf]
        %v1577 = vld [vmem:[%s7 + $0xc] sm:$0xf]
        %v1578 = vld [vmem:[%s7 + $0x10] sm:$0xf]
        %v1579 = vld [vmem:[%s7 + $0x14] sm:$0xf]
        %v1580 = vld [vmem:[%s7 + $0x18] sm:$0xf]
        %v1581 = vld [vmem:[%s7 + $0x1c] sm:$0xf]
        %v1582 = vld [vmem:[%s7 + $0x20] sm:$0xf]
        %v1583 = vld [vmem:[%s7 + $0x24] sm:$0xf]
        %v1584 = vld [vmem:[%s7 + $0x28] sm:$0xf]
        %v1585 = vld [vmem:[%s7 + $0x2c] sm:$0xf]
        %v1586 = vld [vmem:[%s7 + $0x30] sm:$0xf]
        %v1587 = vld [vmem:[%s7 + $0x34] sm:$0xf]
        %v1588 = vld [vmem:[%s7 + $0x38] sm:$0xf]
        %v1589 = vld [vmem:[%s7 + $0x3c] sm:$0xf]
        %v1590 = vld [vmem:[%s7 + $0x40] sm:$0xf]
        %v1591 = vld [vmem:[%s7 + $0x44] sm:$0xf]
        %v1592 = vld [vmem:[%s7 + $0x48] sm:$0xf]
        %v1593 = vld [vmem:[%s7 + $0x4c] sm:$0xf]
        %v1594 = vld [vmem:[%s7 + $0x50] sm:$0xf]
        %v1595 = vld [vmem:[%s7 + $0x54] sm:$0xf]
        %v1596 = vld [vmem:[%s7 + $0x58] sm:$0xf]
        %v1597 = vld [vmem:[%s7 + $0x5c] sm:$0xf]
        %v1598 = vld [vmem:[%s7 + $0x60] sm:$0xf]
        %v1599 = vld [vmem:[%s7 + $0x64] sm:$0xf]
        %v1600 = vld [vmem:[%s7 + $0x68] sm:$0xf]
        %v1601 = vld [vmem:[%s7 + $0x6c] sm:$0xf]
        %v1602 = vld [vmem:[%s7 + $0x70] sm:$0xf]
        %v1603 = vld [vmem:[%s7 + $0x74] sm:$0xf]
        %v1604 = vld [vmem:[%s7 + $0x78] sm:$0xf]
        %v1605 = vld [vmem:[%s7 + $0x7c] sm:$0xf]
        %v1610 = vunpack.c.l.b16 %v1574
        %v1611 = vunpack.c.l.b16 %v1575
        %v1612 = vunpack.c.l.b16 %v1576
        %v1613 = vunpack.c.l.b16 %v1577
        %v1614 = vpack.c.b16 %v1611, %v1610
        %v1615 = vpack.c.b16 %v1613, %v1612
        %v1617 = vsel %vm1444, %v1614, 0
        %v1620 = vsel %vm1444, %v1615, 0
        %1622 = vmatprep.subr.bf16.mxu0 0
        %1623 = vmatpush1.bf16.msra.mxu0 0
        %1624 = vmatprep.subr.bf16.mxu0 0
        %1625 = vmatpush1.bf16.msra.mxu0 0
        %1626 = vmatprep.subr.bf16.mxu0 0
        %1627 = vmatpush1.bf16.msra.mxu0 0
        %1628 = vmatprep.subr.bf16.mxu0 0
        %1629 = vmatpush1.bf16.msra.mxu0 0
        %1630 = vmatprep.subr.bf16.mxu0 0
        %1631 = vmatpush1.bf16.msra.mxu0 0
        %1632 = vmatprep.subr.bf16.mxu0 0
        %1633 = vmatpush1.bf16.msra.mxu0 0
        %1634 = vmatprep.subr.bf16.mxu0 0
        %1635 = vmatpush1.bf16.msra.mxu0 0
        %1636 = vmatprep.subr.bf16.mxu0 0
        %1637 = vmatpush1.bf16.msra.mxu0 %v1566
        %1638 = vmatprep.subr.bf16.mxu0 0
        %1639 = vmatpush2.bf16.msra.mxu0 0
        %1640 = vmatprep.subr.bf16.mxu0 0
        %1641 = vmatpush2.bf16.msra.mxu0 0
        %1642 = vmatprep.subr.bf16.mxu0 0
        %1643 = vmatpush2.bf16.msra.mxu0 0
        %1644 = vmatprep.subr.bf16.mxu0 0
        %1645 = vmatpush2.bf16.msra.mxu0 0
        %1646 = vmatprep.subr.bf16.mxu0 0
        %1647 = vmatpush2.bf16.msra.mxu0 0
        %1648 = vmatprep.subr.bf16.mxu0 0
        %1649 = vmatpush2.bf16.msra.mxu0 0
        %1650 = vmatprep.subr.bf16.mxu0 0
        %1651 = vmatpush2.bf16.msra.mxu0 0
        %1652 = vmatprep.subr.bf16.mxu0 0
        %1653 = vmatpush2.bf16.msra.mxu0 0
        %1654 = vmatprep.mubr.bf16.mxu0 0
        %1655 = vmatmul.mubr.bf16.gmra.mxu0 %v1617
        %v1656 = vpop.f32.mrf.mxu0
        %v1657 = vadd.f32 0.0, %v1656
        %v1658 = vpop.f32.mrf.mxu0
        %v1659 = vpop.f32.mrf.mxu0
        %v1660 = vadd.f32 0.0, %v1659
        %v1661 = vpop.f32.mrf.mxu0
        %1662 = vmatprep.mubr.bf16.mxu0 0
        %1663 = vmatmul.mubr.bf16.gmra.mxu0 %v1620
        %v1664 = vpop.f32.mrf.mxu0
        %v1665 = vadd.f32 0.0, %v1664
        %v1666 = vpop.f32.mrf.mxu0
        %v1667 = vpop.f32.mrf.mxu0
        %v1668 = vadd.f32 0.0, %v1667
        %v1669 = vpop.f32.mrf.mxu0
        %1670 = vdwg.mxu0
        %v1675 = vunpack.c.l.b16 %v1578
        %v1676 = vunpack.c.l.b16 %v1579
        %v1677 = vunpack.c.l.b16 %v1580
        %v1678 = vunpack.c.l.b16 %v1581
        %v1679 = vpack.c.b16 %v1676, %v1675
        %v1680 = vpack.c.b16 %v1678, %v1677
        %v1682 = vsel %vm1444, %v1679, 0
        %v1685 = vsel %vm1444, %v1680, 0
        %1687 = vmatprep.subr.bf16.mxu0 0
        %1688 = vmatpush1.bf16.msra.mxu0 0
        %1689 = vmatprep.subr.bf16.mxu0 0
        %1690 = vmatpush1.bf16.msra.mxu0 0
        %1691 = vmatprep.subr.bf16.mxu0 0
        %1692 = vmatpush1.bf16.msra.mxu0 0
        %1693 = vmatprep.subr.bf16.mxu0 0
        %1694 = vmatpush1.bf16.msra.mxu0 0
        %1695 = vmatprep.subr.bf16.mxu0 0
        %1696 = vmatpush1.bf16.msra.mxu0 0
        %1697 = vmatprep.subr.bf16.mxu0 0
        %1698 = vmatpush1.bf16.msra.mxu0 0
        %1699 = vmatprep.subr.bf16.mxu0 0
        %1700 = vmatpush1.bf16.msra.mxu0 0
        %1701 = vmatprep.subr.bf16.mxu0 0
        %1702 = vmatpush1.bf16.msra.mxu0 %v1567
        %1703 = vmatprep.subr.bf16.mxu0 0
        %1704 = vmatpush2.bf16.msra.mxu0 0
        %1705 = vmatprep.subr.bf16.mxu0 0
        %1706 = vmatpush2.bf16.msra.mxu0 0
        %1707 = vmatprep.subr.bf16.mxu0 0
        %1708 = vmatpush2.bf16.msra.mxu0 0
        %1709 = vmatprep.subr.bf16.mxu0 0
        %1710 = vmatpush2.bf16.msra.mxu0 0
        %1711 = vmatprep.subr.bf16.mxu0 0
        %1712 = vmatpush2.bf16.msra.mxu0 0
        %1713 = vmatprep.subr.bf16.mxu0 0
        %1714 = vmatpush2.bf16.msra.mxu0 0
        %1715 = vmatprep.subr.bf16.mxu0 0
        %1716 = vmatpush2.bf16.msra.mxu0 0
        %1717 = vmatprep.subr.bf16.mxu0 0
        %1718 = vmatpush2.bf16.msra.mxu0 0
        %1719 = vmatprep.mubr.bf16.mxu0 0
        %1720 = vmatmul.mubr.bf16.gmra.mxu0 %v1682
        %v1721 = vpop.f32.mrf.mxu0
        %v1722 = vadd.f32 0.0, %v1721
        %v1723 = vpop.f32.mrf.mxu0
        %v1724 = vpop.f32.mrf.mxu0
        %v1725 = vadd.f32 0.0, %v1724
        %v1726 = vpop.f32.mrf.mxu0
        %1727 = vmatprep.mubr.bf16.mxu0 0
        %1728 = vmatmul.mubr.bf16.gmra.mxu0 %v1685
        %v1729 = vpop.f32.mrf.mxu0
        %v1730 = vadd.f32 0.0, %v1729
        %v1731 = vpop.f32.mrf.mxu0
        %v1732 = vpop.f32.mrf.mxu0
        %v1733 = vadd.f32 0.0, %v1732
        %v1734 = vpop.f32.mrf.mxu0
        %1735 = vdwg.mxu0
        %v1740 = vunpack.c.l.b16 %v1582
        %v1741 = vunpack.c.l.b16 %v1583
        %v1742 = vunpack.c.l.b16 %v1584
        %v1743 = vunpack.c.l.b16 %v1585
        %v1744 = vpack.c.b16 %v1741, %v1740
        %v1745 = vpack.c.b16 %v1743, %v1742
        %v1747 = vsel %vm1444, %v1744, 0
        %v1750 = vsel %vm1444, %v1745, 0
        %1752 = vmatprep.subr.bf16.mxu0 0
        %1753 = vmatpush1.bf16.msra.mxu0 0
        %1754 = vmatprep.subr.bf16.mxu0 0
        %1755 = vmatpush1.bf16.msra.mxu0 0
        %1756 = vmatprep.subr.bf16.mxu0 0
        %1757 = vmatpush1.bf16.msra.mxu0 0
        %1758 = vmatprep.subr.bf16.mxu0 0
        %1759 = vmatpush1.bf16.msra.mxu0 0
        %1760 = vmatprep.subr.bf16.mxu0 0
        %1761 = vmatpush1.bf16.msra.mxu0 0
        %1762 = vmatprep.subr.bf16.mxu0 0
        %1763 = vmatpush1.bf16.msra.mxu0 0
        %1764 = vmatprep.subr.bf16.mxu0 0
        %1765 = vmatpush1.bf16.msra.mxu0 0
        %1766 = vmatprep.subr.bf16.mxu0 0
        %1767 = vmatpush1.bf16.msra.mxu0 %v1568
        %1768 = vmatprep.subr.bf16.mxu0 0
        %1769 = vmatpush2.bf16.msra.mxu0 0
        %1770 = vmatprep.subr.bf16.mxu0 0
        %1771 = vmatpush2.bf16.msra.mxu0 0
        %1772 = vmatprep.subr.bf16.mxu0 0
        %1773 = vmatpush2.bf16.msra.mxu0 0
        %1774 = vmatprep.subr.bf16.mxu0 0
        %1775 = vmatpush2.bf16.msra.mxu0 0
        %1776 = vmatprep.subr.bf16.mxu0 0
        %1777 = vmatpush2.bf16.msra.mxu0 0
        %1778 = vmatprep.subr.bf16.mxu0 0
        %1779 = vmatpush2.bf16.msra.mxu0 0
        %1780 = vmatprep.subr.bf16.mxu0 0
        %1781 = vmatpush2.bf16.msra.mxu0 0
        %1782 = vmatprep.subr.bf16.mxu0 0
        %1783 = vmatpush2.bf16.msra.mxu0 0
        %1784 = vmatprep.mubr.bf16.mxu0 0
        %1785 = vmatmul.mubr.bf16.gmra.mxu0 %v1747
        %v1786 = vpop.f32.mrf.mxu0
        %v1787 = vadd.f32 0.0, %v1786
        %v1788 = vpop.f32.mrf.mxu0
        %v1789 = vpop.f32.mrf.mxu0
        %v1790 = vadd.f32 0.0, %v1789
        %v1791 = vpop.f32.mrf.mxu0
        %1792 = vmatprep.mubr.bf16.mxu0 0
        %1793 = vmatmul.mubr.bf16.gmra.mxu0 %v1750
        %v1794 = vpop.f32.mrf.mxu0
        %v1795 = vadd.f32 0.0, %v1794
        %v1796 = vpop.f32.mrf.mxu0
        %v1797 = vpop.f32.mrf.mxu0
        %v1798 = vadd.f32 0.0, %v1797
        %v1799 = vpop.f32.mrf.mxu0
        %1800 = vdwg.mxu0
        %v1805 = vunpack.c.l.b16 %v1586
        %v1806 = vunpack.c.l.b16 %v1587
        %v1807 = vunpack.c.l.b16 %v1588
        %v1808 = vunpack.c.l.b16 %v1589
        %v1809 = vpack.c.b16 %v1806, %v1805
        %v1810 = vpack.c.b16 %v1808, %v1807
        %v1812 = vsel %vm1444, %v1809, 0
        %v1815 = vsel %vm1444, %v1810, 0
        %1817 = vmatprep.subr.bf16.mxu0 0
        %1818 = vmatpush1.bf16.msra.mxu0 0
        %1819 = vmatprep.subr.bf16.mxu0 0
        %1820 = vmatpush1.bf16.msra.mxu0 0
        %1821 = vmatprep.subr.bf16.mxu0 0
        %1822 = vmatpush1.bf16.msra.mxu0 0
        %1823 = vmatprep.subr.bf16.mxu0 0
        %1824 = vmatpush1.bf16.msra.mxu0 0
        %1825 = vmatprep.subr.bf16.mxu0 0
        %1826 = vmatpush1.bf16.msra.mxu0 0
        %1827 = vmatprep.subr.bf16.mxu0 0
        %1828 = vmatpush1.bf16.msra.mxu0 0
        %1829 = vmatprep.subr.bf16.mxu0 0
        %1830 = vmatpush1.bf16.msra.mxu0 0
        %1831 = vmatprep.subr.bf16.mxu0 0
        %1832 = vmatpush1.bf16.msra.mxu0 %v1569
        %1833 = vmatprep.subr.bf16.mxu0 0
        %1834 = vmatpush2.bf16.msra.mxu0 0
        %1835 = vmatprep.subr.bf16.mxu0 0
        %1836 = vmatpush2.bf16.msra.mxu0 0
        %1837 = vmatprep.subr.bf16.mxu0 0
        %1838 = vmatpush2.bf16.msra.mxu0 0
        %1839 = vmatprep.subr.bf16.mxu0 0
        %1840 = vmatpush2.bf16.msra.mxu0 0
        %1841 = vmatprep.subr.bf16.mxu0 0
        %1842 = vmatpush2.bf16.msra.mxu0 0
        %1843 = vmatprep.subr.bf16.mxu0 0
        %1844 = vmatpush2.bf16.msra.mxu0 0
        %1845 = vmatprep.subr.bf16.mxu0 0
        %1846 = vmatpush2.bf16.msra.mxu0 0
        %1847 = vmatprep.subr.bf16.mxu0 0
        %1848 = vmatpush2.bf16.msra.mxu0 0
        %1849 = vmatprep.mubr.bf16.mxu0 0
        %1850 = vmatmul.mubr.bf16.gmra.mxu0 %v1812
        %v1851 = vpop.f32.mrf.mxu0
        %v1852 = vadd.f32 0.0, %v1851
        %v1853 = vpop.f32.mrf.mxu0
        %v1854 = vpop.f32.mrf.mxu0
        %v1855 = vadd.f32 0.0, %v1854
        %v1856 = vpop.f32.mrf.mxu0
        %1857 = vmatprep.mubr.bf16.mxu0 0
        %1858 = vmatmul.mubr.bf16.gmra.mxu0 %v1815
        %v1859 = vpop.f32.mrf.mxu0
        %v1860 = vadd.f32 0.0, %v1859
        %v1861 = vpop.f32.mrf.mxu0
        %v1862 = vpop.f32.mrf.mxu0
        %v1863 = vadd.f32 0.0, %v1862
        %v1864 = vpop.f32.mrf.mxu0
        %1865 = vdwg.mxu0
        %v1870 = vunpack.c.l.b16 %v1590
        %v1871 = vunpack.c.l.b16 %v1591
        %v1872 = vunpack.c.l.b16 %v1592
        %v1873 = vunpack.c.l.b16 %v1593
        %v1874 = vpack.c.b16 %v1871, %v1870
        %v1875 = vpack.c.b16 %v1873, %v1872
        %v1877 = vsel %vm1444, %v1874, 0
        %v1880 = vsel %vm1444, %v1875, 0
        %1882 = vmatprep.subr.bf16.mxu0 0
        %1883 = vmatpush1.bf16.msra.mxu0 0
        %1884 = vmatprep.subr.bf16.mxu0 0
        %1885 = vmatpush1.bf16.msra.mxu0 0
        %1886 = vmatprep.subr.bf16.mxu0 0
        %1887 = vmatpush1.bf16.msra.mxu0 0
        %1888 = vmatprep.subr.bf16.mxu0 0
        %1889 = vmatpush1.bf16.msra.mxu0 0
        %1890 = vmatprep.subr.bf16.mxu0 0
        %1891 = vmatpush1.bf16.msra.mxu0 0
        %1892 = vmatprep.subr.bf16.mxu0 0
        %1893 = vmatpush1.bf16.msra.mxu0 0
        %1894 = vmatprep.subr.bf16.mxu0 0
        %1895 = vmatpush1.bf16.msra.mxu0 0
        %1896 = vmatprep.subr.bf16.mxu0 0
        %1897 = vmatpush1.bf16.msra.mxu0 %v1570
        %1898 = vmatprep.subr.bf16.mxu0 0
        %1899 = vmatpush2.bf16.msra.mxu0 0
        %1900 = vmatprep.subr.bf16.mxu0 0
        %1901 = vmatpush2.bf16.msra.mxu0 0
        %1902 = vmatprep.subr.bf16.mxu0 0
        %1903 = vmatpush2.bf16.msra.mxu0 0
        %1904 = vmatprep.subr.bf16.mxu0 0
        %1905 = vmatpush2.bf16.msra.mxu0 0
        %1906 = vmatprep.subr.bf16.mxu0 0
        %1907 = vmatpush2.bf16.msra.mxu0 0
        %1908 = vmatprep.subr.bf16.mxu0 0
        %1909 = vmatpush2.bf16.msra.mxu0 0
        %1910 = vmatprep.subr.bf16.mxu0 0
        %1911 = vmatpush2.bf16.msra.mxu0 0
        %1912 = vmatprep.subr.bf16.mxu0 0
        %1913 = vmatpush2.bf16.msra.mxu0 0
        %1914 = vmatprep.mubr.bf16.mxu0 0
        %1915 = vmatmul.mubr.bf16.gmra.mxu0 %v1877
        %v1916 = vpop.f32.mrf.mxu0
        %v1917 = vadd.f32 0.0, %v1916
        %v1918 = vpop.f32.mrf.mxu0
        %v1919 = vpop.f32.mrf.mxu0
        %v1920 = vadd.f32 0.0, %v1919
        %v1921 = vpop.f32.mrf.mxu0
        %1922 = vmatprep.mubr.bf16.mxu0 0
        %1923 = vmatmul.mubr.bf16.gmra.mxu0 %v1880
        %v1924 = vpop.f32.mrf.mxu0
        %v1925 = vadd.f32 0.0, %v1924
        %v1926 = vpop.f32.mrf.mxu0
        %v1927 = vpop.f32.mrf.mxu0
        %v1928 = vadd.f32 0.0, %v1927
        %v1929 = vpop.f32.mrf.mxu0
        %1930 = vdwg.mxu0
        %v1935 = vunpack.c.l.b16 %v1594
        %v1936 = vunpack.c.l.b16 %v1595
        %v1937 = vunpack.c.l.b16 %v1596
        %v1938 = vunpack.c.l.b16 %v1597
        %v1939 = vpack.c.b16 %v1936, %v1935
        %v1940 = vpack.c.b16 %v1938, %v1937
        %v1942 = vsel %vm1444, %v1939, 0
        %v1945 = vsel %vm1444, %v1940, 0
        %1947 = vmatprep.subr.bf16.mxu0 0
        %1948 = vmatpush1.bf16.msra.mxu0 0
        %1949 = vmatprep.subr.bf16.mxu0 0
        %1950 = vmatpush1.bf16.msra.mxu0 0
        %1951 = vmatprep.subr.bf16.mxu0 0
        %1952 = vmatpush1.bf16.msra.mxu0 0
        %1953 = vmatprep.subr.bf16.mxu0 0
        %1954 = vmatpush1.bf16.msra.mxu0 0
        %1955 = vmatprep.subr.bf16.mxu0 0
        %1956 = vmatpush1.bf16.msra.mxu0 0
        %1957 = vmatprep.subr.bf16.mxu0 0
        %1958 = vmatpush1.bf16.msra.mxu0 0
        %1959 = vmatprep.subr.bf16.mxu0 0
        %1960 = vmatpush1.bf16.msra.mxu0 0
        %1961 = vmatprep.subr.bf16.mxu0 0
        %1962 = vmatpush1.bf16.msra.mxu0 %v1571
        %1963 = vmatprep.subr.bf16.mxu0 0
        %1964 = vmatpush2.bf16.msra.mxu0 0
        %1965 = vmatprep.subr.bf16.mxu0 0
        %1966 = vmatpush2.bf16.msra.mxu0 0
        %1967 = vmatprep.subr.bf16.mxu0 0
        %1968 = vmatpush2.bf16.msra.mxu0 0
        %1969 = vmatprep.subr.bf16.mxu0 0
        %1970 = vmatpush2.bf16.msra.mxu0 0
        %1971 = vmatprep.subr.bf16.mxu0 0
        %1972 = vmatpush2.bf16.msra.mxu0 0
        %1973 = vmatprep.subr.bf16.mxu0 0
        %1974 = vmatpush2.bf16.msra.mxu0 0
        %1975 = vmatprep.subr.bf16.mxu0 0
        %1976 = vmatpush2.bf16.msra.mxu0 0
        %1977 = vmatprep.subr.bf16.mxu0 0
        %1978 = vmatpush2.bf16.msra.mxu0 0
        %1979 = vmatprep.mubr.bf16.mxu0 0
        %1980 = vmatmul.mubr.bf16.gmra.mxu0 %v1942
        %v1981 = vpop.f32.mrf.mxu0
        %v1982 = vadd.f32 0.0, %v1981
        %v1983 = vpop.f32.mrf.mxu0
        %v1984 = vpop.f32.mrf.mxu0
        %v1985 = vadd.f32 0.0, %v1984
        %v1986 = vpop.f32.mrf.mxu0
        %1987 = vmatprep.mubr.bf16.mxu0 0
        %1988 = vmatmul.mubr.bf16.gmra.mxu0 %v1945
        %v1989 = vpop.f32.mrf.mxu0
        %v1990 = vadd.f32 0.0, %v1989
        %v1991 = vpop.f32.mrf.mxu0
        %v1992 = vpop.f32.mrf.mxu0
        %v1993 = vadd.f32 0.0, %v1992
        %v1994 = vpop.f32.mrf.mxu0
        %1995 = vdwg.mxu0
        %v2000 = vunpack.c.l.b16 %v1598
        %v2001 = vunpack.c.l.b16 %v1599
        %v2002 = vunpack.c.l.b16 %v1600
        %v2003 = vunpack.c.l.b16 %v1601
        %v2004 = vpack.c.b16 %v2001, %v2000
        %v2005 = vpack.c.b16 %v2003, %v2002
        %v2007 = vsel %vm1444, %v2004, 0
        %v2010 = vsel %vm1444, %v2005, 0
        %2012 = vmatprep.subr.bf16.mxu0 0
        %2013 = vmatpush1.bf16.msra.mxu0 0
        %2014 = vmatprep.subr.bf16.mxu0 0
        %2015 = vmatpush1.bf16.msra.mxu0 0
        %2016 = vmatprep.subr.bf16.mxu0 0
        %2017 = vmatpush1.bf16.msra.mxu0 0
        %2018 = vmatprep.subr.bf16.mxu0 0
        %2019 = vmatpush1.bf16.msra.mxu0 0
        %2020 = vmatprep.subr.bf16.mxu0 0
        %2021 = vmatpush1.bf16.msra.mxu0 0
        %2022 = vmatprep.subr.bf16.mxu0 0
        %2023 = vmatpush1.bf16.msra.mxu0 0
        %2024 = vmatprep.subr.bf16.mxu0 0
        %2025 = vmatpush1.bf16.msra.mxu0 0
        %2026 = vmatprep.subr.bf16.mxu0 0
        %2027 = vmatpush1.bf16.msra.mxu0 %v1572
        %2028 = vmatprep.subr.bf16.mxu0 0
        %2029 = vmatpush2.bf16.msra.mxu0 0
        %2030 = vmatprep.subr.bf16.mxu0 0
        %2031 = vmatpush2.bf16.msra.mxu0 0
        %2032 = vmatprep.subr.bf16.mxu0 0
        %2033 = vmatpush2.bf16.msra.mxu0 0
        %2034 = vmatprep.subr.bf16.mxu0 0
        %2035 = vmatpush2.bf16.msra.mxu0 0
        %2036 = vmatprep.subr.bf16.mxu0 0
        %2037 = vmatpush2.bf16.msra.mxu0 0
        %2038 = vmatprep.subr.bf16.mxu0 0
        %2039 = vmatpush2.bf16.msra.mxu0 0
        %2040 = vmatprep.subr.bf16.mxu0 0
        %2041 = vmatpush2.bf16.msra.mxu0 0
        %2042 = vmatprep.subr.bf16.mxu0 0
        %2043 = vmatpush2.bf16.msra.mxu0 0
        %2044 = vmatprep.mubr.bf16.mxu0 0
        %2045 = vmatmul.mubr.bf16.gmra.mxu0 %v2007
        %v2046 = vpop.f32.mrf.mxu0
        %v2047 = vadd.f32 0.0, %v2046
        %v2048 = vpop.f32.mrf.mxu0
        %v2049 = vpop.f32.mrf.mxu0
        %v2050 = vadd.f32 0.0, %v2049
        %v2051 = vpop.f32.mrf.mxu0
        %2052 = vmatprep.mubr.bf16.mxu0 0
        %2053 = vmatmul.mubr.bf16.gmra.mxu0 %v2010
        %v2054 = vpop.f32.mrf.mxu0
        %v2055 = vadd.f32 0.0, %v2054
        %v2056 = vpop.f32.mrf.mxu0
        %v2057 = vpop.f32.mrf.mxu0
        %v2058 = vadd.f32 0.0, %v2057
        %v2059 = vpop.f32.mrf.mxu0
        %2060 = vdwg.mxu0
        %v2065 = vunpack.c.l.b16 %v1602
        %v2066 = vunpack.c.l.b16 %v1603
        %v2067 = vunpack.c.l.b16 %v1604
        %v2068 = vunpack.c.l.b16 %v1605
        %v2069 = vpack.c.b16 %v2066, %v2065
        %v2070 = vpack.c.b16 %v2068, %v2067
        %v2072 = vsel %vm1444, %v2069, 0
        %v2075 = vsel %vm1444, %v2070, 0
        %2077 = vmatprep.subr.bf16.mxu0 0
        %2078 = vmatpush1.bf16.msra.mxu0 0
        %2079 = vmatprep.subr.bf16.mxu0 0
        %2080 = vmatpush1.bf16.msra.mxu0 0
        %2081 = vmatprep.subr.bf16.mxu0 0
        %2082 = vmatpush1.bf16.msra.mxu0 0
        %2083 = vmatprep.subr.bf16.mxu0 0
        %2084 = vmatpush1.bf16.msra.mxu0 0
        %2085 = vmatprep.subr.bf16.mxu0 0
        %2086 = vmatpush1.bf16.msra.mxu0 0
        %2087 = vmatprep.subr.bf16.mxu0 0
        %2088 = vmatpush1.bf16.msra.mxu0 0
        %2089 = vmatprep.subr.bf16.mxu0 0
        %2090 = vmatpush1.bf16.msra.mxu0 0
        %2091 = vmatprep.subr.bf16.mxu0 0
        %2092 = vmatpush1.bf16.msra.mxu0 %v1573
        %2093 = vmatprep.subr.bf16.mxu0 0
        %2094 = vmatpush2.bf16.msra.mxu0 0
        %2095 = vmatprep.subr.bf16.mxu0 0
        %2096 = vmatpush2.bf16.msra.mxu0 0
        %2097 = vmatprep.subr.bf16.mxu0 0
        %2098 = vmatpush2.bf16.msra.mxu0 0
        %2099 = vmatprep.subr.bf16.mxu0 0
        %2100 = vmatpush2.bf16.msra.mxu0 0
        %2101 = vmatprep.subr.bf16.mxu0 0
        %2102 = vmatpush2.bf16.msra.mxu0 0
        %2103 = vmatprep.subr.bf16.mxu0 0
        %2104 = vmatpush2.bf16.msra.mxu0 0
        %2105 = vmatprep.subr.bf16.mxu0 0
        %2106 = vmatpush2.bf16.msra.mxu0 0
        %2107 = vmatprep.subr.bf16.mxu0 0
        %2108 = vmatpush2.bf16.msra.mxu0 0
        %2109 = vmatprep.mubr.bf16.mxu0 0
        %2110 = vmatmul.mubr.bf16.gmra.mxu0 %v2072
        %v2111 = vpop.f32.mrf.mxu0
        %v2112 = vadd.f32 0.0, %v2111
        %v2113 = vpop.f32.mrf.mxu0
        %v2114 = vpop.f32.mrf.mxu0
        %v2115 = vadd.f32 0.0, %v2114
        %v2116 = vpop.f32.mrf.mxu0
        %2117 = vmatprep.mubr.bf16.mxu0 0
        %2118 = vmatmul.mubr.bf16.gmra.mxu0 %v2075
        %v2119 = vpop.f32.mrf.mxu0
        %v2120 = vadd.f32 0.0, %v2119
        %v2121 = vpop.f32.mrf.mxu0
        %v2122 = vpop.f32.mrf.mxu0
        %v2123 = vadd.f32 0.0, %v2122
        %v2124 = vpop.f32.mrf.mxu0
        %2125 = vdwg.mxu0
        %vm2126 = vcmask 261120
        %v2127 = vsel %vm2126, %v1657, 0.0
        %2128 = vadd.xlane.f32.xlu0 %v2127
        %v2129 = vpop.xlane.xlu0 %2128
        %v2130 = vsel %vm2126, %v1660, 0.0
        %2131 = vadd.xlane.f32.xlu0 %v2130
        %v2132 = vpop.xlane.xlu0 %2131
        %v2133 = vsel %vm2126, %v1665, 0.0
        %2134 = vadd.xlane.f32.xlu0 %v2133
        %v2135 = vpop.xlane.xlu0 %2134
        %v2136 = vsel %vm2126, %v1668, 0.0
        %2137 = vadd.xlane.f32.xlu0 %v2136
        %v2138 = vpop.xlane.xlu0 %2137
        %v2139 = vsel %vm2126, %v1722, 0.0
        %2140 = vadd.xlane.f32.xlu0 %v2139
        %v2141 = vpop.xlane.xlu0 %2140
        %v2142 = vsel %vm2126, %v1725, 0.0
        %2143 = vadd.xlane.f32.xlu0 %v2142
        %v2144 = vpop.xlane.xlu0 %2143
        %v2145 = vsel %vm2126, %v1730, 0.0
        %2146 = vadd.xlane.f32.xlu0 %v2145
        %v2147 = vpop.xlane.xlu0 %2146
        %v2148 = vsel %vm2126, %v1733, 0.0
        %2149 = vadd.xlane.f32.xlu0 %v2148
        %v2150 = vpop.xlane.xlu0 %2149
        %v2151 = vsel %vm2126, %v1787, 0.0
        %2152 = vadd.xlane.f32.xlu0 %v2151
        %v2153 = vpop.xlane.xlu0 %2152
        %v2154 = vsel %vm2126, %v1790, 0.0
        %2155 = vadd.xlane.f32.xlu0 %v2154
        %v2156 = vpop.xlane.xlu0 %2155
        %v2157 = vsel %vm2126, %v1795, 0.0
        %2158 = vadd.xlane.f32.xlu0 %v2157
        %v2159 = vpop.xlane.xlu0 %2158
        %v2160 = vsel %vm2126, %v1798, 0.0
        %2161 = vadd.xlane.f32.xlu0 %v2160
        %v2162 = vpop.xlane.xlu0 %2161
        %v2163 = vsel %vm2126, %v1852, 0.0
        %2164 = vadd.xlane.f32.xlu0 %v2163
        %v2165 = vpop.xlane.xlu0 %2164
        %v2166 = vsel %vm2126, %v1855, 0.0
        %2167 = vadd.xlane.f32.xlu0 %v2166
        %v2168 = vpop.xlane.xlu0 %2167
        %v2169 = vsel %vm2126, %v1860, 0.0
        %2170 = vadd.xlane.f32.xlu0 %v2169
        %v2171 = vpop.xlane.xlu0 %2170
        %v2172 = vsel %vm2126, %v1863, 0.0
        %2173 = vadd.xlane.f32.xlu0 %v2172
        %v2174 = vpop.xlane.xlu0 %2173
        %v2175 = vsel %vm2126, %v1917, 0.0
        %2176 = vadd.xlane.f32.xlu0 %v2175
        %v2177 = vpop.xlane.xlu0 %2176
        %v2178 = vsel %vm2126, %v1920, 0.0
        %2179 = vadd.xlane.f32.xlu0 %v2178
        %v2180 = vpop.xlane.xlu0 %2179
        %v2181 = vsel %vm2126, %v1925, 0.0
        %2182 = vadd.xlane.f32.xlu0 %v2181
        %v2183 = vpop.xlane.xlu0 %2182
        %v2184 = vsel %vm2126, %v1928, 0.0
        %2185 = vadd.xlane.f32.xlu0 %v2184
        %v2186 = vpop.xlane.xlu0 %2185
        %v2187 = vsel %vm2126, %v1982, 0.0
        %2188 = vadd.xlane.f32.xlu0 %v2187
        %v2189 = vpop.xlane.xlu0 %2188
        %v2190 = vsel %vm2126, %v1985, 0.0
        %2191 = vadd.xlane.f32.xlu0 %v2190
        %v2192 = vpop.xlane.xlu0 %2191
        %v2193 = vsel %vm2126, %v1990, 0.0
        %2194 = vadd.xlane.f32.xlu0 %v2193
        %v2195 = vpop.xlane.xlu0 %2194
        %v2196 = vsel %vm2126, %v1993, 0.0
        %2197 = vadd.xlane.f32.xlu0 %v2196
        %v2198 = vpop.xlane.xlu0 %2197
        %v2199 = vsel %vm2126, %v2047, 0.0
        %2200 = vadd.xlane.f32.xlu0 %v2199
        %v2201 = vpop.xlane.xlu0 %2200
        %v2202 = vsel %vm2126, %v2050, 0.0
        %2203 = vadd.xlane.f32.xlu0 %v2202
        %v2204 = vpop.xlane.xlu0 %2203
        %v2205 = vsel %vm2126, %v2055, 0.0
        %2206 = vadd.xlane.f32.xlu0 %v2205
        %v2207 = vpop.xlane.xlu0 %2206
        %v2208 = vsel %vm2126, %v2058, 0.0
        %2209 = vadd.xlane.f32.xlu0 %v2208
        %v2210 = vpop.xlane.xlu0 %2209
        %v2211 = vsel %vm2126, %v2112, 0.0
        %2212 = vadd.xlane.f32.xlu0 %v2211
        %v2213 = vpop.xlane.xlu0 %2212
        %v2214 = vsel %vm2126, %v2115, 0.0
        %2215 = vadd.xlane.f32.xlu0 %v2214
        %v2216 = vpop.xlane.xlu0 %2215
        %v2217 = vsel %vm2126, %v2120, 0.0
        %2218 = vadd.xlane.f32.xlu0 %v2217
        %v2219 = vpop.xlane.xlu0 %2218
        %v2220 = vsel %vm2126, %v2123, 0.0
        %2221 = vadd.xlane.f32.xlu0 %v2220
        %v2222 = vpop.xlane.xlu0 %2221
        %v2223 = vrcp.pop 32.0
        %v2224 = vmul.f32 %v2129, %v2223
        %v2225 = vmul.f32 %v2132, %v2223
        %v2226 = vmul.f32 %v2135, %v2223
        %v2227 = vmul.f32 %v2138, %v2223
        %v2228 = vmul.f32 %v2141, %v2223
        %v2229 = vmul.f32 %v2144, %v2223
        %v2230 = vmul.f32 %v2147, %v2223
        %v2231 = vmul.f32 %v2150, %v2223
        %v2232 = vmul.f32 %v2153, %v2223
        %v2233 = vmul.f32 %v2156, %v2223
        %v2234 = vmul.f32 %v2159, %v2223
        %v2235 = vmul.f32 %v2162, %v2223
        %v2236 = vmul.f32 %v2165, %v2223
        %v2237 = vmul.f32 %v2168, %v2223
        %v2238 = vmul.f32 %v2171, %v2223
        %v2239 = vmul.f32 %v2174, %v2223
        %v2240 = vmul.f32 %v2177, %v2223
        %v2241 = vmul.f32 %v2180, %v2223
        %v2242 = vmul.f32 %v2183, %v2223
        %v2243 = vmul.f32 %v2186, %v2223
        %v2244 = vmul.f32 %v2189, %v2223
        %v2245 = vmul.f32 %v2192, %v2223
        %v2246 = vmul.f32 %v2195, %v2223
        %v2247 = vmul.f32 %v2198, %v2223
        %v2248 = vmul.f32 %v2201, %v2223
        %v2249 = vmul.f32 %v2204, %v2223
        %v2250 = vmul.f32 %v2207, %v2223
        %v2251 = vmul.f32 %v2210, %v2223
        %v2252 = vmul.f32 %v2213, %v2223
        %v2253 = vmul.f32 %v2216, %v2223
        %v2254 = vmul.f32 %v2219, %v2223
        %v2255 = vmul.f32 %v2222, %v2223
        %v2288 = vlaneseq
        %v2289 = vand.u32 %v2288, 127
        %v2290 = vlaneseq
        %v2291 = vshrl.u32 %v2290, 7
        %v2292 = vsub.s32 %v2289, %v2291
        %v2293 = vrot.slane %v2224, %v2292
        %v2294 = vadd.s32 %v2289, 4294967288
        %v2295 = vlaneseq
        %v2296 = vshrl.u32 %v2295, 7
        %v2297 = vsub.s32 %v2294, %v2296
        %v2298 = vrot.slane %v2225, %v2297
        %vm2299 = vcmask 130112
        %v2300 = vsel %vm2299, %v2298, %v2293
        %v2301 = vadd.s32 %v2289, 4294967280
        %v2302 = vlaneseq
        %v2303 = vshrl.u32 %v2302, 7
        %v2304 = vsub.s32 %v2301, %v2303
        %v2305 = vrot.slane %v2226, %v2304
        %vm2306 = vcmask 195712
        %v2307 = vsel %vm2306, %v2305, %v2300
        %v2308 = vadd.s32 %v2289, 4294967272
        %v2309 = vlaneseq
        %v2310 = vshrl.u32 %v2309, 7
        %v2311 = vsub.s32 %v2308, %v2310
        %v2312 = vrot.slane %v2227, %v2311
        %vm2313 = vcmask 261312
        %v2314 = vsel %vm2313, %v2312, %v2307
        %v2315 = vlaneseq
        %v2316 = vshrl.u32 %v2315, 7
        %v2317 = vsub.s32 %v2289, %v2316
        %v2318 = vrot.slane %v2228, %v2317
        %v2319 = vlaneseq
        %v2320 = vshrl.u32 %v2319, 7
        %v2321 = vsub.s32 %v2294, %v2320
        %v2322 = vrot.slane %v2229, %v2321
        %v2323 = vsel %vm2299, %v2322, %v2318
        %v2324 = vlaneseq
        %v2325 = vshrl.u32 %v2324, 7
        %v2326 = vsub.s32 %v2301, %v2325
        %v2327 = vrot.slane %v2230, %v2326
        %v2328 = vsel %vm2306, %v2327, %v2323
        %v2329 = vlaneseq
        %v2330 = vshrl.u32 %v2329, 7
        %v2331 = vsub.s32 %v2308, %v2330
        %v2332 = vrot.slane %v2231, %v2331
        %v2333 = vsel %vm2313, %v2332, %v2328
        %v2334 = vlaneseq
        %v2335 = vshrl.u32 %v2334, 7
        %v2336 = vsub.s32 %v2289, %v2335
        %v2337 = vrot.slane %v2232, %v2336
        %v2338 = vlaneseq
        %v2339 = vshrl.u32 %v2338, 7
        %v2340 = vsub.s32 %v2294, %v2339
        %v2341 = vrot.slane %v2233, %v2340
        %v2342 = vsel %vm2299, %v2341, %v2337
        %v2343 = vlaneseq
        %v2344 = vshrl.u32 %v2343, 7
        %v2345 = vsub.s32 %v2301, %v2344
        %v2346 = vrot.slane %v2234, %v2345
        %v2347 = vsel %vm2306, %v2346, %v2342
        %v2348 = vlaneseq
        %v2349 = vshrl.u32 %v2348, 7
        %v2350 = vsub.s32 %v2308, %v2349
        %v2351 = vrot.slane %v2235, %v2350
        %v2352 = vsel %vm2313, %v2351, %v2347
        %v2353 = vlaneseq
        %v2354 = vshrl.u32 %v2353, 7
        %v2355 = vsub.s32 %v2289, %v2354
        %v2356 = vrot.slane %v2236, %v2355
        %v2357 = vlaneseq
        %v2358 = vshrl.u32 %v2357, 7
        %v2359 = vsub.s32 %v2294, %v2358
        %v2360 = vrot.slane %v2237, %v2359
        %v2361 = vsel %vm2299, %v2360, %v2356
        %v2362 = vlaneseq
        %v2363 = vshrl.u32 %v2362, 7
        %v2364 = vsub.s32 %v2301, %v2363
        %v2365 = vrot.slane %v2238, %v2364
        %v2366 = vsel %vm2306, %v2365, %v2361
        %v2367 = vlaneseq
        %v2368 = vshrl.u32 %v2367, 7
        %v2369 = vsub.s32 %v2308, %v2368
        %v2370 = vrot.slane %v2239, %v2369
        %v2371 = vsel %vm2313, %v2370, %v2366
        %v2372 = vlaneseq
        %v2373 = vshrl.u32 %v2372, 7
        %v2374 = vsub.s32 %v2289, %v2373
        %v2375 = vrot.slane %v2240, %v2374
        %v2376 = vlaneseq
        %v2377 = vshrl.u32 %v2376, 7
        %v2378 = vsub.s32 %v2294, %v2377
        %v2379 = vrot.slane %v2241, %v2378
        %v2380 = vsel %vm2299, %v2379, %v2375
        %v2381 = vlaneseq
        %v2382 = vshrl.u32 %v2381, 7
        %v2383 = vsub.s32 %v2301, %v2382
        %v2384 = vrot.slane %v2242, %v2383
        %v2385 = vsel %vm2306, %v2384, %v2380
        %v2386 = vlaneseq
        %v2387 = vshrl.u32 %v2386, 7
        %v2388 = vsub.s32 %v2308, %v2387
        %v2389 = vrot.slane %v2243, %v2388
        %v2390 = vsel %vm2313, %v2389, %v2385
        %v2391 = vlaneseq
        %v2392 = vshrl.u32 %v2391, 7
        %v2393 = vsub.s32 %v2289, %v2392
        %v2394 = vrot.slane %v2244, %v2393
        %v2395 = vlaneseq
        %v2396 = vshrl.u32 %v2395, 7
        %v2397 = vsub.s32 %v2294, %v2396
        %v2398 = vrot.slane %v2245, %v2397
        %v2399 = vsel %vm2299, %v2398, %v2394
        %v2400 = vlaneseq
        %v2401 = vshrl.u32 %v2400, 7
        %v2402 = vsub.s32 %v2301, %v2401
        %v2403 = vrot.slane %v2246, %v2402
        %v2404 = vsel %vm2306, %v2403, %v2399
        %v2405 = vlaneseq
        %v2406 = vshrl.u32 %v2405, 7
        %v2407 = vsub.s32 %v2308, %v2406
        %v2408 = vrot.slane %v2247, %v2407
        %v2409 = vsel %vm2313, %v2408, %v2404
        %v2410 = vlaneseq
        %v2411 = vshrl.u32 %v2410, 7
        %v2412 = vsub.s32 %v2289, %v2411
        %v2413 = vrot.slane %v2248, %v2412
        %v2414 = vlaneseq
        %v2415 = vshrl.u32 %v2414, 7
        %v2416 = vsub.s32 %v2294, %v2415
        %v2417 = vrot.slane %v2249, %v2416
        %v2418 = vsel %vm2299, %v2417, %v2413
        %v2419 = vlaneseq
        %v2420 = vshrl.u32 %v2419, 7
        %v2421 = vsub.s32 %v2301, %v2420
        %v2422 = vrot.slane %v2250, %v2421
        %v2423 = vsel %vm2306, %v2422, %v2418
        %v2424 = vlaneseq
        %v2425 = vshrl.u32 %v2424, 7
        %v2426 = vsub.s32 %v2308, %v2425
        %v2427 = vrot.slane %v2251, %v2426
        %v2428 = vsel %vm2313, %v2427, %v2423
        %v2429 = vlaneseq
        %v2430 = vshrl.u32 %v2429, 7
        %v2431 = vsub.s32 %v2289, %v2430
        %v2432 = vrot.slane %v2252, %v2431
        %v2433 = vlaneseq
        %v2434 = vshrl.u32 %v2433, 7
        %v2435 = vsub.s32 %v2294, %v2434
        %v2436 = vrot.slane %v2253, %v2435
        %v2437 = vsel %vm2299, %v2436, %v2432
        %v2438 = vlaneseq
        %v2439 = vshrl.u32 %v2438, 7
        %v2440 = vsub.s32 %v2301, %v2439
        %v2441 = vrot.slane %v2254, %v2440
        %v2442 = vsel %vm2306, %v2441, %v2437
        %v2443 = vlaneseq
        %v2444 = vshrl.u32 %v2443, 7
        %v2445 = vsub.s32 %v2308, %v2444
        %v2446 = vrot.slane %v2255, %v2445
        %v2447 = vsel %vm2313, %v2446, %v2442
        %vm2448 = vcmask 1041409
        %v2449 = vsel %vm2448, %v2333, %v2314
        %vm2450 = vcmask 1042434
        %v2451 = vsel %vm2450, %v2352, %v2449
        %vm2452 = vcmask 1043459
        %v2453 = vsel %vm2452, %v2371, %v2451
        %vm2454 = vcmask 1044484
        %v2455 = vsel %vm2454, %v2390, %v2453
        %vm2456 = vcmask 1045509
        %v2457 = vsel %vm2456, %v2409, %v2455
        %vm2458 = vcmask 1046534
        %v2459 = vsel %vm2458, %v2428, %v2457
        %vm2460 = vcmask 1047559
        %v2461 = vsel %vm2460, %v2447, %v2459
        %v2463 = vsel %vm2126, %v2461, 0.0
        %2464 = vadd.xlane.f32.xlu0 %v2463
        %v2465 = vpop.xlane.xlu0 %2464
        %v2466 = vmul.f32 %v2465, %v2223
        %v2467 = vld [vmem:[%s10] sm:$0xf]
        %v2468 = vld [vmem:[%s11] sm:$0xf]
        %vm2469 = vcmask 64512
        %v2471 = vsel %vm2469, %v2467, 0
        %2473 = vmatprep.subr.mxu0 0.0
        %2474 = vmatpush1.msra.mxu0 0.0
        %2475 = vmatprep.subr.mxu0 0.0
        %2476 = vmatpush1.msra.mxu0 0.0
        %2477 = vmatprep.subr.mxu0 0.0
        %2478 = vmatpush1.msra.mxu0 0.0
        %2479 = vmatprep.subr.mxu0 0.0
        %2480 = vmatpush1.msra.mxu0 0.0
        %2481 = vmatprep.subr.mxu0 0.0
        %2482 = vmatpush1.msra.mxu0 0.0
        %2483 = vmatprep.subr.mxu0 0.0
        %2484 = vmatpush1.msra.mxu0 0.0
        %2485 = vmatprep.subr.mxu0 0.0
        %2486 = vmatpush1.msra.mxu0 0.0
        %2487 = vmatprep.subr.mxu0 0.0
        %2488 = vmatpush1.msra.mxu0 0.0
        %2489 = vmatprep.subr.mxu0 0.0
        %2490 = vmatpush1.msra.mxu0 0.0
        %2491 = vmatprep.subr.mxu0 0.0
        %2492 = vmatpush1.msra.mxu0 0.0
        %2493 = vmatprep.subr.mxu0 0.0
        %2494 = vmatpush1.msra.mxu0 0.0
        %2495 = vmatprep.subr.mxu0 0.0
        %2496 = vmatpush1.msra.mxu0 0.0
        %2497 = vmatprep.subr.mxu0 0.0
        %2498 = vmatpush1.msra.mxu0 0.0
        %2499 = vmatprep.subr.mxu0 0.0
        %2500 = vmatpush1.msra.mxu0 0.0
        %2501 = vmatprep.subr.mxu0 0.0
        %2502 = vmatpush1.msra.mxu0 0.0
        %2503 = vmatprep.subr.mxu0 0.0
        %2504 = vmatpush1.msra.mxu0 %v2466
        %2505 = vmatprep.subr.mxu0 0.0
        %2506 = vmatpush2.msra.mxu0 0.0
        %2507 = vmatprep.subr.mxu0 0.0
        %2508 = vmatpush2.msra.mxu0 0.0
        %2509 = vmatprep.subr.mxu0 0.0
        %2510 = vmatpush2.msra.mxu0 0.0
        %2511 = vmatprep.subr.mxu0 0.0
        %2512 = vmatpush2.msra.mxu0 0.0
        %2513 = vmatprep.subr.mxu0 0.0
        %2514 = vmatpush2.msra.mxu0 0.0
        %2515 = vmatprep.subr.mxu0 0.0
        %2516 = vmatpush2.msra.mxu0 0.0
        %2517 = vmatprep.subr.mxu0 0.0
        %2518 = vmatpush2.msra.mxu0 0.0
        %2519 = vmatprep.subr.mxu0 0.0
        %2520 = vmatpush2.msra.mxu0 0.0
        %2521 = vmatprep.subr.mxu0 0.0
        %2522 = vmatpush2.msra.mxu0 0.0
        %2523 = vmatprep.subr.mxu0 0.0
        %2524 = vmatpush2.msra.mxu0 0.0
        %2525 = vmatprep.subr.mxu0 0.0
        %2526 = vmatpush2.msra.mxu0 0.0
        %2527 = vmatprep.subr.mxu0 0.0
        %2528 = vmatpush2.msra.mxu0 0.0
        %2529 = vmatprep.subr.mxu0 0.0
        %2530 = vmatpush2.msra.mxu0 0.0
        %2531 = vmatprep.subr.mxu0 0.0
        %2532 = vmatpush2.msra.mxu0 0.0
        %2533 = vmatprep.subr.mxu0 0.0
        %2534 = vmatpush2.msra.mxu0 0.0
        %2535 = vmatprep.subr.mxu0 0.0
        %2536 = vmatpush2.msra.mxu0 0.0
        %2537 = vmatprep.mubr.f32.mxu0 0.0
        %2538 = vmatmul.mubr.f32.gmra.mxu0 %v2471
        %v2539 = vpop.f32.mrf.mxu0
        %v2540 = vadd.f32 %v2468, %v2539
        %v2541 = vpop.f32.mrf.mxu0
        %2542 = vdwg.mxu0
        %v2543 = vmax.f32 %v2540, 0.0
        %v2544 = vld [vmem:[%s12] sm:$0xff]
        %v2545 = vld [vmem:[%s13] sm:$0xff]
        %vm2546 = vcmask 31744
        %v2548 = vsel %vm2546, %v2544, 0
        %v2551 = vsel %vm606, %v2543, 0
        %2553 = vmatprep.subr.mxu0 0.0
        %2554 = vmatpush1.msra.mxu0 0.0
        %2555 = vmatprep.subr.mxu0 0.0
        %2556 = vmatpush1.msra.mxu0 0.0
        %2557 = vmatprep.subr.mxu0 0.0
        %2558 = vmatpush1.msra.mxu0 0.0
        %2559 = vmatprep.subr.mxu0 0.0
        %2560 = vmatpush1.msra.mxu0 0.0
        %2561 = vmatprep.subr.mxu0 0.0
        %2562 = vmatpush1.msra.mxu0 0.0
        %2563 = vmatprep.subr.mxu0 0.0
        %2564 = vmatpush1.msra.mxu0 0.0
        %2565 = vmatprep.subr.mxu0 0.0
        %2566 = vmatpush1.msra.mxu0 0.0
        %2567 = vmatprep.subr.mxu0 0.0
        %2568 = vmatpush1.msra.mxu0 0.0
        %2569 = vmatprep.subr.mxu0 0.0
        %2570 = vmatpush1.msra.mxu0 0.0
        %2571 = vmatprep.subr.mxu0 0.0
        %2572 = vmatpush1.msra.mxu0 0.0
        %2573 = vmatprep.subr.mxu0 0.0
        %2574 = vmatpush1.msra.mxu0 0.0
        %2575 = vmatprep.subr.mxu0 0.0
        %2576 = vmatpush1.msra.mxu0 0.0
        %2577 = vmatprep.subr.mxu0 0.0
        %2578 = vmatpush1.msra.mxu0 0.0
        %2579 = vmatprep.subr.mxu0 0.0
        %2580 = vmatpush1.msra.mxu0 0.0
        %2581 = vmatprep.subr.mxu0 0.0
        %2582 = vmatpush1.msra.mxu0 0.0
        %2583 = vmatprep.subr.mxu0 0.0
        %2584 = vmatpush1.msra.mxu0 %v2551
        %2585 = vmatprep.subr.mxu0 0.0
        %2586 = vmatpush2.msra.mxu0 0.0
        %2587 = vmatprep.subr.mxu0 0.0
        %2588 = vmatpush2.msra.mxu0 0.0
        %2589 = vmatprep.subr.mxu0 0.0
        %2590 = vmatpush2.msra.mxu0 0.0
        %2591 = vmatprep.subr.mxu0 0.0
        %2592 = vmatpush2.msra.mxu0 0.0
        %2593 = vmatprep.subr.mxu0 0.0
        %2594 = vmatpush2.msra.mxu0 0.0
        %2595 = vmatprep.subr.mxu0 0.0
        %2596 = vmatpush2.msra.mxu0 0.0
        %2597 = vmatprep.subr.mxu0 0.0
        %2598 = vmatpush2.msra.mxu0 0.0
        %2599 = vmatprep.subr.mxu0 0.0
        %2600 = vmatpush2.msra.mxu0 0.0
        %2601 = vmatprep.subr.mxu0 0.0
        %2602 = vmatpush2.msra.mxu0 0.0
        %2603 = vmatprep.subr.mxu0 0.0
        %2604 = vmatpush2.msra.mxu0 0.0
        %2605 = vmatprep.subr.mxu0 0.0
        %2606 = vmatpush2.msra.mxu0 0.0
        %2607 = vmatprep.subr.mxu0 0.0
        %2608 = vmatpush2.msra.mxu0 0.0
        %2609 = vmatprep.subr.mxu0 0.0
        %2610 = vmatpush2.msra.mxu0 0.0
        %2611 = vmatprep.subr.mxu0 0.0
        %2612 = vmatpush2.msra.mxu0 0.0
        %2613 = vmatprep.subr.mxu0 0.0
        %2614 = vmatpush2.msra.mxu0 0.0
        %2615 = vmatprep.subr.mxu0 0.0
        %2616 = vmatpush2.msra.mxu0 0.0
        %2617 = vmatprep.mubr.f32.mxu0 0.0
        %2618 = vmatmul.mubr.f32.gmra.mxu0 %v2548
        %v2619 = vpop.f32.mrf.mxu0
        %v2620 = vadd.f32 %v2545, %v2619
        %v2621 = vpop.f32.mrf.mxu0
        %2622 = vdwg.mxu0
        %v2623 = vxor.u32 %v2620, 2147483648
        %v2624 = vmul.f32 %v2623, 1.442695
        %v2625 = vpow.pop %v2624
        %v2626 = vadd.f32 %v2625, 1.0
        %v2627 = vrcp.pop %v2626
        %v2628 = vmul.f32 1.0, %v2627
        %v2629 = vld [vmem:[%s8] sm:$0x1]
        %v2630 = vld [vmem:[%s8 + $0x1] sm:$0x1]
        %v2631 = vld [vmem:[%s8 + $0x2] sm:$0x1]
        %v2632 = vld [vmem:[%s8 + $0x3] sm:$0x1]
        %v2633 = vld [vmem:[%s8 + $0x4] sm:$0x1]
        %v2634 = vld [vmem:[%s8 + $0x5] sm:$0x1]
        %v2635 = vld [vmem:[%s8 + $0x6] sm:$0x1]
        %v2636 = vld [vmem:[%s8 + $0x7] sm:$0x1]
        %v2645 = vlaneseq
        %v2646 = vshrl.u32 %v2645, 7
        %v2647 = vsub.s32 0, %v2646
        %v2648 = vrot.slane %v2629, %v2647
        %v2649 = vlaneseq
        %v2650 = vshrl.u32 %v2649, 7
        %v2651 = vsub.s32 0, %v2650
        %v2652 = vrot.slane %v2630, %v2651
        %v2653 = vlaneseq
        %v2654 = vshrl.u32 %v2653, 7
        %v2655 = vsub.s32 0, %v2654
        %v2656 = vrot.slane %v2631, %v2655
        %v2657 = vlaneseq
        %v2658 = vshrl.u32 %v2657, 7
        %v2659 = vsub.s32 0, %v2658
        %v2660 = vrot.slane %v2632, %v2659
        %v2661 = vlaneseq
        %v2662 = vshrl.u32 %v2661, 7
        %v2663 = vsub.s32 0, %v2662
        %v2664 = vrot.slane %v2633, %v2663
        %v2665 = vlaneseq
        %v2666 = vshrl.u32 %v2665, 7
        %v2667 = vsub.s32 0, %v2666
        %v2668 = vrot.slane %v2634, %v2667
        %v2669 = vlaneseq
        %v2670 = vshrl.u32 %v2669, 7
        %v2671 = vsub.s32 0, %v2670
        %v2672 = vrot.slane %v2635, %v2671
        %v2673 = vlaneseq
        %v2674 = vshrl.u32 %v2673, 7
        %v2675 = vsub.s32 0, %v2674
        %v2676 = vrot.slane %v2636, %v2675
        %2677 = vset.pattern.permute.xlu0 0
        %2678 = vperm.xlu0 %2677, %v2648
        %v2679 = vpop.permute.xlu0 %2678
        %2681 = vset.pattern.permute.xlu0 0
        %2682 = vperm.xlu0 %2681, %v2652
        %v2683 = vpop.permute.xlu0 %2682
        %2685 = vset.pattern.permute.xlu0 0
        %2686 = vperm.xlu0 %2685, %v2656
        %v2687 = vpop.permute.xlu0 %2686
        %2689 = vset.pattern.permute.xlu0 0
        %2690 = vperm.xlu0 %2689, %v2660
        %v2691 = vpop.permute.xlu0 %2690
        %2693 = vset.pattern.permute.xlu0 0
        %2694 = vperm.xlu0 %2693, %v2664
        %v2695 = vpop.permute.xlu0 %2694
        %2697 = vset.pattern.permute.xlu0 0
        %2698 = vperm.xlu0 %2697, %v2668
        %v2699 = vpop.permute.xlu0 %2698
        %2701 = vset.pattern.permute.xlu0 0
        %2702 = vperm.xlu0 %2701, %v2672
        %v2703 = vpop.permute.xlu0 %2702
        %2705 = vset.pattern.permute.xlu0 0
        %2706 = vperm.xlu0 %2705, %v2676
        %v2707 = vpop.permute.xlu0 %2706
        %v2709 = vmul.f32 %v1657, %v2679
        %v2710 = vmul.f32 %v1660, %v2679
        %v2711 = vmul.f32 %v1665, %v2679
        %v2712 = vmul.f32 %v1668, %v2679
        %v2713 = vmul.f32 %v1722, %v2683
        %v2714 = vmul.f32 %v1725, %v2683
        %v2715 = vmul.f32 %v1730, %v2683
        %v2716 = vmul.f32 %v1733, %v2683
        %v2717 = vmul.f32 %v1787, %v2687
        %v2718 = vmul.f32 %v1790, %v2687
        %v2719 = vmul.f32 %v1795, %v2687
        %v2720 = vmul.f32 %v1798, %v2687
        %v2721 = vmul.f32 %v1852, %v2691
        %v2722 = vmul.f32 %v1855, %v2691
        %v2723 = vmul.f32 %v1860, %v2691
        %v2724 = vmul.f32 %v1863, %v2691
        %v2725 = vmul.f32 %v1917, %v2695
        %v2726 = vmul.f32 %v1920, %v2695
        %v2727 = vmul.f32 %v1925, %v2695
        %v2728 = vmul.f32 %v1928, %v2695
        %v2729 = vmul.f32 %v1982, %v2699
        %v2730 = vmul.f32 %v1985, %v2699
        %v2731 = vmul.f32 %v1990, %v2699
        %v2732 = vmul.f32 %v1993, %v2699
        %v2733 = vmul.f32 %v2047, %v2703
        %v2734 = vmul.f32 %v2050, %v2703
        %v2735 = vmul.f32 %v2055, %v2703
        %v2736 = vmul.f32 %v2058, %v2703
        %v2737 = vmul.f32 %v2112, %v2707
        %v2738 = vmul.f32 %v2115, %v2707
        %v2739 = vmul.f32 %v2120, %v2707
        %v2740 = vmul.f32 %v2123, %v2707
        %v2741 = vsel %vm2126, %v2709, 0.0
        %v2742 = vsel %vm2126, %v2713, 0.0
        %v2743 = vadd.f32 %v2741, %v2742
        %v2744 = vsel %vm2126, %v2717, 0.0
        %v2745 = vadd.f32 %v2743, %v2744
        %v2746 = vsel %vm2126, %v2721, 0.0
        %v2747 = vadd.f32 %v2745, %v2746
        %v2748 = vsel %vm2126, %v2725, 0.0
        %v2749 = vadd.f32 %v2747, %v2748
        %v2750 = vsel %vm2126, %v2729, 0.0
        %v2751 = vadd.f32 %v2749, %v2750
        %v2752 = vsel %vm2126, %v2733, 0.0
        %v2753 = vadd.f32 %v2751, %v2752
        %v2754 = vsel %vm2126, %v2737, 0.0
        %v2755 = vadd.f32 %v2753, %v2754
        %v2756 = vsel %vm2126, %v2710, 0.0
        %v2757 = vsel %vm2126, %v2714, 0.0
        %v2758 = vadd.f32 %v2756, %v2757
        %v2759 = vsel %vm2126, %v2718, 0.0
        %v2760 = vadd.f32 %v2758, %v2759
        %v2761 = vsel %vm2126, %v2722, 0.0
        %v2762 = vadd.f32 %v2760, %v2761
        %v2763 = vsel %vm2126, %v2726, 0.0
        %v2764 = vadd.f32 %v2762, %v2763
        %v2765 = vsel %vm2126, %v2730, 0.0
        %v2766 = vadd.f32 %v2764, %v2765
        %v2767 = vsel %vm2126, %v2734, 0.0
        %v2768 = vadd.f32 %v2766, %v2767
        %v2769 = vsel %vm2126, %v2738, 0.0
        %v2770 = vadd.f32 %v2768, %v2769
        %v2771 = vsel %vm2126, %v2711, 0.0
        %v2772 = vsel %vm2126, %v2715, 0.0
        %v2773 = vadd.f32 %v2771, %v2772
        %v2774 = vsel %vm2126, %v2719, 0.0
        %v2775 = vadd.f32 %v2773, %v2774
        %v2776 = vsel %vm2126, %v2723, 0.0
        %v2777 = vadd.f32 %v2775, %v2776
        %v2778 = vsel %vm2126, %v2727, 0.0
        %v2779 = vadd.f32 %v2777, %v2778
        %v2780 = vsel %vm2126, %v2731, 0.0
        %v2781 = vadd.f32 %v2779, %v2780
        %v2782 = vsel %vm2126, %v2735, 0.0
        %v2783 = vadd.f32 %v2781, %v2782
        %v2784 = vsel %vm2126, %v2739, 0.0
        %v2785 = vadd.f32 %v2783, %v2784
        %v2786 = vsel %vm2126, %v2712, 0.0
        %v2787 = vsel %vm2126, %v2716, 0.0
        %v2788 = vadd.f32 %v2786, %v2787
        %v2789 = vsel %vm2126, %v2720, 0.0
        %v2790 = vadd.f32 %v2788, %v2789
        %v2791 = vsel %vm2126, %v2724, 0.0
        %v2792 = vadd.f32 %v2790, %v2791
        %v2793 = vsel %vm2126, %v2728, 0.0
        %v2794 = vadd.f32 %v2792, %v2793
        %v2795 = vsel %vm2126, %v2732, 0.0
        %v2796 = vadd.f32 %v2794, %v2795
        %v2797 = vsel %vm2126, %v2736, 0.0
        %v2798 = vadd.f32 %v2796, %v2797
        %v2799 = vsel %vm2126, %v2740, 0.0
        %v2800 = vadd.f32 %v2798, %v2799
        %v2801 = vld [vmem:[#allocation3] sm:$0x1]
        %v2803 = vlaneseq
        %v2804 = vshrl.u32 %v2803, 7
        %v2805 = vsub.s32 0, %v2804
        %v2806 = vrot.slane %v2801, %v2805
        %2807 = vset.pattern.permute.xlu0 0
        %2808 = vperm.xlu0 %2807, %v2806
        %v2809 = vpop.permute.xlu0 %2808
        %v2811 = vadd.f32 %v2755, %v2809
        %v2812 = vadd.f32 %v2770, %v2809
        %v2813 = vadd.f32 %v2785, %v2809
        %v2814 = vadd.f32 %v2800, %v2809
        %v2815 = vxor.u32 %v2811, 2147483648
        %v2816 = vxor.u32 %v2812, 2147483648
        %v2817 = vxor.u32 %v2813, 2147483648
        %v2818 = vxor.u32 %v2814, 2147483648
        %v2819 = vmul.f32 %v2815, 1.442695
        %v2820 = vpow.pop %v2819
        %v2821 = vmul.f32 %v2816, 1.442695
        %v2822 = vpow.pop %v2821
        %v2823 = vmul.f32 %v2817, 1.442695
        %v2824 = vpow.pop %v2823
        %v2825 = vmul.f32 %v2818, 1.442695
        %v2826 = vpow.pop %v2825
        %v2827 = vadd.f32 %v2820, 1.0
        %v2828 = vadd.f32 %v2822, 1.0
        %v2829 = vadd.f32 %v2824, 1.0
        %v2830 = vadd.f32 %v2826, 1.0
        %v2831 = vrcp.pop %v2827
        %v2832 = vmul.f32 1.0, %v2831
        %v2833 = vrcp.pop %v2828
        %v2834 = vmul.f32 1.0, %v2833
        %v2835 = vrcp.pop %v2829
        %v2836 = vmul.f32 1.0, %v2835
        %v2837 = vrcp.pop %v2830
        %v2838 = vmul.f32 1.0, %v2837
        %v2840 = vcombine.high %v2628, %v2628
        %v2842 = vunpack.c.l.s4 1966171168
        %v2843 = vunpack.c.0.s8 %v2842
        %v2844 = vlaneseq
        %v2845 = vshrl.u32 %v2844, 7
        %v2846 = vsub.s32 %v2843, %v2845
        %v2847 = vrot.slane %v2628, %v2846
        %v2849 = vunpack.c.l.s4 1966171168
        %v2850 = vunpack.c.0.s8 %v2849
        %v2851 = vlaneseq
        %v2852 = vshrl.u32 %v2851, 7
        %v2853 = vsub.s32 %v2850, %v2852
        %v2854 = vrot.slane %v2840, %v2853
        %v2855 = vcombine.high %v2847, %v2847
        %v2856 = vcombine.high %v2854, %v2854
        %v2858 = vunpack.c.l.s4 1966171168
        %v2859 = vunpack.c.0.s8 %v2858
        %v2860 = vlaneseq
        %v2861 = vshrl.u32 %v2860, 7
        %v2862 = vsub.s32 %v2859, %v2861
        %v2863 = vrot.slane %v2847, %v2862
        %v2865 = vunpack.c.l.s4 1966171168
        %v2866 = vunpack.c.0.s8 %v2865
        %v2867 = vlaneseq
        %v2868 = vshrl.u32 %v2867, 7
        %v2869 = vsub.s32 %v2866, %v2868
        %v2870 = vrot.slane %v2854, %v2869
        %v2872 = vunpack.c.l.s4 1966171168
        %v2873 = vunpack.c.0.s8 %v2872
        %v2874 = vlaneseq
        %v2875 = vshrl.u32 %v2874, 7
        %v2876 = vsub.s32 %v2873, %v2875
        %v2877 = vrot.slane %v2855, %v2876
        %v2879 = vunpack.c.l.s4 1966171168
        %v2880 = vunpack.c.0.s8 %v2879
        %v2881 = vlaneseq
        %v2882 = vshrl.u32 %v2881, 7
        %v2883 = vsub.s32 %v2880, %v2882
        %v2884 = vrot.slane %v2856, %v2883
        %v2885 = vcombine.high %v2863, %v2863
        %v2886 = vcombine.high %v2870, %v2870
        %v2887 = vcombine.high %v2877, %v2877
        %v2888 = vcombine.high %v2884, %v2884
        %v2889 = vlaneseq
        %v2890 = vshrl.u32 %v2889, 7
        %v2891 = vsub.s32 0, %v2890
        %v2892 = vrot.slane %v2863, %v2891
        %v2893 = vlaneseq
        %v2894 = vshrl.u32 %v2893, 7
        %v2895 = vsub.s32 0, %v2894
        %v2896 = vrot.slane %v2877, %v2895
        %v2897 = vlaneseq
        %v2898 = vshrl.u32 %v2897, 7
        %v2899 = vsub.s32 0, %v2898
        %v2900 = vrot.slane %v2885, %v2899
        %v2901 = vlaneseq
        %v2902 = vshrl.u32 %v2901, 7
        %v2903 = vsub.s32 0, %v2902
        %v2904 = vrot.slane %v2887, %v2903
        %v2905 = vlaneseq
        %v2906 = vshrl.u32 %v2905, 7
        %v2907 = vsub.s32 0, %v2906
        %v2908 = vrot.slane %v2870, %v2907
        %v2909 = vlaneseq
        %v2910 = vshrl.u32 %v2909, 7
        %v2911 = vsub.s32 0, %v2910
        %v2912 = vrot.slane %v2884, %v2911
        %v2913 = vlaneseq
        %v2914 = vshrl.u32 %v2913, 7
        %v2915 = vsub.s32 0, %v2914
        %v2916 = vrot.slane %v2886, %v2915
        %v2917 = vlaneseq
        %v2918 = vshrl.u32 %v2917, 7
        %v2919 = vsub.s32 0, %v2918
        %v2920 = vrot.slane %v2888, %v2919
        %2921 = vset.pattern.permute.xlu0 0
        %2922 = vperm.xlu0 %2921, %v2892
        %v2923 = vpop.permute.xlu0 %2922
        %2925 = vset.pattern.permute.xlu0 0
        %2926 = vperm.xlu0 %2925, %v2896
        %v2927 = vpop.permute.xlu0 %2926
        %2929 = vset.pattern.permute.xlu0 0
        %2930 = vperm.xlu0 %2929, %v2900
        %v2931 = vpop.permute.xlu0 %2930
        %2933 = vset.pattern.permute.xlu0 0
        %2934 = vperm.xlu0 %2933, %v2904
        %v2935 = vpop.permute.xlu0 %2934
        %2937 = vset.pattern.permute.xlu0 0
        %2938 = vperm.xlu0 %2937, %v2908
        %v2939 = vpop.permute.xlu0 %2938
        %2941 = vset.pattern.permute.xlu0 0
        %2942 = vperm.xlu0 %2941, %v2912
        %v2943 = vpop.permute.xlu0 %2942
        %2945 = vset.pattern.permute.xlu0 0
        %2946 = vperm.xlu0 %2945, %v2916
        %v2947 = vpop.permute.xlu0 %2946
        %2949 = vset.pattern.permute.xlu0 0
        %2950 = vperm.xlu0 %2949, %v2920
        %v2951 = vpop.permute.xlu0 %2950
        %v2953 = vadd.f32 %v2832, %v2923
        %v2954 = vadd.f32 %v2834, %v2923
        %v2955 = vadd.f32 %v2836, %v2923
        %v2956 = vadd.f32 %v2838, %v2923
        %v2957 = vadd.f32 %v2832, %v2927
        %v2958 = vadd.f32 %v2834, %v2927
        %v2959 = vadd.f32 %v2836, %v2927
        %v2960 = vadd.f32 %v2838, %v2927
        %v2961 = vadd.f32 %v2832, %v2931
        %v2962 = vadd.f32 %v2834, %v2931
        %v2963 = vadd.f32 %v2836, %v2931
        %v2964 = vadd.f32 %v2838, %v2931
        %v2965 = vadd.f32 %v2832, %v2935
        %v2966 = vadd.f32 %v2834, %v2935
        %v2967 = vadd.f32 %v2836, %v2935
        %v2968 = vadd.f32 %v2838, %v2935
        %v2969 = vadd.f32 %v2832, %v2939
        %v2970 = vadd.f32 %v2834, %v2939
        %v2971 = vadd.f32 %v2836, %v2939
        %v2972 = vadd.f32 %v2838, %v2939
        %v2973 = vadd.f32 %v2832, %v2943
        %v2974 = vadd.f32 %v2834, %v2943
        %v2975 = vadd.f32 %v2836, %v2943
        %v2976 = vadd.f32 %v2838, %v2943
        %v2977 = vadd.f32 %v2832, %v2947
        %v2978 = vadd.f32 %v2834, %v2947
        %v2979 = vadd.f32 %v2836, %v2947
        %v2980 = vadd.f32 %v2838, %v2947
        %v2981 = vadd.f32 %v2832, %v2951
        %v2982 = vadd.f32 %v2834, %v2951
        %v2983 = vadd.f32 %v2836, %v2951
        %v2984 = vadd.f32 %v2838, %v2951
        %v2985 = vmul.f32 %v1657, %v2953
        %v2986 = vmul.f32 %v1660, %v2954
        %v2987 = vmul.f32 %v1665, %v2955
        %v2988 = vmul.f32 %v1668, %v2956
        %v2989 = vmul.f32 %v1722, %v2957
        %v2990 = vmul.f32 %v1725, %v2958
        %v2991 = vmul.f32 %v1730, %v2959
        %v2992 = vmul.f32 %v1733, %v2960
        %v2993 = vmul.f32 %v1787, %v2961
        %v2994 = vmul.f32 %v1790, %v2962
        %v2995 = vmul.f32 %v1795, %v2963
        %v2996 = vmul.f32 %v1798, %v2964
        %v2997 = vmul.f32 %v1852, %v2965
        %v2998 = vmul.f32 %v1855, %v2966
        %v2999 = vmul.f32 %v1860, %v2967
        %v3000 = vmul.f32 %v1863, %v2968
        %v3001 = vmul.f32 %v1917, %v2969
        %v3002 = vmul.f32 %v1920, %v2970
        %v3003 = vmul.f32 %v1925, %v2971
        %v3004 = vmul.f32 %v1928, %v2972
        %v3005 = vmul.f32 %v1982, %v2973
        %v3006 = vmul.f32 %v1985, %v2974
        %v3007 = vmul.f32 %v1990, %v2975
        %v3008 = vmul.f32 %v1993, %v2976
        %v3009 = vmul.f32 %v2047, %v2977
        %v3010 = vmul.f32 %v2050, %v2978
        %v3011 = vmul.f32 %v2055, %v2979
        %v3012 = vmul.f32 %v2058, %v2980
        %v3013 = vmul.f32 %v2112, %v2981
        %v3014 = vmul.f32 %v2115, %v2982
        %v3015 = vmul.f32 %v2120, %v2983
        %v3016 = vmul.f32 %v2123, %v2984
        %v3017 = vpack.c.bf16 %v2986, %v2985
        %v3018 = vpack.c.bf16 %v2988, %v2987
        %v3019 = vpack.c.bf16 %v2990, %v2989
        %v3020 = vpack.c.bf16 %v2992, %v2991
        %v3021 = vpack.c.bf16 %v2994, %v2993
        %v3022 = vpack.c.bf16 %v2996, %v2995
        %v3023 = vpack.c.bf16 %v2998, %v2997
        %v3024 = vpack.c.bf16 %v3000, %v2999
        %v3025 = vpack.c.bf16 %v3002, %v3001
        %v3026 = vpack.c.bf16 %v3004, %v3003
        %v3027 = vpack.c.bf16 %v3006, %v3005
        %v3028 = vpack.c.bf16 %v3008, %v3007
        %v3029 = vpack.c.bf16 %v3010, %v3009
        %v3030 = vpack.c.bf16 %v3012, %v3011
        %v3031 = vpack.c.bf16 %v3014, %v3013
        %v3032 = vpack.c.bf16 %v3016, %v3015
        %v3049 = vunpack.c.l.b16 %v3017
        %v3050 = vunpack.c.h.b16 %v3017
        %v3051 = vunpack.c.l.b16 %v3018
        %v3052 = vunpack.c.h.b16 %v3018
        %v3053 = vunpack.c.l.b16 %v3019
        %v3054 = vunpack.c.h.b16 %v3019
        %v3055 = vunpack.c.l.b16 %v3020
        %v3056 = vunpack.c.h.b16 %v3020
        %v3057 = vunpack.c.l.b16 %v3021
        %v3058 = vunpack.c.h.b16 %v3021
        %v3059 = vunpack.c.l.b16 %v3022
        %v3060 = vunpack.c.h.b16 %v3022
        %v3061 = vunpack.c.l.b16 %v3023
        %v3062 = vunpack.c.h.b16 %v3023
        %v3063 = vunpack.c.l.b16 %v3024
        %v3064 = vunpack.c.h.b16 %v3024
        %v3065 = vunpack.c.l.b16 %v3025
        %v3066 = vunpack.c.h.b16 %v3025
        %v3067 = vunpack.c.l.b16 %v3026
        %v3068 = vunpack.c.h.b16 %v3026
        %v3069 = vunpack.c.l.b16 %v3027
        %v3070 = vunpack.c.h.b16 %v3027
        %v3071 = vunpack.c.l.b16 %v3028
        %v3072 = vunpack.c.h.b16 %v3028
        %v3073 = vunpack.c.l.b16 %v3029
        %v3074 = vunpack.c.h.b16 %v3029
        %v3075 = vunpack.c.l.b16 %v3030
        %v3076 = vunpack.c.h.b16 %v3030
        %v3077 = vunpack.c.l.b16 %v3031
        %v3078 = vunpack.c.h.b16 %v3031
        %v3079 = vunpack.c.l.b16 %v3032
        %v3080 = vunpack.c.h.b16 %v3032
        %v3081 = vpack.c.b16 %v3049, %v3049
        %v3082 = vpack.c.b16 %v3050, %v3050
        %v3083 = vpack.c.b16 %v3051, %v3051
        %v3084 = vpack.c.b16 %v3052, %v3052
        %v3085 = vpack.c.b16 %v3053, %v3053
        %v3086 = vpack.c.b16 %v3054, %v3054
        %v3087 = vpack.c.b16 %v3055, %v3055
        %v3088 = vpack.c.b16 %v3056, %v3056
        %v3089 = vpack.c.b16 %v3057, %v3057
        %v3090 = vpack.c.b16 %v3058, %v3058
        %v3091 = vpack.c.b16 %v3059, %v3059
        %v3092 = vpack.c.b16 %v3060, %v3060
        %v3093 = vpack.c.b16 %v3061, %v3061
        %v3094 = vpack.c.b16 %v3062, %v3062
        %v3095 = vpack.c.b16 %v3063, %v3063
        %v3096 = vpack.c.b16 %v3064, %v3064
        %v3097 = vpack.c.b16 %v3065, %v3065
        %v3098 = vpack.c.b16 %v3066, %v3066
        %v3099 = vpack.c.b16 %v3067, %v3067
        %v3100 = vpack.c.b16 %v3068, %v3068
        %v3101 = vpack.c.b16 %v3069, %v3069
        %v3102 = vpack.c.b16 %v3070, %v3070
        %v3103 = vpack.c.b16 %v3071, %v3071
        %v3104 = vpack.c.b16 %v3072, %v3072
        %v3105 = vpack.c.b16 %v3073, %v3073
        %v3106 = vpack.c.b16 %v3074, %v3074
        %v3107 = vpack.c.b16 %v3075, %v3075
        %v3108 = vpack.c.b16 %v3076, %v3076
        %v3109 = vpack.c.b16 %v3077, %v3077
        %v3110 = vpack.c.b16 %v3078, %v3078
        %v3111 = vpack.c.b16 %v3079, %v3079
        %v3112 = vpack.c.b16 %v3080, %v3080
        %vm3145 = vcmask 257024
        %3146 = vst.msk [vmem:[%s462] sm:$0xf] %vm3145, %v3081
        %3147 = vst.msk [vmem:[%s462 + $0x4] sm:$0xf] %vm3145, %v3082
        %3148 = vst.msk [vmem:[%s462 + $0x8] sm:$0xf] %vm3145, %v3083
        %3149 = vst.msk [vmem:[%s462 + $0xc] sm:$0xf] %vm3145, %v3084
        %3150 = vst.msk [vmem:[%s462 + $0x10] sm:$0xf] %vm3145, %v3085
        %3151 = vst.msk [vmem:[%s462 + $0x14] sm:$0xf] %vm3145, %v3086
        %3152 = vst.msk [vmem:[%s462 + $0x18] sm:$0xf] %vm3145, %v3087
        %3153 = vst.msk [vmem:[%s462 + $0x1c] sm:$0xf] %vm3145, %v3088
        %3154 = vst.msk [vmem:[%s462 + $0x20] sm:$0xf] %vm3145, %v3089
        %3155 = vst.msk [vmem:[%s462 + $0x24] sm:$0xf] %vm3145, %v3090
        %3156 = vst.msk [vmem:[%s462 + $0x28] sm:$0xf] %vm3145, %v3091
        %3157 = vst.msk [vmem:[%s462 + $0x2c] sm:$0xf] %vm3145, %v3092
        %3158 = vst.msk [vmem:[%s462 + $0x30] sm:$0xf] %vm3145, %v3093
        %3159 = vst.msk [vmem:[%s462 + $0x34] sm:$0xf] %vm3145, %v3094
        %3160 = vst.msk [vmem:[%s462 + $0x38] sm:$0xf] %vm3145, %v3095
        %3161 = vst.msk [vmem:[%s462 + $0x3c] sm:$0xf] %vm3145, %v3096
        %3162 = vst.msk [vmem:[%s462 + $0x40] sm:$0xf] %vm3145, %v3097
        %3163 = vst.msk [vmem:[%s462 + $0x44] sm:$0xf] %vm3145, %v3098
        %3164 = vst.msk [vmem:[%s462 + $0x48] sm:$0xf] %vm3145, %v3099
        %3165 = vst.msk [vmem:[%s462 + $0x4c] sm:$0xf] %vm3145, %v3100
        %3166 = vst.msk [vmem:[%s462 + $0x50] sm:$0xf] %vm3145, %v3101
        %3167 = vst.msk [vmem:[%s462 + $0x54] sm:$0xf] %vm3145, %v3102
        %3168 = vst.msk [vmem:[%s462 + $0x58] sm:$0xf] %vm3145, %v3103
        %3169 = vst.msk [vmem:[%s462 + $0x5c] sm:$0xf] %vm3145, %v3104
        %3170 = vst.msk [vmem:[%s462 + $0x60] sm:$0xf] %vm3145, %v3105
        %3171 = vst.msk [vmem:[%s462 + $0x64] sm:$0xf] %vm3145, %v3106
        %3172 = vst.msk [vmem:[%s462 + $0x68] sm:$0xf] %vm3145, %v3107
        %3173 = vst.msk [vmem:[%s462 + $0x6c] sm:$0xf] %vm3145, %v3108
        %3174 = vst.msk [vmem:[%s462 + $0x70] sm:$0xf] %vm3145, %v3109
        %3175 = vst.msk [vmem:[%s462 + $0x74] sm:$0xf] %vm3145, %v3110
        %3176 = vst.msk [vmem:[%s462 + $0x78] sm:$0xf] %vm3145, %v3111
        %3177 = vst.msk [vmem:[%s462 + $0x7c] sm:$0xf] %vm3145, %v3112
        %s3178 = sand.u32 %s337, 1
        %s3179 = scalar_lea.sflag [#allocation5], %s3178
        %s3180 = sand.u32 %s337, 1
        %s3181 = smul.addr %s3180, 128
        %s3182 = scalar_lea.vmem [#allocation4], %s3181
        // Predicated region
        $region77: #{decoder2_forward.1} parent=75 // pred_check
          %p3183 = pneg %p347
        $region78: #{decoder2_forward.1} parent=75 // pred_check_branch
          %3185 = sbr.rel (%p3183) target = $region80
        $region79: #{decoder2_forward.1} parent=75 // pred_region
          %s3187 = ssub.s32 2048, 2048
          %3188 = vsyncadd %s3179, %s3187
          %s3189 = smul.addr %s30, 32
          %s3190 = smul.addr %s3189, 64
          %s3191 = scalar_lea.hbm %s14, %s3190
          %s3192 = sshll.u32 %s3182, 4
          %s3193 = int_to_ptr.vmem [resolvable:$true] %s3192
          %3198 = dma.vmem_to_hbm [thread:$0]  %s3193, 2048, %s3191, %s3179, 64, 64, 4
        $region80: #{decoder2_forward.1} parent=75 // pred_fallthru
          _
      $region76: #{decoder2_forward.1} parent=5 // pred_fallthru
        _
      %p3199 = scmp.le.s32.totalorder 2, %s25
      // Predicated region
      $region81: #{decoder2_forward.1} parent=5 // pred_check
        %p3200 = pneg %p3199
      $region82: #{decoder2_forward.1} parent=5 // pred_check_branch
        %3202 = sbr.rel (%p3200) target = $region84
      $region83: #{decoder2_forward.1} parent=5 // pred_region
        %s3203 = ssub.s32 %s25, 2
        // Predicated region
        $region85: #{decoder2_forward.1} parent=83 // pred_check
          %p3204 = pneg %p353
        $region86: #{decoder2_forward.1} parent=83 // pred_check_branch
          %3206 = sbr.rel (%p3204) target = $region88
        $region87: #{decoder2_forward.1} parent=83 // pred_region
          %s3207 = sand.u32 %s338, 1
          %s3208 = scalar_lea.sflag [#allocation5], %s3207
          %s3209 = sand.u32 %s338, 1
          %s3210 = smul.addr %s3209, 128
          %s3211 = scalar_lea.vmem [#allocation4], %s3210
          %3212 = dma.done %s3208, 2048
        $region88: #{decoder2_forward.1} parent=83 // pred_fallthru
          _
      $region84: #{decoder2_forward.1} parent=5 // pred_fallthru
        _
    $region6: #{decoder2_forward.1} parent=1 // loop_footer
      %s29 = sadd.s32 1, %s25
    $region7: #{decoder2_forward.1} parent=1 // loop_footer_branch
      %24 = sbr.rel target = $region3
    $region8: #{decoder2_forward.1} parent=1 // loop_exit
      _
    %3213 = vsyncpa [#allocation5], 1
    %s3214 = scalar_lea.sflag [#allocation5], 1
    %3215 = vsyncpa %s3214, 1

</llo_original>
